<compile_context>
chip_gen: v5e
topology: v5e:2x2
jax: 0.10.0
libtpu: 0.0.40
codegen_flags: <defaults>
</compile_context>

<pallas_src>
from functools import partial

import jax
import jax.numpy as jnp
from jax import lax
from jax.experimental import pallas as pl
from jax.experimental.pallas import tpu as pltpu


def attention_kernel(x_ref, gamma_ref, beta_ref, wq_ref, wk_ref, wv_ref,
                     wout_ref, o_ref, *, batch, seq, heads, scale):
    """Single grid step over the whole (tiny) problem.

    Blocks: x (B*N, D); gamma/beta (1, D); wq/wk/wv (H, D, Dh);
    wout (H, Dh, Dp) with Dp = 128-padded output width; o (B, N, Dp).
    Elementwise statistics in f32; MXU operands in the input dtype with f32
    accumulation.
    """
    mm_dtype = x_ref.dtype                           # MXU operand dtype
    f32 = jnp.float32
    is_f32 = mm_dtype == jnp.float32
    prec = lax.Precision.HIGHEST if is_f32 else lax.Precision.DEFAULT

    dp = wout_ref.shape[-1]

    x = x_ref[...].astype(f32)                       # (B*N, D)
    gamma = gamma_ref[...].astype(f32)               # (1, D)
    beta = beta_ref[...].astype(f32)

    # ---- LayerNorm over last dim (eps = 1e-5, PyTorch default), f32 ----
    mean = jnp.mean(x, axis=-1, keepdims=True)
    var = jnp.mean((x - mean) ** 2, axis=-1, keepdims=True)
    xn = ((x - mean) * lax.rsqrt(var + 1e-5) * gamma + beta).astype(mm_dtype)

    # ---- Per-head Q/K/V projections over ALL B*N rows at once ----
    # Head weights are indexed on the leading ref axis -> no lane slicing.
    qs, ks, vs = [], [], []
    for h in range(heads):
        qh = jnp.dot(xn, wq_ref[h], preferred_element_type=f32, precision=prec)
        kh = jnp.dot(xn, wk_ref[h], preferred_element_type=f32, precision=prec)
        vh = jnp.dot(xn, wv_ref[h], preferred_element_type=f32, precision=prec)
        qs.append((qh * scale).astype(mm_dtype))     # fold softmax scale into Q
        ks.append(kh.astype(mm_dtype))
        vs.append(vh.astype(mm_dtype))

    # ---- Attention + fused per-head output projection ----
    # Static unroll over (b, h); all row slices are 8-sublane-aligned.
    # TODO(synk): for long sequences, switch to flash-style KV tiling (online
    # softmax) and a batched dot_general over B*H instead of materializing the
    # full (N, N) scores; re-derive tq/tk for v7x's 64 MiB VMEM and set
    # vmem_limit_bytes / pl.Buffered(1) on the resident weight specs.
    for b in range(batch):
        lo, hi = b * seq, (b + 1) * seq
        yb = jnp.zeros((seq, dp), f32)
        for h in range(heads):
            qbh = qs[h][lo:hi]                       # (N, Dh)
            kbh = ks[h][lo:hi]
            vbh = vs[h][lo:hi]

            # Scores: contract the Dh axis of both operands (no explicit .T).
            dots = lax.dot_general(qbh, kbh, (((1,), (1,)), ((), ())),
                                   preferred_element_type=f32,
                                   precision=prec)   # (N, N)
            m = jnp.max(dots, axis=-1, keepdims=True)
            e = jnp.exp(dots - m)                                       # EUP
            denom = jnp.sum(e, axis=-1, keepdims=True)                  # (N, 1)

            # Deferred normalization: unnormalized e @ V, then scale the
            # (N, Dh) result by 1/denom (EUP vrcp on the bf16 path).
            ov = jnp.dot(e.astype(mm_dtype), vbh,
                         preferred_element_type=f32, precision=prec)    # (N, Dh)
            ov = ov * pl.reciprocal(denom, approx=not is_f32)

            # Fused output projection for this head into the (N, Dp) slab.
            yb = yb + jnp.dot(ov.astype(mm_dtype), wout_ref[h],
                              preferred_element_type=f32, precision=prec)

        o_ref[b] = yb.astype(o_ref.dtype)            # lane-dense (N, 128) store


def attention_forward(x, gamma, beta, wqkv, wout, *, heads, dim_head):
    B, N, D = x.shape
    inner = heads * dim_head
    scale = dim_head ** (-0.5)
    dp = ((D + 127) // 128) * 128                    # lane-dense output width

    # Wrapper-side layout plumbing (cheap XLA ops, outside the kernel):
    x_flat = x.reshape(B * N, D)
    wq = wqkv[:, :inner].reshape(D, heads, dim_head).transpose(1, 0, 2)
    wk = wqkv[:, inner:2 * inner].reshape(D, heads, dim_head).transpose(1, 0, 2)
    wv = wqkv[:, 2 * inner:].reshape(D, heads, dim_head).transpose(1, 0, 2)
    wout_h = wout.reshape(heads, dim_head, D)
    wout_p = jnp.pad(wout_h, ((0, 0), (0, 0), (0, dp - D)))

    kernel = partial(attention_kernel, batch=B, seq=N, heads=heads, scale=scale)
    out = pl.pallas_call(
        kernel,
        out_shape=jax.ShapeDtypeStruct((B, N, dp), x.dtype),
        grid_spec=pltpu.PrefetchScalarGridSpec(
            num_scalar_prefetch=0,
            grid=(1,),                                # single step: whole problem
            in_specs=[
                pl.BlockSpec((B * N, D), lambda i: (0, 0)),                # x
                pl.BlockSpec((1, D), lambda i: (0, 0)),                    # gamma
                pl.BlockSpec((1, D), lambda i: (0, 0)),                    # beta
                pl.BlockSpec((heads, D, dim_head), lambda i: (0, 0, 0)),   # Wq
                pl.BlockSpec((heads, D, dim_head), lambda i: (0, 0, 0)),   # Wk
                pl.BlockSpec((heads, D, dim_head), lambda i: (0, 0, 0)),   # Wv
                pl.BlockSpec((heads, dim_head, dp), lambda i: (0, 0, 0)),  # Wout
            ],
            out_specs=pl.BlockSpec((B, N, dp), lambda i: (0, 0, 0)),
        ),
        compiler_params=pltpu.CompilerParams(
            dimension_semantics=("arbitrary",),
        ),
    )(x_flat, gamma, beta, wq, wk, wv, wout_p)
    return out[..., :D]


def attention_reference(x, gamma, beta, wqkv, wout, *, heads, dim_head):
    """Pure-JAX reference reproducing the PyTorch forward exactly (f32 math)."""
    B, N, D = x.shape
    inner = heads * dim_head
    scale = dim_head ** (-0.5)
    xf = x.astype(jnp.float32)
    mean = jnp.mean(xf, axis=-1, keepdims=True)
    var = jnp.mean((xf - mean) ** 2, axis=-1, keepdims=True)
    xn = (xf - mean) * lax.rsqrt(var + 1e-5) * gamma.astype(jnp.float32) \
        + beta.astype(jnp.float32)
    qkv = xn @ wqkv.astype(jnp.float32)
    q, k, v = jnp.split(qkv, 3, axis=-1)

    def to_heads(t):  # b n (h d) -> b h n d
        return t.reshape(B, N, heads, dim_head).transpose(0, 2, 1, 3)

    q, k, v = map(to_heads, (q, k, v))
    dots = jnp.einsum('bhnd,bhmd->bhnm', q, k) * scale
    attn = jax.nn.softmax(dots, axis=-1)
    out = jnp.einsum('bhnm,bhmd->bhnd', attn, v)
    out = out.transpose(0, 2, 1, 3).reshape(B, N, inner)
    return out @ wout.astype(jnp.float32)


if __name__ == "__main__":
    # Small shapes consistent with the module: dim=32, heads=2, dim_head=32.
    B, N, D = 2, 8, 32
    heads, dim_head = 2, 32
    inner = heads * dim_head

    key = jax.random.PRNGKey(0)
    kx, kg, kb, kq, ko = jax.random.split(key, 5)
    x = jax.random.normal(kx, (B, N, D), dtype=jnp.float32)
    gamma = 1.0 + 0.1 * jax.random.normal(kg, (1, D), dtype=jnp.float32)
    beta = 0.1 * jax.random.normal(kb, (1, D), dtype=jnp.float32)
    wqkv = jax.random.normal(kq, (D, 3 * inner), dtype=jnp.float32) / jnp.sqrt(D)
    wout = jax.random.normal(ko, (inner, D), dtype=jnp.float32) / jnp.sqrt(inner)

    # ---- f32 path: must match the PyTorch-equivalent reference tightly ----
    y = attention_forward(x, gamma, beta, wqkv, wout, heads=heads, dim_head=dim_head)
    y = jax.block_until_ready(y)
    y_ref = attention_reference(x, gamma, beta, wqkv, wout,
                                heads=heads, dim_head=dim_head)
    assert jnp.allclose(y, y_ref.astype(x.dtype), atol=1e-4, rtol=1e-4), \
        "f32 mismatch vs reference"

    # ---- bf16 path: exercises the bf16-native MXU operand route ----
    xb, gb, bb, wqb, wob = (t.astype(jnp.bfloat16) for t in (x, gamma, beta, wqkv, wout))
    yb = attention_forward(xb, gb, bb, wqb, wob, heads=heads, dim_head=dim_head)
    yb = jax.block_until_ready(yb)
    yb_ref = attention_reference(xb.astype(jnp.float32), gb.astype(jnp.float32),
                                 bb.astype(jnp.float32), wqb.astype(jnp.float32),
                                 wob.astype(jnp.float32),
                                 heads=heads, dim_head=dim_head)
    assert jnp.allclose(yb.astype(jnp.float32), yb_ref, atol=1e-1, rtol=1e-1), \
        "bf16 mismatch vs reference"

    print("KERNEL_OK")
</pallas_src>

<mosaic_0001>
module attributes {stable_mosaic.version = 11 : i64} {
  func.func @attention_kernel(%arg0: i32, %arg1: memref<16x32xf32, #tpu.memory_space<vmem>>, %arg2: memref<1x32xf32, #tpu.memory_space<vmem>>, %arg3: memref<1x32xf32, #tpu.memory_space<vmem>>, %arg4: memref<2x32x32xf32, #tpu.memory_space<vmem>>, %arg5: memref<2x32x32xf32, #tpu.memory_space<vmem>>, %arg6: memref<2x32x32xf32, #tpu.memory_space<vmem>>, %arg7: memref<2x32x128xf32, #tpu.memory_space<vmem>>, %arg8: memref<2x8x128xf32, #tpu.memory_space<vmem>>) attributes {dimension_semantics = [#tpu.dimension_semantics<arbitrary>], iteration_bounds = array<i64: 1>, scalar_prefetch = 0 : i64, scratch_operands = 0 : i64, tpu.core_type = #tpu.core_type<tc>, window_params = [{pipeline_mode = #tpu.pipeline_mode<synchronous>, transform_indices = @transform_0, window_bounds = array<i64: 16, 32>}, {pipeline_mode = #tpu.pipeline_mode<synchronous>, transform_indices = @transform_1, window_bounds = array<i64: 1, 32>}, {pipeline_mode = #tpu.pipeline_mode<synchronous>, transform_indices = @transform_2, window_bounds = array<i64: 1, 32>}, {pipeline_mode = #tpu.pipeline_mode<synchronous>, transform_indices = @transform_3, window_bounds = array<i64: 2, 32, 32>}, {pipeline_mode = #tpu.pipeline_mode<synchronous>, transform_indices = @transform_4, window_bounds = array<i64: 2, 32, 32>}, {pipeline_mode = #tpu.pipeline_mode<synchronous>, transform_indices = @transform_5, window_bounds = array<i64: 2, 32, 32>}, {pipeline_mode = #tpu.pipeline_mode<synchronous>, transform_indices = @transform_6, window_bounds = array<i64: 2, 32, 128>}, {pipeline_mode = #tpu.pipeline_mode<synchronous>, transform_indices = @transform_7, window_bounds = array<i64: 2, 8, 128>}]} {
    %c0 = arith.constant 0 : index
    %c0_0 = arith.constant 0 : index
    %0 = vector.load %arg1[%c0, %c0_0] : memref<16x32xf32, #tpu.memory_space<vmem>>, vector<16x32xf32>
    %c0_1 = arith.constant 0 : index
    %c0_2 = arith.constant 0 : index
    %1 = vector.load %arg2[%c0_1, %c0_2] : memref<1x32xf32, #tpu.memory_space<vmem>>, vector<1x32xf32>
    %c0_3 = arith.constant 0 : index
    %c0_4 = arith.constant 0 : index
    %2 = vector.load %arg3[%c0_3, %c0_4] : memref<1x32xf32, #tpu.memory_space<vmem>>, vector<1x32xf32>
    %cst = arith.constant dense<0.000000e+00> : vector<16xf32>
    %3 = vector.multi_reduction <add>, %0, %cst [1] : vector<16x32xf32> to vector<16xf32>
    %4 = vector.shape_cast %3 : vector<16xf32> to vector<16x1xf32>
    %cst_5 = arith.constant 3.200000e+01 : f32
    %5 = vector.broadcast %cst_5 : f32 to vector<16x1xf32>
    %6 = arith.divf %4, %5 : vector<16x1xf32>
    %7 = vector.broadcast %6 : vector<16x1xf32> to vector<16x32xf32>
    %8 = arith.subf %0, %7 : vector<16x32xf32>
    %9 = arith.mulf %8, %8 : vector<16x32xf32>
    %cst_6 = arith.constant dense<0.000000e+00> : vector<16xf32>
    %10 = vector.multi_reduction <add>, %9, %cst_6 [1] : vector<16x32xf32> to vector<16xf32>
    %11 = vector.shape_cast %10 : vector<16xf32> to vector<16x1xf32>
    %cst_7 = arith.constant 3.200000e+01 : f32
    %12 = vector.broadcast %cst_7 : f32 to vector<16x1xf32>
    %13 = arith.divf %11, %12 : vector<16x1xf32>
    %14 = vector.broadcast %6 : vector<16x1xf32> to vector<16x32xf32>
    %15 = arith.subf %0, %14 : vector<16x32xf32>
    %cst_8 = arith.constant 9.99999974E-6 : f32
    %16 = vector.broadcast %cst_8 : f32 to vector<16x1xf32>
    %17 = arith.addf %13, %16 : vector<16x1xf32>
    %18 = math.rsqrt %17 : vector<16x1xf32>
    %19 = vector.broadcast %18 : vector<16x1xf32> to vector<16x32xf32>
    %20 = arith.mulf %15, %19 : vector<16x32xf32>
    %21 = vector.broadcast %1 : vector<1x32xf32> to vector<16x32xf32>
    %22 = arith.mulf %20, %21 : vector<16x32xf32>
    %23 = vector.broadcast %2 : vector<1x32xf32> to vector<16x32xf32>
    %24 = arith.addf %22, %23 : vector<16x32xf32>
    %c0_9 = arith.constant 0 : index
    %c0_10 = arith.constant 0 : index
    %c0_11 = arith.constant 0 : index
    %25 = vector.load %arg4[%c0_9, %c0_10, %c0_11] : memref<2x32x32xf32, #tpu.memory_space<vmem>>, vector<1x32x32xf32>
    %26 = vector.shape_cast %25 : vector<1x32x32xf32> to vector<32x32xf32>
    %cst_12 = arith.constant dense<0.000000e+00> : vector<16x32xf32>
    %27 = tpu.matmul %24, %26, %cst_12 {dimension_numbers = #tpu.dot_dimension_numbers<[1], [0], [0], [1], [0, 0, 1, 1], [], []>, precision = #tpu.contract_precision<fp32>} : vector<16x32xf32>, vector<32x32xf32>, vector<16x32xf32> -> vector<16x32xf32>
    %c0_13 = arith.constant 0 : index
    %c0_14 = arith.constant 0 : index
    %c0_15 = arith.constant 0 : index
    %28 = vector.load %arg5[%c0_13, %c0_14, %c0_15] : memref<2x32x32xf32, #tpu.memory_space<vmem>>, vector<1x32x32xf32>
    %29 = vector.shape_cast %28 : vector<1x32x32xf32> to vector<32x32xf32>
    %cst_16 = arith.constant dense<0.000000e+00> : vector<16x32xf32>
    %30 = tpu.matmul %24, %29, %cst_16 {dimension_numbers = #tpu.dot_dimension_numbers<[1], [0], [0], [1], [0, 0, 1, 1], [], []>, precision = #tpu.contract_precision<fp32>} : vector<16x32xf32>, vector<32x32xf32>, vector<16x32xf32> -> vector<16x32xf32>
    %c0_17 = arith.constant 0 : index
    %c0_18 = arith.constant 0 : index
    %c0_19 = arith.constant 0 : index
    %31 = vector.load %arg6[%c0_17, %c0_18, %c0_19] : memref<2x32x32xf32, #tpu.memory_space<vmem>>, vector<1x32x32xf32>
    %32 = vector.shape_cast %31 : vector<1x32x32xf32> to vector<32x32xf32>
    %cst_20 = arith.constant dense<0.000000e+00> : vector<16x32xf32>
    %33 = tpu.matmul %24, %32, %cst_20 {dimension_numbers = #tpu.dot_dimension_numbers<[1], [0], [0], [1], [0, 0, 1, 1], [], []>, precision = #tpu.contract_precision<fp32>} : vector<16x32xf32>, vector<32x32xf32>, vector<16x32xf32> -> vector<16x32xf32>
    %cst_21 = arith.constant 0.176776692 : f32
    %34 = vector.broadcast %cst_21 : f32 to vector<16x32xf32>
    %35 = arith.mulf %27, %34 : vector<16x32xf32>
    %c1 = arith.constant 1 : index
    %c0_22 = arith.constant 0 : index
    %c0_23 = arith.constant 0 : index
    %36 = vector.load %arg4[%c1, %c0_22, %c0_23] : memref<2x32x32xf32, #tpu.memory_space<vmem>>, vector<1x32x32xf32>
    %37 = vector.shape_cast %36 : vector<1x32x32xf32> to vector<32x32xf32>
    %cst_24 = arith.constant dense<0.000000e+00> : vector<16x32xf32>
    %38 = tpu.matmul %24, %37, %cst_24 {dimension_numbers = #tpu.dot_dimension_numbers<[1], [0], [0], [1], [0, 0, 1, 1], [], []>, precision = #tpu.contract_precision<fp32>} : vector<16x32xf32>, vector<32x32xf32>, vector<16x32xf32> -> vector<16x32xf32>
    %c1_25 = arith.constant 1 : index
    %c0_26 = arith.constant 0 : index
    %c0_27 = arith.constant 0 : index
    %39 = vector.load %arg5[%c1_25, %c0_26, %c0_27] : memref<2x32x32xf32, #tpu.memory_space<vmem>>, vector<1x32x32xf32>
    %40 = vector.shape_cast %39 : vector<1x32x32xf32> to vector<32x32xf32>
    %cst_28 = arith.constant dense<0.000000e+00> : vector<16x32xf32>
    %41 = tpu.matmul %24, %40, %cst_28 {dimension_numbers = #tpu.dot_dimension_numbers<[1], [0], [0], [1], [0, 0, 1, 1], [], []>, precision = #tpu.contract_precision<fp32>} : vector<16x32xf32>, vector<32x32xf32>, vector<16x32xf32> -> vector<16x32xf32>
    %c1_29 = arith.constant 1 : index
    %c0_30 = arith.constant 0 : index
    %c0_31 = arith.constant 0 : index
    %42 = vector.load %arg6[%c1_29, %c0_30, %c0_31] : memref<2x32x32xf32, #tpu.memory_space<vmem>>, vector<1x32x32xf32>
    %43 = vector.shape_cast %42 : vector<1x32x32xf32> to vector<32x32xf32>
    %cst_32 = arith.constant dense<0.000000e+00> : vector<16x32xf32>
    %44 = tpu.matmul %24, %43, %cst_32 {dimension_numbers = #tpu.dot_dimension_numbers<[1], [0], [0], [1], [0, 0, 1, 1], [], []>, precision = #tpu.contract_precision<fp32>} : vector<16x32xf32>, vector<32x32xf32>, vector<16x32xf32> -> vector<16x32xf32>
    %cst_33 = arith.constant 0.176776692 : f32
    %45 = vector.broadcast %cst_33 : f32 to vector<16x32xf32>
    %46 = arith.mulf %38, %45 : vector<16x32xf32>
    %cst_34 = arith.constant 0.000000e+00 : f32
    %47 = vector.broadcast %cst_34 : f32 to vector<8x128xf32>
    %48 = vector.extract_strided_slice %35 {offsets = [0, 0], sizes = [8, 32], strides = [1, 1]} : vector<16x32xf32> to vector<8x32xf32>
    %49 = vector.extract_strided_slice %30 {offsets = [0, 0], sizes = [8, 32], strides = [1, 1]} : vector<16x32xf32> to vector<8x32xf32>
    %50 = vector.extract_strided_slice %33 {offsets = [0, 0], sizes = [8, 32], strides = [1, 1]} : vector<16x32xf32> to vector<8x32xf32>
    %cst_35 = arith.constant dense<0.000000e+00> : vector<8x8xf32>
    %51 = tpu.matmul %48, %49, %cst_35 {dimension_numbers = #tpu.dot_dimension_numbers<[1], [1], [0], [0], [0, 0, 1, 0], [], []>, precision = #tpu.contract_precision<fp32>} : vector<8x32xf32>, vector<8x32xf32>, vector<8x8xf32> -> vector<8x8xf32>
    %cst_36 = arith.constant dense<0xFF800000> : vector<8xf32>
    %52 = vector.multi_reduction <maximumf>, %51, %cst_36 [1] : vector<8x8xf32> to vector<8xf32>
    %53 = vector.shape_cast %52 : vector<8xf32> to vector<8x1xf32>
    %54 = vector.broadcast %53 : vector<8x1xf32> to vector<8x8xf32>
    %55 = arith.subf %51, %54 : vector<8x8xf32>
    %56 = math.exp %55 : vector<8x8xf32>
    %cst_37 = arith.constant dense<0.000000e+00> : vector<8xf32>
    %57 = vector.multi_reduction <add>, %56, %cst_37 [1] : vector<8x8xf32> to vector<8xf32>
    %58 = vector.shape_cast %57 : vector<8xf32> to vector<8x1xf32>
    %cst_38 = arith.constant dense<0.000000e+00> : vector<8x32xf32>
    %59 = tpu.matmul %56, %50, %cst_38 {dimension_numbers = #tpu.dot_dimension_numbers<[1], [0], [0], [1], [0, 0, 1, 1], [], []>, precision = #tpu.contract_precision<fp32>} : vector<8x8xf32>, vector<8x32xf32>, vector<8x32xf32> -> vector<8x32xf32>
    %60 = tpu.reciprocal %58 : vector<8x1xf32> -> vector<8x1xf32>
    %61 = vector.broadcast %60 : vector<8x1xf32> to vector<8x32xf32>
    %62 = arith.mulf %59, %61 : vector<8x32xf32>
    %c0_39 = arith.constant 0 : index
    %c0_40 = arith.constant 0 : index
    %c0_41 = arith.constant 0 : index
    %63 = vector.load %arg7[%c0_39, %c0_40, %c0_41] : memref<2x32x128xf32, #tpu.memory_space<vmem>>, vector<1x32x128xf32>
    %64 = vector.shape_cast %63 : vector<1x32x128xf32> to vector<32x128xf32>
    %cst_42 = arith.constant dense<0.000000e+00> : vector<8x128xf32>
    %65 = tpu.matmul %62, %64, %cst_42 {dimension_numbers = #tpu.dot_dimension_numbers<[1], [0], [0], [1], [0, 0, 1, 1], [], []>, precision = #tpu.contract_precision<fp32>} : vector<8x32xf32>, vector<32x128xf32>, vector<8x128xf32> -> vector<8x128xf32>
    %66 = arith.addf %47, %65 : vector<8x128xf32>
    %67 = vector.extract_strided_slice %46 {offsets = [0, 0], sizes = [8, 32], strides = [1, 1]} : vector<16x32xf32> to vector<8x32xf32>
    %68 = vector.extract_strided_slice %41 {offsets = [0, 0], sizes = [8, 32], strides = [1, 1]} : vector<16x32xf32> to vector<8x32xf32>
    %69 = vector.extract_strided_slice %44 {offsets = [0, 0], sizes = [8, 32], strides = [1, 1]} : vector<16x32xf32> to vector<8x32xf32>
    %cst_43 = arith.constant dense<0.000000e+00> : vector<8x8xf32>
    %70 = tpu.matmul %67, %68, %cst_43 {dimension_numbers = #tpu.dot_dimension_numbers<[1], [1], [0], [0], [0, 0, 1, 0], [], []>, precision = #tpu.contract_precision<fp32>} : vector<8x32xf32>, vector<8x32xf32>, vector<8x8xf32> -> vector<8x8xf32>
    %cst_44 = arith.constant dense<0xFF800000> : vector<8xf32>
    %71 = vector.multi_reduction <maximumf>, %70, %cst_44 [1] : vector<8x8xf32> to vector<8xf32>
    %72 = vector.shape_cast %71 : vector<8xf32> to vector<8x1xf32>
    %73 = vector.broadcast %72 : vector<8x1xf32> to vector<8x8xf32>
    %74 = arith.subf %70, %73 : vector<8x8xf32>
    %75 = math.exp %74 : vector<8x8xf32>
    %cst_45 = arith.constant dense<0.000000e+00> : vector<8xf32>
    %76 = vector.multi_reduction <add>, %75, %cst_45 [1] : vector<8x8xf32> to vector<8xf32>
    %77 = vector.shape_cast %76 : vector<8xf32> to vector<8x1xf32>
    %cst_46 = arith.constant dense<0.000000e+00> : vector<8x32xf32>
    %78 = tpu.matmul %75, %69, %cst_46 {dimension_numbers = #tpu.dot_dimension_numbers<[1], [0], [0], [1], [0, 0, 1, 1], [], []>, precision = #tpu.contract_precision<fp32>} : vector<8x8xf32>, vector<8x32xf32>, vector<8x32xf32> -> vector<8x32xf32>
    %79 = tpu.reciprocal %77 : vector<8x1xf32> -> vector<8x1xf32>
    %80 = vector.broadcast %79 : vector<8x1xf32> to vector<8x32xf32>
    %81 = arith.mulf %78, %80 : vector<8x32xf32>
    %c1_47 = arith.constant 1 : index
    %c0_48 = arith.constant 0 : index
    %c0_49 = arith.constant 0 : index
    %82 = vector.load %arg7[%c1_47, %c0_48, %c0_49] : memref<2x32x128xf32, #tpu.memory_space<vmem>>, vector<1x32x128xf32>
    %83 = vector.shape_cast %82 : vector<1x32x128xf32> to vector<32x128xf32>
    %cst_50 = arith.constant dense<0.000000e+00> : vector<8x128xf32>
    %84 = tpu.matmul %81, %83, %cst_50 {dimension_numbers = #tpu.dot_dimension_numbers<[1], [0], [0], [1], [0, 0, 1, 1], [], []>, precision = #tpu.contract_precision<fp32>} : vector<8x32xf32>, vector<32x128xf32>, vector<8x128xf32> -> vector<8x128xf32>
    %85 = arith.addf %66, %84 : vector<8x128xf32>
    %c0_51 = arith.constant 0 : index
    %c0_52 = arith.constant 0 : index
    %c0_53 = arith.constant 0 : index
    %86 = vector.load %arg8[%c0_51, %c0_52, %c0_53] : memref<2x8x128xf32, #tpu.memory_space<vmem>>, vector<1x8x128xf32>
    %87 = vector.shape_cast %86 : vector<1x8x128xf32> to vector<8x128xf32>
    %88 = vector.shape_cast %85 : vector<8x128xf32> to vector<1x8x128xf32>
    tpu.vector_store %arg8[%c0_51, %c0_52, %c0_53], %88 {strides = array<i32>} : memref<2x8x128xf32, #tpu.memory_space<vmem>>, vector<1x8x128xf32>,
    %cst_54 = arith.constant 0.000000e+00 : f32
    %89 = vector.broadcast %cst_54 : f32 to vector<8x128xf32>
    %90 = vector.extract_strided_slice %35 {offsets = [8, 0], sizes = [8, 32], strides = [1, 1]} : vector<16x32xf32> to vector<8x32xf32>
    %91 = vector.extract_strided_slice %30 {offsets = [8, 0], sizes = [8, 32], strides = [1, 1]} : vector<16x32xf32> to vector<8x32xf32>
    %92 = vector.extract_strided_slice %33 {offsets = [8, 0], sizes = [8, 32], strides = [1, 1]} : vector<16x32xf32> to vector<8x32xf32>
    %cst_55 = arith.constant dense<0.000000e+00> : vector<8x8xf32>
    %93 = tpu.matmul %90, %91, %cst_55 {dimension_numbers = #tpu.dot_dimension_numbers<[1], [1], [0], [0], [0, 0, 1, 0], [], []>, precision = #tpu.contract_precision<fp32>} : vector<8x32xf32>, vector<8x32xf32>, vector<8x8xf32> -> vector<8x8xf32>
    %cst_56 = arith.constant dense<0xFF800000> : vector<8xf32>
    %94 = vector.multi_reduction <maximumf>, %93, %cst_56 [1] : vector<8x8xf32> to vector<8xf32>
    %95 = vector.shape_cast %94 : vector<8xf32> to vector<8x1xf32>
    %96 = vector.broadcast %95 : vector<8x1xf32> to vector<8x8xf32>
    %97 = arith.subf %93, %96 : vector<8x8xf32>
    %98 = math.exp %97 : vector<8x8xf32>
    %cst_57 = arith.constant dense<0.000000e+00> : vector<8xf32>
    %99 = vector.multi_reduction <add>, %98, %cst_57 [1] : vector<8x8xf32> to vector<8xf32>
    %100 = vector.shape_cast %99 : vector<8xf32> to vector<8x1xf32>
    %cst_58 = arith.constant dense<0.000000e+00> : vector<8x32xf32>
    %101 = tpu.matmul %98, %92, %cst_58 {dimension_numbers = #tpu.dot_dimension_numbers<[1], [0], [0], [1], [0, 0, 1, 1], [], []>, precision = #tpu.contract_precision<fp32>} : vector<8x8xf32>, vector<8x32xf32>, vector<8x32xf32> -> vector<8x32xf32>
    %102 = tpu.reciprocal %100 : vector<8x1xf32> -> vector<8x1xf32>
    %103 = vector.broadcast %102 : vector<8x1xf32> to vector<8x32xf32>
    %104 = arith.mulf %101, %103 : vector<8x32xf32>
    %c0_59 = arith.constant 0 : index
    %c0_60 = arith.constant 0 : index
    %c0_61 = arith.constant 0 : index
    %105 = vector.load %arg7[%c0_59, %c0_60, %c0_61] : memref<2x32x128xf32, #tpu.memory_space<vmem>>, vector<1x32x128xf32>
    %106 = vector.shape_cast %105 : vector<1x32x128xf32> to vector<32x128xf32>
    %cst_62 = arith.constant dense<0.000000e+00> : vector<8x128xf32>
    %107 = tpu.matmul %104, %106, %cst_62 {dimension_numbers = #tpu.dot_dimension_numbers<[1], [0], [0], [1], [0, 0, 1, 1], [], []>, precision = #tpu.contract_precision<fp32>} : vector<8x32xf32>, vector<32x128xf32>, vector<8x128xf32> -> vector<8x128xf32>
    %108 = arith.addf %89, %107 : vector<8x128xf32>
    %109 = vector.extract_strided_slice %46 {offsets = [8, 0], sizes = [8, 32], strides = [1, 1]} : vector<16x32xf32> to vector<8x32xf32>
    %110 = vector.extract_strided_slice %41 {offsets = [8, 0], sizes = [8, 32], strides = [1, 1]} : vector<16x32xf32> to vector<8x32xf32>
    %111 = vector.extract_strided_slice %44 {offsets = [8, 0], sizes = [8, 32], strides = [1, 1]} : vector<16x32xf32> to vector<8x32xf32>
    %cst_63 = arith.constant dense<0.000000e+00> : vector<8x8xf32>
    %112 = tpu.matmul %109, %110, %cst_63 {dimension_numbers = #tpu.dot_dimension_numbers<[1], [1], [0], [0], [0, 0, 1, 0], [], []>, precision = #tpu.contract_precision<fp32>} : vector<8x32xf32>, vector<8x32xf32>, vector<8x8xf32> -> vector<8x8xf32>
    %cst_64 = arith.constant dense<0xFF800000> : vector<8xf32>
    %113 = vector.multi_reduction <maximumf>, %112, %cst_64 [1] : vector<8x8xf32> to vector<8xf32>
    %114 = vector.shape_cast %113 : vector<8xf32> to vector<8x1xf32>
    %115 = vector.broadcast %114 : vector<8x1xf32> to vector<8x8xf32>
    %116 = arith.subf %112, %115 : vector<8x8xf32>
    %117 = math.exp %116 : vector<8x8xf32>
    %cst_65 = arith.constant dense<0.000000e+00> : vector<8xf32>
    %118 = vector.multi_reduction <add>, %117, %cst_65 [1] : vector<8x8xf32> to vector<8xf32>
    %119 = vector.shape_cast %118 : vector<8xf32> to vector<8x1xf32>
    %cst_66 = arith.constant dense<0.000000e+00> : vector<8x32xf32>
    %120 = tpu.matmul %117, %111, %cst_66 {dimension_numbers = #tpu.dot_dimension_numbers<[1], [0], [0], [1], [0, 0, 1, 1], [], []>, precision = #tpu.contract_precision<fp32>} : vector<8x8xf32>, vector<8x32xf32>, vector<8x32xf32> -> vector<8x32xf32>
    %121 = tpu.reciprocal %119 : vector<8x1xf32> -> vector<8x1xf32>
    %122 = vector.broadcast %121 : vector<8x1xf32> to vector<8x32xf32>
    %123 = arith.mulf %120, %122 : vector<8x32xf32>
    %c1_67 = arith.constant 1 : index
    %c0_68 = arith.constant 0 : index
    %c0_69 = arith.constant 0 : index
    %124 = vector.load %arg7[%c1_67, %c0_68, %c0_69] : memref<2x32x128xf32, #tpu.memory_space<vmem>>, vector<1x32x128xf32>
    %125 = vector.shape_cast %124 : vector<1x32x128xf32> to vector<32x128xf32>
    %cst_70 = arith.constant dense<0.000000e+00> : vector<8x128xf32>
    %126 = tpu.matmul %123, %125, %cst_70 {dimension_numbers = #tpu.dot_dimension_numbers<[1], [0], [0], [1], [0, 0, 1, 1], [], []>, precision = #tpu.contract_precision<fp32>} : vector<8x32xf32>, vector<32x128xf32>, vector<8x128xf32> -> vector<8x128xf32>
    %127 = arith.addf %108, %126 : vector<8x128xf32>
    %c1_71 = arith.constant 1 : index
    %c0_72 = arith.constant 0 : index
    %c0_73 = arith.constant 0 : index
    %128 = vector.load %arg8[%c1_71, %c0_72, %c0_73] : memref<2x8x128xf32, #tpu.memory_space<vmem>>, vector<1x8x128xf32>
    %129 = vector.shape_cast %128 : vector<1x8x128xf32> to vector<8x128xf32>
    %130 = vector.shape_cast %127 : vector<8x128xf32> to vector<1x8x128xf32>
    tpu.vector_store %arg8[%c1_71, %c0_72, %c0_73], %130 {strides = array<i32>} : memref<2x8x128xf32, #tpu.memory_space<vmem>>, vector<1x8x128xf32>,
    return
  }
  func.func @transform_0(%arg0: i32) -> (i32, i32) {
    %c0_i32 = arith.constant 0 : i32
    %c0_i32_0 = arith.constant 0 : i32
    %c0_i32_1 = arith.constant 0 : i32
    return %c0_i32, %c0_i32_0 : i32, i32
  }
  func.func @transform_1(%arg0: i32) -> (i32, i32) {
    %c0_i32 = arith.constant 0 : i32
    %c0_i32_0 = arith.constant 0 : i32
    %c0_i32_1 = arith.constant 0 : i32
    return %c0_i32, %c0_i32_0 : i32, i32
  }
  func.func @transform_2(%arg0: i32) -> (i32, i32) {
    %c0_i32 = arith.constant 0 : i32
    %c0_i32_0 = arith.constant 0 : i32
    %c0_i32_1 = arith.constant 0 : i32
    return %c0_i32, %c0_i32_0 : i32, i32
  }
  func.func @transform_3(%arg0: i32) -> (i32, i32, i32) {
    %c0_i32 = arith.constant 0 : i32
    %c0_i32_0 = arith.constant 0 : i32
    %c0_i32_1 = arith.constant 0 : i32
    %c0_i32_2 = arith.constant 0 : i32
    return %c0_i32, %c0_i32_0, %c0_i32_1 : i32, i32, i32
  }
  func.func @transform_4(%arg0: i32) -> (i32, i32, i32) {
    %c0_i32 = arith.constant 0 : i32
    %c0_i32_0 = arith.constant 0 : i32
    %c0_i32_1 = arith.constant 0 : i32
    %c0_i32_2 = arith.constant 0 : i32
    return %c0_i32, %c0_i32_0, %c0_i32_1 : i32, i32, i32
  }
  func.func @transform_5(%arg0: i32) -> (i32, i32, i32) {
    %c0_i32 = arith.constant 0 : i32
    %c0_i32_0 = arith.constant 0 : i32
    %c0_i32_1 = arith.constant 0 : i32
    %c0_i32_2 = arith.constant 0 : i32
    return %c0_i32, %c0_i32_0, %c0_i32_1 : i32, i32, i32
  }
  func.func @transform_6(%arg0: i32) -> (i32, i32, i32) {
    %c0_i32 = arith.constant 0 : i32
    %c0_i32_0 = arith.constant 0 : i32
    %c0_i32_1 = arith.constant 0 : i32
    %c0_i32_2 = arith.constant 0 : i32
    return %c0_i32, %c0_i32_0, %c0_i32_1 : i32, i32, i32
  }
  func.func @transform_7(%arg0: i32) -> (i32, i32, i32) {
    %c0_i32 = arith.constant 0 : i32
    %c0_i32_0 = arith.constant 0 : i32
    %c0_i32_1 = arith.constant 0 : i32
    %c0_i32_2 = arith.constant 0 : i32
    return %c0_i32, %c0_i32_0, %c0_i32_1 : i32, i32, i32
  }
}

</mosaic_0001>

<llo_original>
// kernel: tpu_custom_call.1
$region0: #{tpu_custom_call.1}
  #allocation0 [shape = 'u32[]', space=smem, size = 0x4, offset = 0x4, fixed_abs, tag = 'smem constant byte address 0x4 - core index']
  #allocation1 [shape = 'u32[72,128]{1,0:T(1,128)}', space=vmem, size = 0x9000, scoped, tag = 'internal scratch']
  %s0 = inlined_call_operand.hbm [shape: f32[16,32], index: 0, kind: input, shape index: {}]
  %s1 = inlined_call_operand.hbm [shape: f32[1,32], index: 1, kind: input, shape index: {}]
  %s2 = inlined_call_operand.vmem [shape: f32[1,32], index: 2, kind: input, shape index: {}]
  %s3 = inlined_call_operand.hbm [shape: f32[2,32,32], index: 3, kind: input, shape index: {}]
  %s4 = inlined_call_operand.hbm [shape: f32[2,32,32], index: 4, kind: input, shape index: {}]
  %s5 = inlined_call_operand.hbm [shape: f32[2,32,32], index: 5, kind: input, shape index: {}]
  %s6 = inlined_call_operand.hbm [shape: f32[2,32,128], index: 6, kind: input, shape index: {}]
  %s7 = inlined_call_operand.hbm [shape: f32[2,8,128], index: 7, kind: output, shape index: {}]
  %s8 = sld [smem:[#allocation0]]
  $region62: #{tpu_custom_call.1} parent=0
    _
  %s10 = ssub.s32 1, %s8
  %s11 = scalar_select 0, %s10, %s8
  $region1: #{tpu_custom_call.1} parent=0
    #allocation2 [shape = 'u8[8192]{0}', space=vmem, size = 0x2000, scoped, tag = 'input window, operand 0, single buffered']
    #allocation3 [shape = 's32[1]{0}', space=sflag, size = 0x4, scoped, tag = 'scoped memory for tpu_custom_call.1']
    #allocation4 [shape = 's32[1]{0}', space=sflag, size = 0x4, scoped, tag = 'scoped memory for tpu_custom_call.1']
    #allocation5 [shape = 'u8[512]{0}', space=vmem, size = 0x400, scoped, tag = 'input window, operand 1, single buffered']
    #allocation6 [shape = 's32[1]{0}', space=sflag, size = 0x4, scoped, tag = 'scoped memory for tpu_custom_call.1']
    #allocation7 [shape = 'u8[32768]{0}', space=vmem, size = 0x8000, scoped, tag = 'input window, operand 3, single buffered']
    #allocation8 [shape = 'u8[32768]{0}', space=vmem, size = 0x8000, scoped, tag = 'input window, operand 4, single buffered']
    #allocation9 [shape = 's32[1]{0}', space=sflag, size = 0x4, scoped, tag = 'scoped memory for tpu_custom_call.1']
    #allocation10 [shape = 'u8[32768]{0}', space=vmem, size = 0x8000, scoped, tag = 'input window, operand 5, single buffered']
    #allocation11 [shape = 'u8[32768]{0}', space=vmem, size = 0x8000, scoped, tag = 'input window, operand 6, single buffered']
    #allocation12 [shape = 's32[1]{0}', space=sflag, size = 0x4, scoped, tag = 'scoped memory for tpu_custom_call.1']
    #allocation13 [shape = 'u8[8192]{0}', space=vmem, size = 0x2000, scoped, tag = 'output window, operand 0, single buffered']
    %12 = vsyncpa [#allocation3], 0
    %13 = vsyncpa [#allocation6], 0
    %14 = vsyncpa [#allocation9], 0
    %15 = vsyncpa [#allocation12], 0
    %16 = vsyncpa [#allocation4], 0
    // Predicated region
    $region2: #{tpu_custom_call.1} parent=1 // pred_check
      _
    $region3: #{tpu_custom_call.1} parent=1 // pred_check_branch
      %18 = sbr.rel (0) target = $region5
    $region4: #{tpu_custom_call.1} parent=1 // pred_region
      %20 = vsyncadd [#allocation3], 0
      %s21 = sshll.u32 %s0, 4
      %s22 = int_to_ptr.hbm [resolvable:$true] %s21
      %s23 = sshll.u32 [#allocation2], 4
      %s24 = int_to_ptr.vmem [resolvable:$true] %s23
      %29 = dma.hbm_to_vmem [thread:$0]  %s22, 256, %s24, [#allocation3], 128, 128, 8
    $region5: #{tpu_custom_call.1} parent=1 // pred_fallthru
      _
    // Predicated region
    $region6: #{tpu_custom_call.1} parent=1 // pred_check
      _
    $region7: #{tpu_custom_call.1} parent=1 // pred_check_branch
      %31 = sbr.rel (0) target = $region9
    $region8: #{tpu_custom_call.1} parent=1 // pred_region
      %33 = vsyncadd [#allocation6], 0
      %s35 = sshll.u32 %s1, 4
      %s36 = int_to_ptr.hbm [resolvable:$true] %s35
      %s37 = sshll.u32 [#allocation5], 4
      %s38 = int_to_ptr.vmem [resolvable:$true] %s37
      %40 = dma.hbm_to_vmem [thread:$0]  %s36, 16, %s38, [#allocation6]
    $region9: #{tpu_custom_call.1} parent=1 // pred_fallthru
      _
    // Predicated region
    $region10: #{tpu_custom_call.1} parent=1 // pred_check
      _
    $region11: #{tpu_custom_call.1} parent=1 // pred_check_branch
      %42 = sbr.rel (0) target = $region13
    $region12: #{tpu_custom_call.1} parent=1 // pred_region
      _
    $region13: #{tpu_custom_call.1} parent=1 // pred_fallthru
      _
    // Predicated region
    $region14: #{tpu_custom_call.1} parent=1 // pred_check
      _
    $region15: #{tpu_custom_call.1} parent=1 // pred_check_branch
      %44 = sbr.rel (0) target = $region17
    $region16: #{tpu_custom_call.1} parent=1 // pred_region
      %46 = vsyncadd [#allocation6], 0
      %s47 = sshll.u32 %s3, 4
      %s48 = int_to_ptr.hbm [resolvable:$true] %s47
      %s49 = sshll.u32 [#allocation7], 4
      %s50 = int_to_ptr.vmem [resolvable:$true] %s49
      %55 = dma.hbm_to_vmem [thread:$0]  %s48, 1024, %s50, [#allocation6], 128, 128, 8
    $region17: #{tpu_custom_call.1} parent=1 // pred_fallthru
      _
    // Predicated region
    $region18: #{tpu_custom_call.1} parent=1 // pred_check
      _
    $region19: #{tpu_custom_call.1} parent=1 // pred_check_branch
      %57 = sbr.rel (0) target = $region21
    $region20: #{tpu_custom_call.1} parent=1 // pred_region
      %59 = vsyncadd [#allocation9], 0
      %s60 = sshll.u32 %s4, 4
      %s61 = int_to_ptr.hbm [resolvable:$true] %s60
      %s62 = sshll.u32 [#allocation8], 4
      %s63 = int_to_ptr.vmem [resolvable:$true] %s62
      %68 = dma.hbm_to_vmem [thread:$0]  %s61, 1024, %s63, [#allocation9], 128, 128, 8
    $region21: #{tpu_custom_call.1} parent=1 // pred_fallthru
      _
    // Predicated region
    $region22: #{tpu_custom_call.1} parent=1 // pred_check
      _
    $region23: #{tpu_custom_call.1} parent=1 // pred_check_branch
      %70 = sbr.rel (0) target = $region25
    $region24: #{tpu_custom_call.1} parent=1 // pred_region
      %72 = vsyncadd [#allocation9], 0
      %s73 = sshll.u32 %s5, 4
      %s74 = int_to_ptr.hbm [resolvable:$true] %s73
      %s75 = sshll.u32 [#allocation10], 4
      %s76 = int_to_ptr.vmem [resolvable:$true] %s75
      %81 = dma.hbm_to_vmem [thread:$0]  %s74, 1024, %s76, [#allocation9], 128, 128, 8
    $region25: #{tpu_custom_call.1} parent=1 // pred_fallthru
      _
    // Predicated region
    $region26: #{tpu_custom_call.1} parent=1 // pred_check
      _
    $region27: #{tpu_custom_call.1} parent=1 // pred_check_branch
      %83 = sbr.rel (0) target = $region29
    $region28: #{tpu_custom_call.1} parent=1 // pred_region
      %85 = vsyncadd [#allocation12], 0
      %s86 = sshll.u32 %s6, 4
      %s87 = int_to_ptr.hbm [resolvable:$true] %s86
      %s88 = sshll.u32 [#allocation11], 4
      %s89 = int_to_ptr.vmem [resolvable:$true] %s88
      %94 = dma.hbm_to_vmem [thread:$0]  %s87, 1024, %s89, [#allocation12], 128, 128, 8
    $region29: #{tpu_custom_call.1} parent=1 // pred_fallthru
      _
    // Predicated region
    $region30: #{tpu_custom_call.1} parent=1 // pred_check
      _
    $region31: #{tpu_custom_call.1} parent=1 // pred_check_branch
      %96 = sbr.rel (0) target = $region33
    $region32: #{tpu_custom_call.1} parent=1 // pred_region
      %98 = dma.done [#allocation3], 256
    $region33: #{tpu_custom_call.1} parent=1 // pred_fallthru
      _
    // Predicated region
    $region34: #{tpu_custom_call.1} parent=1 // pred_check
      _
    $region35: #{tpu_custom_call.1} parent=1 // pred_check_branch
      %100 = sbr.rel (0) target = $region37
    $region36: #{tpu_custom_call.1} parent=1 // pred_region
      %102 = dma.done [#allocation6], 16
    $region37: #{tpu_custom_call.1} parent=1 // pred_fallthru
      _
    // Predicated region
    $region38: #{tpu_custom_call.1} parent=1 // pred_check
      _
    $region39: #{tpu_custom_call.1} parent=1 // pred_check_branch
      %104 = sbr.rel (0) target = $region41
    $region40: #{tpu_custom_call.1} parent=1 // pred_region
      %106 = dma.done [#allocation6], 1024
    $region41: #{tpu_custom_call.1} parent=1 // pred_fallthru
      _
    // Predicated region
    $region42: #{tpu_custom_call.1} parent=1 // pred_check
      _
    $region43: #{tpu_custom_call.1} parent=1 // pred_check_branch
      %108 = sbr.rel (0) target = $region45
    $region44: #{tpu_custom_call.1} parent=1 // pred_region
      %110 = dma.done [#allocation9], 1024
    $region45: #{tpu_custom_call.1} parent=1 // pred_fallthru
      _
    // Predicated region
    $region46: #{tpu_custom_call.1} parent=1 // pred_check
      _
    $region47: #{tpu_custom_call.1} parent=1 // pred_check_branch
      %112 = sbr.rel (0) target = $region49
    $region48: #{tpu_custom_call.1} parent=1 // pred_region
      %114 = dma.done [#allocation9], 1024
    $region49: #{tpu_custom_call.1} parent=1 // pred_fallthru
      _
    // Predicated region
    $region50: #{tpu_custom_call.1} parent=1 // pred_check
      _
    $region51: #{tpu_custom_call.1} parent=1 // pred_check_branch
      %116 = sbr.rel (0) target = $region53
    $region52: #{tpu_custom_call.1} parent=1 // pred_region
      %118 = dma.done [#allocation12], 1024
    $region53: #{tpu_custom_call.1} parent=1 // pred_fallthru
      _
    %v119 = vld [vmem:[#allocation2] sm:$0xff]
    %v120 = vld [vmem:[#allocation2 + $0x8] sm:$0xff]
    %v121 = vld [vmem:[#allocation5] sm:$0x1]
    %v122 = vld [vmem:[%s2] sm:$0x1]
    %vm123 = vcmask 261120
    %v124 = vsel %vm123, %v119, 0.0
    %125 = vadd.xlane.f32.xlu0 %v124
    %v126 = vpop.xlane.xlu0 %125
    %v127 = vsel %vm123, %v120, 0.0
    %128 = vadd.xlane.f32.xlu0 %v127
    %v129 = vpop.xlane.xlu0 %128
    %v130 = vrcp.pop 32.0
    %v131 = vmul.f32 32.0, %v130
    %v132 = vsub.f32 1.0, %v131
    %v133 = vmul.f32 %v130, %v132
    %v134 = vadd.f32 %v130, %v133
    %vm135 = vweird.f32 %v130
    %v136 = vsel %vm135, %v130, %v134
    %v137 = vmul.f32 %v126, %v136
    %v138 = vmul.f32 %v129, %v136
    %v139 = vsub.f32 %v119, %v137
    %v140 = vsub.f32 %v120, %v138
    %v141 = vmul.f32 %v139, %v139
    %v142 = vmul.f32 %v140, %v140
    %v143 = vsel %vm123, %v141, 0.0
    %144 = vadd.xlane.f32.xlu0 %v143
    %v145 = vpop.xlane.xlu0 %144
    %v146 = vsel %vm123, %v142, 0.0
    %147 = vadd.xlane.f32.xlu0 %v146
    %v148 = vpop.xlane.xlu0 %147
    %v149 = vmul.f32 %v145, %v136
    %v150 = vmul.f32 %v148, %v136
    %v151 = vadd.f32 %v149, 1e-05
    %v152 = vadd.f32 %v150, 1e-05
    %v153 = vrsqrt.pop %v151
    %v154 = vmul.f32 %v153, %v151
    %v155 = vmul.f32 %v154, %v153
    %v156 = vmul.f32 0.5, %v155
    %v157 = vsub.f32 1.5, %v156
    %v158 = vmul.f32 %v153, %v157
    %vm159 = vweird.f32 %v151
    %vm160 = vweird.f32 %v153
    %vm161 = vmor %vm159, %vm160
    %v162 = vsel %vm161, %v153, %v158
    %v163 = vrsqrt.pop %v152
    %v164 = vmul.f32 %v163, %v152
    %v165 = vmul.f32 %v164, %v163
    %v166 = vmul.f32 0.5, %v165
    %v167 = vsub.f32 1.5, %v166
    %v168 = vmul.f32 %v163, %v167
    %vm169 = vweird.f32 %v152
    %vm170 = vweird.f32 %v163
    %vm171 = vmor %vm169, %vm170
    %v172 = vsel %vm171, %v163, %v168
    %v173 = vmul.f32 %v139, %v162
    %v174 = vmul.f32 %v140, %v172
    %v176 = vperm.slane %v121, 0
    %v178 = vmul.f32 %v173, %v176
    %v179 = vmul.f32 %v174, %v176
    %v181 = vperm.slane %v122, 0
    %v183 = vadd.f32 %v178, %v181
    %v184 = vadd.f32 %v179, %v181
    %v185 = vld [vmem:[#allocation7] sm:$0xff]
    %v186 = vld [vmem:[#allocation7 + $0x8] sm:$0xff]
    %v187 = vld [vmem:[#allocation7 + $0x10] sm:$0xff]
    %v188 = vld [vmem:[#allocation7 + $0x18] sm:$0xff]
    %v190 = vsel %vm123, %v183, 0
    %v193 = vsel %vm123, %v184, 0
    %195 = vmatpush.msra.mxu0 0.0
    %196 = vmatpush.msra.mxu0 0.0
    %197 = vmatpush.msra.mxu0 0.0
    %198 = vmatpush.msra.mxu0 0.0
    %199 = vmatpush.msra.mxu0 0.0
    %200 = vmatpush.msra.mxu0 0.0
    %201 = vmatpush.msra.mxu0 0.0
    %202 = vmatpush.msra.mxu0 0.0
    %203 = vmatpush.msra.mxu0 0.0
    %204 = vmatpush.msra.mxu0 0.0
    %205 = vmatpush.msra.mxu0 0.0
    %206 = vmatpush.msra.mxu0 0.0
    %v207 = vand.u32 %v188, 4294901760
    %208 = vmatpush.msra.mxu0 %v207
    %v209 = vand.u32 %v187, 4294901760
    %210 = vmatpush.msra.mxu0 %v209
    %v211 = vand.u32 %v186, 4294901760
    %212 = vmatpush.msra.mxu0 %v211
    %v213 = vand.u32 %v185, 4294901760
    %214 = vmatpush.msra.mxu0 %v213
    %v215 = vand.u32 %v190, 4294901760
    %v216 = vsub.f32 %v190, %v215
    %v217 = vand.u32 %v216, 4294901760
    %v218 = vsub.f32 %v216, %v217
    %v219 = vand.u32 %v218, 4294901760
    %220 = vmatmul.f32.gmra.mxu0 %v219
    %v221 = vpop.f32.mrf.mxu0
    %v222 = vadd.f32 0.0, %v221
    %v223 = vand.u32 %v193, 4294901760
    %v224 = vsub.f32 %v193, %v223
    %v225 = vand.u32 %v224, 4294901760
    %v226 = vsub.f32 %v224, %v225
    %v227 = vand.u32 %v226, 4294901760
    %228 = vmatmul.f32.gmra.mxu0 %v227
    %v229 = vpop.f32.mrf.mxu0
    %v230 = vadd.f32 0.0, %v229
    %231 = vdwg.mxu0
    %232 = vmatpush.msra.mxu0 0.0
    %233 = vmatpush.msra.mxu0 0.0
    %234 = vmatpush.msra.mxu0 0.0
    %235 = vmatpush.msra.mxu0 0.0
    %236 = vmatpush.msra.mxu0 0.0
    %237 = vmatpush.msra.mxu0 0.0
    %238 = vmatpush.msra.mxu0 0.0
    %239 = vmatpush.msra.mxu0 0.0
    %240 = vmatpush.msra.mxu0 0.0
    %241 = vmatpush.msra.mxu0 0.0
    %242 = vmatpush.msra.mxu0 0.0
    %243 = vmatpush.msra.mxu0 0.0
    %v244 = vand.u32 %v188, 4294901760
    %v245 = vsub.f32 %v188, %v244
    %v246 = vand.u32 %v245, 4294901760
    %v247 = vsub.f32 %v245, %v246
    %v248 = vand.u32 %v247, 4294901760
    %249 = vmatpush.msra.mxu0 %v248
    %v250 = vand.u32 %v187, 4294901760
    %v251 = vsub.f32 %v187, %v250
    %v252 = vand.u32 %v251, 4294901760
    %v253 = vsub.f32 %v251, %v252
    %v254 = vand.u32 %v253, 4294901760
    %255 = vmatpush.msra.mxu0 %v254
    %v256 = vand.u32 %v186, 4294901760
    %v257 = vsub.f32 %v186, %v256
    %v258 = vand.u32 %v257, 4294901760
    %v259 = vsub.f32 %v257, %v258
    %v260 = vand.u32 %v259, 4294901760
    %261 = vmatpush.msra.mxu0 %v260
    %v262 = vand.u32 %v185, 4294901760
    %v263 = vsub.f32 %v185, %v262
    %v264 = vand.u32 %v263, 4294901760
    %v265 = vsub.f32 %v263, %v264
    %v266 = vand.u32 %v265, 4294901760
    %267 = vmatpush.msra.mxu0 %v266
    %v268 = vand.u32 %v190, 4294901760
    %269 = vmatmul.f32.gmra.mxu0 %v268
    %v270 = vpop.f32.mrf.mxu0
    %v271 = vadd.f32 %v222, %v270
    %v272 = vand.u32 %v193, 4294901760
    %273 = vmatmul.f32.gmra.mxu0 %v272
    %v274 = vpop.f32.mrf.mxu0
    %v275 = vadd.f32 %v230, %v274
    %276 = vdwg.mxu0
    %277 = vmatpush.msra.mxu0 0.0
    %278 = vmatpush.msra.mxu0 0.0
    %279 = vmatpush.msra.mxu0 0.0
    %280 = vmatpush.msra.mxu0 0.0
    %281 = vmatpush.msra.mxu0 0.0
    %282 = vmatpush.msra.mxu0 0.0
    %283 = vmatpush.msra.mxu0 0.0
    %284 = vmatpush.msra.mxu0 0.0
    %285 = vmatpush.msra.mxu0 0.0
    %286 = vmatpush.msra.mxu0 0.0
    %287 = vmatpush.msra.mxu0 0.0
    %288 = vmatpush.msra.mxu0 0.0
    %v289 = vand.u32 %v188, 4294901760
    %v290 = vsub.f32 %v188, %v289
    %291 = vmatpush.msra.mxu0 %v290
    %v292 = vand.u32 %v187, 4294901760
    %v293 = vsub.f32 %v187, %v292
    %294 = vmatpush.msra.mxu0 %v293
    %v295 = vand.u32 %v186, 4294901760
    %v296 = vsub.f32 %v186, %v295
    %297 = vmatpush.msra.mxu0 %v296
    %v298 = vand.u32 %v185, 4294901760
    %v299 = vsub.f32 %v185, %v298
    %300 = vmatpush.msra.mxu0 %v299
    %v301 = vand.u32 %v190, 4294901760
    %v302 = vsub.f32 %v190, %v301
    %303 = vmatmul.f32.gmra.mxu0 %v302
    %v304 = vpop.f32.mrf.mxu0
    %v305 = vadd.f32 %v271, %v304
    %v306 = vand.u32 %v193, 4294901760
    %v307 = vsub.f32 %v193, %v306
    %308 = vmatmul.f32.gmra.mxu0 %v307
    %v309 = vpop.f32.mrf.mxu0
    %v310 = vadd.f32 %v275, %v309
    %311 = vdwg.mxu0
    %312 = vmatpush.msra.mxu0 0.0
    %313 = vmatpush.msra.mxu0 0.0
    %314 = vmatpush.msra.mxu0 0.0
    %315 = vmatpush.msra.mxu0 0.0
    %316 = vmatpush.msra.mxu0 0.0
    %317 = vmatpush.msra.mxu0 0.0
    %318 = vmatpush.msra.mxu0 0.0
    %319 = vmatpush.msra.mxu0 0.0
    %320 = vmatpush.msra.mxu0 0.0
    %321 = vmatpush.msra.mxu0 0.0
    %322 = vmatpush.msra.mxu0 0.0
    %323 = vmatpush.msra.mxu0 0.0
    %v324 = vand.u32 %v188, 4294901760
    %325 = vmatpush.msra.mxu0 %v324
    %v326 = vand.u32 %v187, 4294901760
    %327 = vmatpush.msra.mxu0 %v326
    %v328 = vand.u32 %v186, 4294901760
    %329 = vmatpush.msra.mxu0 %v328
    %v330 = vand.u32 %v185, 4294901760
    %331 = vmatpush.msra.mxu0 %v330
    %v332 = vand.u32 %v190, 4294901760
    %v333 = vsub.f32 %v190, %v332
    %v334 = vand.u32 %v333, 4294901760
    %335 = vmatmul.f32.gmra.mxu0 %v334
    %v336 = vpop.f32.mrf.mxu0
    %v337 = vadd.f32 %v305, %v336
    %v338 = vand.u32 %v193, 4294901760
    %v339 = vsub.f32 %v193, %v338
    %v340 = vand.u32 %v339, 4294901760
    %341 = vmatmul.f32.gmra.mxu0 %v340
    %v342 = vpop.f32.mrf.mxu0
    %v343 = vadd.f32 %v310, %v342
    %344 = vdwg.mxu0
    %345 = vmatpush.msra.mxu0 0.0
    %346 = vmatpush.msra.mxu0 0.0
    %347 = vmatpush.msra.mxu0 0.0
    %348 = vmatpush.msra.mxu0 0.0
    %349 = vmatpush.msra.mxu0 0.0
    %350 = vmatpush.msra.mxu0 0.0
    %351 = vmatpush.msra.mxu0 0.0
    %352 = vmatpush.msra.mxu0 0.0
    %353 = vmatpush.msra.mxu0 0.0
    %354 = vmatpush.msra.mxu0 0.0
    %355 = vmatpush.msra.mxu0 0.0
    %356 = vmatpush.msra.mxu0 0.0
    %v357 = vand.u32 %v188, 4294901760
    %v358 = vsub.f32 %v188, %v357
    %v359 = vand.u32 %v358, 4294901760
    %360 = vmatpush.msra.mxu0 %v359
    %v361 = vand.u32 %v187, 4294901760
    %v362 = vsub.f32 %v187, %v361
    %v363 = vand.u32 %v362, 4294901760
    %364 = vmatpush.msra.mxu0 %v363
    %v365 = vand.u32 %v186, 4294901760
    %v366 = vsub.f32 %v186, %v365
    %v367 = vand.u32 %v366, 4294901760
    %368 = vmatpush.msra.mxu0 %v367
    %v369 = vand.u32 %v185, 4294901760
    %v370 = vsub.f32 %v185, %v369
    %v371 = vand.u32 %v370, 4294901760
    %372 = vmatpush.msra.mxu0 %v371
    %v373 = vand.u32 %v190, 4294901760
    %374 = vmatmul.f32.gmra.mxu0 %v373
    %v375 = vpop.f32.mrf.mxu0
    %v376 = vadd.f32 %v337, %v375
    %v377 = vand.u32 %v193, 4294901760
    %378 = vmatmul.f32.gmra.mxu0 %v377
    %v379 = vpop.f32.mrf.mxu0
    %v380 = vadd.f32 %v343, %v379
    %381 = vdwg.mxu0
    %382 = vmatpush.msra.mxu0 0.0
    %383 = vmatpush.msra.mxu0 0.0
    %384 = vmatpush.msra.mxu0 0.0
    %385 = vmatpush.msra.mxu0 0.0
    %386 = vmatpush.msra.mxu0 0.0
    %387 = vmatpush.msra.mxu0 0.0
    %388 = vmatpush.msra.mxu0 0.0
    %389 = vmatpush.msra.mxu0 0.0
    %390 = vmatpush.msra.mxu0 0.0
    %391 = vmatpush.msra.mxu0 0.0
    %392 = vmatpush.msra.mxu0 0.0
    %393 = vmatpush.msra.mxu0 0.0
    %v394 = vand.u32 %v188, 4294901760
    %395 = vmatpush.msra.mxu0 %v394
    %v396 = vand.u32 %v187, 4294901760
    %397 = vmatpush.msra.mxu0 %v396
    %v398 = vand.u32 %v186, 4294901760
    %399 = vmatpush.msra.mxu0 %v398
    %v400 = vand.u32 %v185, 4294901760
    %401 = vmatpush.msra.mxu0 %v400
    %v402 = vand.u32 %v190, 4294901760
    %403 = vmatmul.f32.gmra.mxu0 %v402
    %v404 = vpop.f32.mrf.mxu0
    %v405 = vadd.f32 %v376, %v404
    %v406 = vand.u32 %v193, 4294901760
    %407 = vmatmul.f32.gmra.mxu0 %v406
    %v408 = vpop.f32.mrf.mxu0
    %v409 = vadd.f32 %v380, %v408
    %410 = vdwg.mxu0
    %v411 = vld [vmem:[#allocation8] sm:$0xff]
    %v412 = vld [vmem:[#allocation8 + $0x8] sm:$0xff]
    %v413 = vld [vmem:[#allocation8 + $0x10] sm:$0xff]
    %v414 = vld [vmem:[#allocation8 + $0x18] sm:$0xff]
    %415 = vmatpush.msra.mxu0 0.0
    %416 = vmatpush.msra.mxu0 0.0
    %417 = vmatpush.msra.mxu0 0.0
    %418 = vmatpush.msra.mxu0 0.0
    %419 = vmatpush.msra.mxu0 0.0
    %420 = vmatpush.msra.mxu0 0.0
    %421 = vmatpush.msra.mxu0 0.0
    %422 = vmatpush.msra.mxu0 0.0
    %423 = vmatpush.msra.mxu0 0.0
    %424 = vmatpush.msra.mxu0 0.0
    %425 = vmatpush.msra.mxu0 0.0
    %426 = vmatpush.msra.mxu0 0.0
    %v427 = vand.u32 %v414, 4294901760
    %428 = vmatpush.msra.mxu0 %v427
    %v429 = vand.u32 %v413, 4294901760
    %430 = vmatpush.msra.mxu0 %v429
    %v431 = vand.u32 %v412, 4294901760
    %432 = vmatpush.msra.mxu0 %v431
    %v433 = vand.u32 %v411, 4294901760
    %434 = vmatpush.msra.mxu0 %v433
    %v435 = vand.u32 %v190, 4294901760
    %v436 = vsub.f32 %v190, %v435
    %v437 = vand.u32 %v436, 4294901760
    %v438 = vsub.f32 %v436, %v437
    %v439 = vand.u32 %v438, 4294901760
    %440 = vmatmul.f32.gmra.mxu0 %v439
    %v441 = vpop.f32.mrf.mxu0
    %v442 = vadd.f32 0.0, %v441
    %v443 = vand.u32 %v193, 4294901760
    %v444 = vsub.f32 %v193, %v443
    %v445 = vand.u32 %v444, 4294901760
    %v446 = vsub.f32 %v444, %v445
    %v447 = vand.u32 %v446, 4294901760
    %448 = vmatmul.f32.gmra.mxu0 %v447
    %v449 = vpop.f32.mrf.mxu0
    %v450 = vadd.f32 0.0, %v449
    %451 = vdwg.mxu0
    %452 = vmatpush.msra.mxu0 0.0
    %453 = vmatpush.msra.mxu0 0.0
    %454 = vmatpush.msra.mxu0 0.0
    %455 = vmatpush.msra.mxu0 0.0
    %456 = vmatpush.msra.mxu0 0.0
    %457 = vmatpush.msra.mxu0 0.0
    %458 = vmatpush.msra.mxu0 0.0
    %459 = vmatpush.msra.mxu0 0.0
    %460 = vmatpush.msra.mxu0 0.0
    %461 = vmatpush.msra.mxu0 0.0
    %462 = vmatpush.msra.mxu0 0.0
    %463 = vmatpush.msra.mxu0 0.0
    %v464 = vand.u32 %v414, 4294901760
    %v465 = vsub.f32 %v414, %v464
    %v466 = vand.u32 %v465, 4294901760
    %v467 = vsub.f32 %v465, %v466
    %v468 = vand.u32 %v467, 4294901760
    %469 = vmatpush.msra.mxu0 %v468
    %v470 = vand.u32 %v413, 4294901760
    %v471 = vsub.f32 %v413, %v470
    %v472 = vand.u32 %v471, 4294901760
    %v473 = vsub.f32 %v471, %v472
    %v474 = vand.u32 %v473, 4294901760
    %475 = vmatpush.msra.mxu0 %v474
    %v476 = vand.u32 %v412, 4294901760
    %v477 = vsub.f32 %v412, %v476
    %v478 = vand.u32 %v477, 4294901760
    %v479 = vsub.f32 %v477, %v478
    %v480 = vand.u32 %v479, 4294901760
    %481 = vmatpush.msra.mxu0 %v480
    %v482 = vand.u32 %v411, 4294901760
    %v483 = vsub.f32 %v411, %v482
    %v484 = vand.u32 %v483, 4294901760
    %v485 = vsub.f32 %v483, %v484
    %v486 = vand.u32 %v485, 4294901760
    %487 = vmatpush.msra.mxu0 %v486
    %v488 = vand.u32 %v190, 4294901760
    %489 = vmatmul.f32.gmra.mxu0 %v488
    %v490 = vpop.f32.mrf.mxu0
    %v491 = vadd.f32 %v442, %v490
    %v492 = vand.u32 %v193, 4294901760
    %493 = vmatmul.f32.gmra.mxu0 %v492
    %v494 = vpop.f32.mrf.mxu0
    %v495 = vadd.f32 %v450, %v494
    %496 = vdwg.mxu0
    %497 = vmatpush.msra.mxu0 0.0
    %498 = vmatpush.msra.mxu0 0.0
    %499 = vmatpush.msra.mxu0 0.0
    %500 = vmatpush.msra.mxu0 0.0
    %501 = vmatpush.msra.mxu0 0.0
    %502 = vmatpush.msra.mxu0 0.0
    %503 = vmatpush.msra.mxu0 0.0
    %504 = vmatpush.msra.mxu0 0.0
    %505 = vmatpush.msra.mxu0 0.0
    %506 = vmatpush.msra.mxu0 0.0
    %507 = vmatpush.msra.mxu0 0.0
    %508 = vmatpush.msra.mxu0 0.0
    %v509 = vand.u32 %v414, 4294901760
    %v510 = vsub.f32 %v414, %v509
    %511 = vmatpush.msra.mxu0 %v510
    %v512 = vand.u32 %v413, 4294901760
    %v513 = vsub.f32 %v413, %v512
    %514 = vmatpush.msra.mxu0 %v513
    %v515 = vand.u32 %v412, 4294901760
    %v516 = vsub.f32 %v412, %v515
    %517 = vmatpush.msra.mxu0 %v516
    %v518 = vand.u32 %v411, 4294901760
    %v519 = vsub.f32 %v411, %v518
    %520 = vmatpush.msra.mxu0 %v519
    %v521 = vand.u32 %v190, 4294901760
    %v522 = vsub.f32 %v190, %v521
    %523 = vmatmul.f32.gmra.mxu0 %v522
    %v524 = vpop.f32.mrf.mxu0
    %v525 = vadd.f32 %v491, %v524
    %v526 = vand.u32 %v193, 4294901760
    %v527 = vsub.f32 %v193, %v526
    %528 = vmatmul.f32.gmra.mxu0 %v527
    %v529 = vpop.f32.mrf.mxu0
    %v530 = vadd.f32 %v495, %v529
    %531 = vdwg.mxu0
    %532 = vmatpush.msra.mxu0 0.0
    %533 = vmatpush.msra.mxu0 0.0
    %534 = vmatpush.msra.mxu0 0.0
    %535 = vmatpush.msra.mxu0 0.0
    %536 = vmatpush.msra.mxu0 0.0
    %537 = vmatpush.msra.mxu0 0.0
    %538 = vmatpush.msra.mxu0 0.0
    %539 = vmatpush.msra.mxu0 0.0
    %540 = vmatpush.msra.mxu0 0.0
    %541 = vmatpush.msra.mxu0 0.0
    %542 = vmatpush.msra.mxu0 0.0
    %543 = vmatpush.msra.mxu0 0.0
    %v544 = vand.u32 %v414, 4294901760
    %545 = vmatpush.msra.mxu0 %v544
    %v546 = vand.u32 %v413, 4294901760
    %547 = vmatpush.msra.mxu0 %v546
    %v548 = vand.u32 %v412, 4294901760
    %549 = vmatpush.msra.mxu0 %v548
    %v550 = vand.u32 %v411, 4294901760
    %551 = vmatpush.msra.mxu0 %v550
    %v552 = vand.u32 %v190, 4294901760
    %v553 = vsub.f32 %v190, %v552
    %v554 = vand.u32 %v553, 4294901760
    %555 = vmatmul.f32.gmra.mxu0 %v554
    %v556 = vpop.f32.mrf.mxu0
    %v557 = vadd.f32 %v525, %v556
    %v558 = vand.u32 %v193, 4294901760
    %v559 = vsub.f32 %v193, %v558
    %v560 = vand.u32 %v559, 4294901760
    %561 = vmatmul.f32.gmra.mxu0 %v560
    %v562 = vpop.f32.mrf.mxu0
    %v563 = vadd.f32 %v530, %v562
    %564 = vdwg.mxu0
    %565 = vmatpush.msra.mxu0 0.0
    %566 = vmatpush.msra.mxu0 0.0
    %567 = vmatpush.msra.mxu0 0.0
    %568 = vmatpush.msra.mxu0 0.0
    %569 = vmatpush.msra.mxu0 0.0
    %570 = vmatpush.msra.mxu0 0.0
    %571 = vmatpush.msra.mxu0 0.0
    %572 = vmatpush.msra.mxu0 0.0
    %573 = vmatpush.msra.mxu0 0.0
    %574 = vmatpush.msra.mxu0 0.0
    %575 = vmatpush.msra.mxu0 0.0
    %576 = vmatpush.msra.mxu0 0.0
    %v577 = vand.u32 %v414, 4294901760
    %v578 = vsub.f32 %v414, %v577
    %v579 = vand.u32 %v578, 4294901760
    %580 = vmatpush.msra.mxu0 %v579
    %v581 = vand.u32 %v413, 4294901760
    %v582 = vsub.f32 %v413, %v581
    %v583 = vand.u32 %v582, 4294901760
    %584 = vmatpush.msra.mxu0 %v583
    %v585 = vand.u32 %v412, 4294901760
    %v586 = vsub.f32 %v412, %v585
    %v587 = vand.u32 %v586, 4294901760
    %588 = vmatpush.msra.mxu0 %v587
    %v589 = vand.u32 %v411, 4294901760
    %v590 = vsub.f32 %v411, %v589
    %v591 = vand.u32 %v590, 4294901760
    %592 = vmatpush.msra.mxu0 %v591
    %v593 = vand.u32 %v190, 4294901760
    %594 = vmatmul.f32.gmra.mxu0 %v593
    %v595 = vpop.f32.mrf.mxu0
    %v596 = vadd.f32 %v557, %v595
    %v597 = vand.u32 %v193, 4294901760
    %598 = vmatmul.f32.gmra.mxu0 %v597
    %v599 = vpop.f32.mrf.mxu0
    %v600 = vadd.f32 %v563, %v599
    %601 = vdwg.mxu0
    %602 = vmatpush.msra.mxu0 0.0
    %603 = vmatpush.msra.mxu0 0.0
    %604 = vmatpush.msra.mxu0 0.0
    %605 = vmatpush.msra.mxu0 0.0
    %606 = vmatpush.msra.mxu0 0.0
    %607 = vmatpush.msra.mxu0 0.0
    %608 = vmatpush.msra.mxu0 0.0
    %609 = vmatpush.msra.mxu0 0.0
    %610 = vmatpush.msra.mxu0 0.0
    %611 = vmatpush.msra.mxu0 0.0
    %612 = vmatpush.msra.mxu0 0.0
    %613 = vmatpush.msra.mxu0 0.0
    %v614 = vand.u32 %v414, 4294901760
    %615 = vmatpush.msra.mxu0 %v614
    %v616 = vand.u32 %v413, 4294901760
    %617 = vmatpush.msra.mxu0 %v616
    %v618 = vand.u32 %v412, 4294901760
    %619 = vmatpush.msra.mxu0 %v618
    %v620 = vand.u32 %v411, 4294901760
    %621 = vmatpush.msra.mxu0 %v620
    %v622 = vand.u32 %v190, 4294901760
    %623 = vmatmul.f32.gmra.mxu0 %v622
    %v624 = vpop.f32.mrf.mxu0
    %v625 = vadd.f32 %v596, %v624
    %v626 = vand.u32 %v193, 4294901760
    %627 = vmatmul.f32.gmra.mxu0 %v626
    %v628 = vpop.f32.mrf.mxu0
    %v629 = vadd.f32 %v600, %v628
    %630 = vdwg.mxu0
    %v631 = vld [vmem:[#allocation10] sm:$0xff]
    %v632 = vld [vmem:[#allocation10 + $0x8] sm:$0xff]
    %v633 = vld [vmem:[#allocation10 + $0x10] sm:$0xff]
    %v634 = vld [vmem:[#allocation10 + $0x18] sm:$0xff]
    %635 = vmatpush.msra.mxu0 0.0
    %636 = vmatpush.msra.mxu0 0.0
    %637 = vmatpush.msra.mxu0 0.0
    %638 = vmatpush.msra.mxu0 0.0
    %639 = vmatpush.msra.mxu0 0.0
    %640 = vmatpush.msra.mxu0 0.0
    %641 = vmatpush.msra.mxu0 0.0
    %642 = vmatpush.msra.mxu0 0.0
    %643 = vmatpush.msra.mxu0 0.0
    %644 = vmatpush.msra.mxu0 0.0
    %645 = vmatpush.msra.mxu0 0.0
    %646 = vmatpush.msra.mxu0 0.0
    %v647 = vand.u32 %v634, 4294901760
    %648 = vmatpush.msra.mxu0 %v647
    %v649 = vand.u32 %v633, 4294901760
    %650 = vmatpush.msra.mxu0 %v649
    %v651 = vand.u32 %v632, 4294901760
    %652 = vmatpush.msra.mxu0 %v651
    %v653 = vand.u32 %v631, 4294901760
    %654 = vmatpush.msra.mxu0 %v653
    %v655 = vand.u32 %v190, 4294901760
    %v656 = vsub.f32 %v190, %v655
    %v657 = vand.u32 %v656, 4294901760
    %v658 = vsub.f32 %v656, %v657
    %v659 = vand.u32 %v658, 4294901760
    %660 = vmatmul.f32.gmra.mxu0 %v659
    %v661 = vpop.f32.mrf.mxu0
    %v662 = vadd.f32 0.0, %v661
    %v663 = vand.u32 %v193, 4294901760
    %v664 = vsub.f32 %v193, %v663
    %v665 = vand.u32 %v664, 4294901760
    %v666 = vsub.f32 %v664, %v665
    %v667 = vand.u32 %v666, 4294901760
    %668 = vmatmul.f32.gmra.mxu0 %v667
    %v669 = vpop.f32.mrf.mxu0
    %v670 = vadd.f32 0.0, %v669
    %671 = vdwg.mxu0
    %672 = vmatpush.msra.mxu0 0.0
    %673 = vmatpush.msra.mxu0 0.0
    %674 = vmatpush.msra.mxu0 0.0
    %675 = vmatpush.msra.mxu0 0.0
    %676 = vmatpush.msra.mxu0 0.0
    %677 = vmatpush.msra.mxu0 0.0
    %678 = vmatpush.msra.mxu0 0.0
    %679 = vmatpush.msra.mxu0 0.0
    %680 = vmatpush.msra.mxu0 0.0
    %681 = vmatpush.msra.mxu0 0.0
    %682 = vmatpush.msra.mxu0 0.0
    %683 = vmatpush.msra.mxu0 0.0
    %v684 = vand.u32 %v634, 4294901760
    %v685 = vsub.f32 %v634, %v684
    %v686 = vand.u32 %v685, 4294901760
    %v687 = vsub.f32 %v685, %v686
    %v688 = vand.u32 %v687, 4294901760
    %689 = vmatpush.msra.mxu0 %v688
    %v690 = vand.u32 %v633, 4294901760
    %v691 = vsub.f32 %v633, %v690
    %v692 = vand.u32 %v691, 4294901760
    %v693 = vsub.f32 %v691, %v692
    %v694 = vand.u32 %v693, 4294901760
    %695 = vmatpush.msra.mxu0 %v694
    %v696 = vand.u32 %v632, 4294901760
    %v697 = vsub.f32 %v632, %v696
    %v698 = vand.u32 %v697, 4294901760
    %v699 = vsub.f32 %v697, %v698
    %v700 = vand.u32 %v699, 4294901760
    %701 = vmatpush.msra.mxu0 %v700
    %v702 = vand.u32 %v631, 4294901760
    %v703 = vsub.f32 %v631, %v702
    %v704 = vand.u32 %v703, 4294901760
    %v705 = vsub.f32 %v703, %v704
    %v706 = vand.u32 %v705, 4294901760
    %707 = vmatpush.msra.mxu0 %v706
    %v708 = vand.u32 %v190, 4294901760
    %709 = vmatmul.f32.gmra.mxu0 %v708
    %v710 = vpop.f32.mrf.mxu0
    %v711 = vadd.f32 %v662, %v710
    %v712 = vand.u32 %v193, 4294901760
    %713 = vmatmul.f32.gmra.mxu0 %v712
    %v714 = vpop.f32.mrf.mxu0
    %v715 = vadd.f32 %v670, %v714
    %716 = vdwg.mxu0
    %717 = vmatpush.msra.mxu0 0.0
    %718 = vmatpush.msra.mxu0 0.0
    %719 = vmatpush.msra.mxu0 0.0
    %720 = vmatpush.msra.mxu0 0.0
    %721 = vmatpush.msra.mxu0 0.0
    %722 = vmatpush.msra.mxu0 0.0
    %723 = vmatpush.msra.mxu0 0.0
    %724 = vmatpush.msra.mxu0 0.0
    %725 = vmatpush.msra.mxu0 0.0
    %726 = vmatpush.msra.mxu0 0.0
    %727 = vmatpush.msra.mxu0 0.0
    %728 = vmatpush.msra.mxu0 0.0
    %v729 = vand.u32 %v634, 4294901760
    %v730 = vsub.f32 %v634, %v729
    %731 = vmatpush.msra.mxu0 %v730
    %v732 = vand.u32 %v633, 4294901760
    %v733 = vsub.f32 %v633, %v732
    %734 = vmatpush.msra.mxu0 %v733
    %v735 = vand.u32 %v632, 4294901760
    %v736 = vsub.f32 %v632, %v735
    %737 = vmatpush.msra.mxu0 %v736
    %v738 = vand.u32 %v631, 4294901760
    %v739 = vsub.f32 %v631, %v738
    %740 = vmatpush.msra.mxu0 %v739
    %v741 = vand.u32 %v190, 4294901760
    %v742 = vsub.f32 %v190, %v741
    %743 = vmatmul.f32.gmra.mxu0 %v742
    %v744 = vpop.f32.mrf.mxu0
    %v745 = vadd.f32 %v711, %v744
    %v746 = vand.u32 %v193, 4294901760
    %v747 = vsub.f32 %v193, %v746
    %748 = vmatmul.f32.gmra.mxu0 %v747
    %v749 = vpop.f32.mrf.mxu0
    %v750 = vadd.f32 %v715, %v749
    %751 = vdwg.mxu0
    %752 = vmatpush.msra.mxu0 0.0
    %753 = vmatpush.msra.mxu0 0.0
    %754 = vmatpush.msra.mxu0 0.0
    %755 = vmatpush.msra.mxu0 0.0
    %756 = vmatpush.msra.mxu0 0.0
    %757 = vmatpush.msra.mxu0 0.0
    %758 = vmatpush.msra.mxu0 0.0
    %759 = vmatpush.msra.mxu0 0.0
    %760 = vmatpush.msra.mxu0 0.0
    %761 = vmatpush.msra.mxu0 0.0
    %762 = vmatpush.msra.mxu0 0.0
    %763 = vmatpush.msra.mxu0 0.0
    %v764 = vand.u32 %v634, 4294901760
    %765 = vmatpush.msra.mxu0 %v764
    %v766 = vand.u32 %v633, 4294901760
    %767 = vmatpush.msra.mxu0 %v766
    %v768 = vand.u32 %v632, 4294901760
    %769 = vmatpush.msra.mxu0 %v768
    %v770 = vand.u32 %v631, 4294901760
    %771 = vmatpush.msra.mxu0 %v770
    %v772 = vand.u32 %v190, 4294901760
    %v773 = vsub.f32 %v190, %v772
    %v774 = vand.u32 %v773, 4294901760
    %775 = vmatmul.f32.gmra.mxu0 %v774
    %v776 = vpop.f32.mrf.mxu0
    %v777 = vadd.f32 %v745, %v776
    %v778 = vand.u32 %v193, 4294901760
    %v779 = vsub.f32 %v193, %v778
    %v780 = vand.u32 %v779, 4294901760
    %781 = vmatmul.f32.gmra.mxu0 %v780
    %v782 = vpop.f32.mrf.mxu0
    %v783 = vadd.f32 %v750, %v782
    %784 = vdwg.mxu0
    %785 = vmatpush.msra.mxu0 0.0
    %786 = vmatpush.msra.mxu0 0.0
    %787 = vmatpush.msra.mxu0 0.0
    %788 = vmatpush.msra.mxu0 0.0
    %789 = vmatpush.msra.mxu0 0.0
    %790 = vmatpush.msra.mxu0 0.0
    %791 = vmatpush.msra.mxu0 0.0
    %792 = vmatpush.msra.mxu0 0.0
    %793 = vmatpush.msra.mxu0 0.0
    %794 = vmatpush.msra.mxu0 0.0
    %795 = vmatpush.msra.mxu0 0.0
    %796 = vmatpush.msra.mxu0 0.0
    %v797 = vand.u32 %v634, 4294901760
    %v798 = vsub.f32 %v634, %v797
    %v799 = vand.u32 %v798, 4294901760
    %800 = vmatpush.msra.mxu0 %v799
    %v801 = vand.u32 %v633, 4294901760
    %v802 = vsub.f32 %v633, %v801
    %v803 = vand.u32 %v802, 4294901760
    %804 = vmatpush.msra.mxu0 %v803
    %v805 = vand.u32 %v632, 4294901760
    %v806 = vsub.f32 %v632, %v805
    %v807 = vand.u32 %v806, 4294901760
    %808 = vmatpush.msra.mxu0 %v807
    %v809 = vand.u32 %v631, 4294901760
    %v810 = vsub.f32 %v631, %v809
    %v811 = vand.u32 %v810, 4294901760
    %812 = vmatpush.msra.mxu0 %v811
    %v813 = vand.u32 %v190, 4294901760
    %814 = vmatmul.f32.gmra.mxu0 %v813
    %v815 = vpop.f32.mrf.mxu0
    %v816 = vadd.f32 %v777, %v815
    %v817 = vand.u32 %v193, 4294901760
    %818 = vmatmul.f32.gmra.mxu0 %v817
    %v819 = vpop.f32.mrf.mxu0
    %v820 = vadd.f32 %v783, %v819
    %821 = vdwg.mxu0
    %822 = vmatpush.msra.mxu0 0.0
    %823 = vmatpush.msra.mxu0 0.0
    %824 = vmatpush.msra.mxu0 0.0
    %825 = vmatpush.msra.mxu0 0.0
    %826 = vmatpush.msra.mxu0 0.0
    %827 = vmatpush.msra.mxu0 0.0
    %828 = vmatpush.msra.mxu0 0.0
    %829 = vmatpush.msra.mxu0 0.0
    %830 = vmatpush.msra.mxu0 0.0
    %831 = vmatpush.msra.mxu0 0.0
    %832 = vmatpush.msra.mxu0 0.0
    %833 = vmatpush.msra.mxu0 0.0
    %v834 = vand.u32 %v634, 4294901760
    %835 = vmatpush.msra.mxu0 %v834
    %v836 = vand.u32 %v633, 4294901760
    %837 = vmatpush.msra.mxu0 %v836
    %v838 = vand.u32 %v632, 4294901760
    %839 = vmatpush.msra.mxu0 %v838
    %v840 = vand.u32 %v631, 4294901760
    %841 = vmatpush.msra.mxu0 %v840
    %v842 = vand.u32 %v190, 4294901760
    %843 = vmatmul.f32.gmra.mxu0 %v842
    %v844 = vpop.f32.mrf.mxu0
    %v845 = vadd.f32 %v816, %v844
    %v846 = vand.u32 %v193, 4294901760
    %847 = vmatmul.f32.gmra.mxu0 %v846
    %v848 = vpop.f32.mrf.mxu0
    %v849 = vadd.f32 %v820, %v848
    %850 = vdwg.mxu0
    %v851 = vmul.f32 %v405, 0.17677669
    %v852 = vmul.f32 %v409, 0.17677669
    %s853 = scalar_lea.vmem [#allocation7], 32
    %v854 = vld [vmem:[%s853] sm:$0xff]
    %v855 = vld [vmem:[%s853 + $0x8] sm:$0xff]
    %v856 = vld [vmem:[%s853 + $0x10] sm:$0xff]
    %v857 = vld [vmem:[%s853 + $0x18] sm:$0xff]
    %858 = vmatpush.msra.mxu0 0.0
    %859 = vmatpush.msra.mxu0 0.0
    %860 = vmatpush.msra.mxu0 0.0
    %861 = vmatpush.msra.mxu0 0.0
    %862 = vmatpush.msra.mxu0 0.0
    %863 = vmatpush.msra.mxu0 0.0
    %864 = vmatpush.msra.mxu0 0.0
    %865 = vmatpush.msra.mxu0 0.0
    %866 = vmatpush.msra.mxu0 0.0
    %867 = vmatpush.msra.mxu0 0.0
    %868 = vmatpush.msra.mxu0 0.0
    %869 = vmatpush.msra.mxu0 0.0
    %v870 = vand.u32 %v857, 4294901760
    %871 = vmatpush.msra.mxu0 %v870
    %v872 = vand.u32 %v856, 4294901760
    %873 = vmatpush.msra.mxu0 %v872
    %v874 = vand.u32 %v855, 4294901760
    %875 = vmatpush.msra.mxu0 %v874
    %v876 = vand.u32 %v854, 4294901760
    %877 = vmatpush.msra.mxu0 %v876
    %v878 = vand.u32 %v190, 4294901760
    %v879 = vsub.f32 %v190, %v878
    %v880 = vand.u32 %v879, 4294901760
    %v881 = vsub.f32 %v879, %v880
    %v882 = vand.u32 %v881, 4294901760
    %883 = vmatmul.f32.gmra.mxu0 %v882
    %v884 = vpop.f32.mrf.mxu0
    %v885 = vadd.f32 0.0, %v884
    %v886 = vand.u32 %v193, 4294901760
    %v887 = vsub.f32 %v193, %v886
    %v888 = vand.u32 %v887, 4294901760
    %v889 = vsub.f32 %v887, %v888
    %v890 = vand.u32 %v889, 4294901760
    %891 = vmatmul.f32.gmra.mxu0 %v890
    %v892 = vpop.f32.mrf.mxu0
    %v893 = vadd.f32 0.0, %v892
    %894 = vdwg.mxu0
    %895 = vmatpush.msra.mxu0 0.0
    %896 = vmatpush.msra.mxu0 0.0
    %897 = vmatpush.msra.mxu0 0.0
    %898 = vmatpush.msra.mxu0 0.0
    %899 = vmatpush.msra.mxu0 0.0
    %900 = vmatpush.msra.mxu0 0.0
    %901 = vmatpush.msra.mxu0 0.0
    %902 = vmatpush.msra.mxu0 0.0
    %903 = vmatpush.msra.mxu0 0.0
    %904 = vmatpush.msra.mxu0 0.0
    %905 = vmatpush.msra.mxu0 0.0
    %906 = vmatpush.msra.mxu0 0.0
    %v907 = vand.u32 %v857, 4294901760
    %v908 = vsub.f32 %v857, %v907
    %v909 = vand.u32 %v908, 4294901760
    %v910 = vsub.f32 %v908, %v909
    %v911 = vand.u32 %v910, 4294901760
    %912 = vmatpush.msra.mxu0 %v911
    %v913 = vand.u32 %v856, 4294901760
    %v914 = vsub.f32 %v856, %v913
    %v915 = vand.u32 %v914, 4294901760
    %v916 = vsub.f32 %v914, %v915
    %v917 = vand.u32 %v916, 4294901760
    %918 = vmatpush.msra.mxu0 %v917
    %v919 = vand.u32 %v855, 4294901760
    %v920 = vsub.f32 %v855, %v919
    %v921 = vand.u32 %v920, 4294901760
    %v922 = vsub.f32 %v920, %v921
    %v923 = vand.u32 %v922, 4294901760
    %924 = vmatpush.msra.mxu0 %v923
    %v925 = vand.u32 %v854, 4294901760
    %v926 = vsub.f32 %v854, %v925
    %v927 = vand.u32 %v926, 4294901760
    %v928 = vsub.f32 %v926, %v927
    %v929 = vand.u32 %v928, 4294901760
    %930 = vmatpush.msra.mxu0 %v929
    %v931 = vand.u32 %v190, 4294901760
    %932 = vmatmul.f32.gmra.mxu0 %v931
    %v933 = vpop.f32.mrf.mxu0
    %v934 = vadd.f32 %v885, %v933
    %v935 = vand.u32 %v193, 4294901760
    %936 = vmatmul.f32.gmra.mxu0 %v935
    %v937 = vpop.f32.mrf.mxu0
    %v938 = vadd.f32 %v893, %v937
    %939 = vdwg.mxu0
    %940 = vmatpush.msra.mxu0 0.0
    %941 = vmatpush.msra.mxu0 0.0
    %942 = vmatpush.msra.mxu0 0.0
    %943 = vmatpush.msra.mxu0 0.0
    %944 = vmatpush.msra.mxu0 0.0
    %945 = vmatpush.msra.mxu0 0.0
    %946 = vmatpush.msra.mxu0 0.0
    %947 = vmatpush.msra.mxu0 0.0
    %948 = vmatpush.msra.mxu0 0.0
    %949 = vmatpush.msra.mxu0 0.0
    %950 = vmatpush.msra.mxu0 0.0
    %951 = vmatpush.msra.mxu0 0.0
    %v952 = vand.u32 %v857, 4294901760
    %v953 = vsub.f32 %v857, %v952
    %954 = vmatpush.msra.mxu0 %v953
    %v955 = vand.u32 %v856, 4294901760
    %v956 = vsub.f32 %v856, %v955
    %957 = vmatpush.msra.mxu0 %v956
    %v958 = vand.u32 %v855, 4294901760
    %v959 = vsub.f32 %v855, %v958
    %960 = vmatpush.msra.mxu0 %v959
    %v961 = vand.u32 %v854, 4294901760
    %v962 = vsub.f32 %v854, %v961
    %963 = vmatpush.msra.mxu0 %v962
    %v964 = vand.u32 %v190, 4294901760
    %v965 = vsub.f32 %v190, %v964
    %966 = vmatmul.f32.gmra.mxu0 %v965
    %v967 = vpop.f32.mrf.mxu0
    %v968 = vadd.f32 %v934, %v967
    %v969 = vand.u32 %v193, 4294901760
    %v970 = vsub.f32 %v193, %v969
    %971 = vmatmul.f32.gmra.mxu0 %v970
    %v972 = vpop.f32.mrf.mxu0
    %v973 = vadd.f32 %v938, %v972
    %974 = vdwg.mxu0
    %975 = vmatpush.msra.mxu0 0.0
    %976 = vmatpush.msra.mxu0 0.0
    %977 = vmatpush.msra.mxu0 0.0
    %978 = vmatpush.msra.mxu0 0.0
    %979 = vmatpush.msra.mxu0 0.0
    %980 = vmatpush.msra.mxu0 0.0
    %981 = vmatpush.msra.mxu0 0.0
    %982 = vmatpush.msra.mxu0 0.0
    %983 = vmatpush.msra.mxu0 0.0
    %984 = vmatpush.msra.mxu0 0.0
    %985 = vmatpush.msra.mxu0 0.0
    %986 = vmatpush.msra.mxu0 0.0
    %v987 = vand.u32 %v857, 4294901760
    %988 = vmatpush.msra.mxu0 %v987
    %v989 = vand.u32 %v856, 4294901760
    %990 = vmatpush.msra.mxu0 %v989
    %v991 = vand.u32 %v855, 4294901760
    %992 = vmatpush.msra.mxu0 %v991
    %v993 = vand.u32 %v854, 4294901760
    %994 = vmatpush.msra.mxu0 %v993
    %v995 = vand.u32 %v190, 4294901760
    %v996 = vsub.f32 %v190, %v995
    %v997 = vand.u32 %v996, 4294901760
    %998 = vmatmul.f32.gmra.mxu0 %v997
    %v999 = vpop.f32.mrf.mxu0
    %v1000 = vadd.f32 %v968, %v999
    %v1001 = vand.u32 %v193, 4294901760
    %v1002 = vsub.f32 %v193, %v1001
    %v1003 = vand.u32 %v1002, 4294901760
    %1004 = vmatmul.f32.gmra.mxu0 %v1003
    %v1005 = vpop.f32.mrf.mxu0
    %v1006 = vadd.f32 %v973, %v1005
    %1007 = vdwg.mxu0
    %1008 = vmatpush.msra.mxu0 0.0
    %1009 = vmatpush.msra.mxu0 0.0
    %1010 = vmatpush.msra.mxu0 0.0
    %1011 = vmatpush.msra.mxu0 0.0
    %1012 = vmatpush.msra.mxu0 0.0
    %1013 = vmatpush.msra.mxu0 0.0
    %1014 = vmatpush.msra.mxu0 0.0
    %1015 = vmatpush.msra.mxu0 0.0
    %1016 = vmatpush.msra.mxu0 0.0
    %1017 = vmatpush.msra.mxu0 0.0
    %1018 = vmatpush.msra.mxu0 0.0
    %1019 = vmatpush.msra.mxu0 0.0
    %v1020 = vand.u32 %v857, 4294901760
    %v1021 = vsub.f32 %v857, %v1020
    %v1022 = vand.u32 %v1021, 4294901760
    %1023 = vmatpush.msra.mxu0 %v1022
    %v1024 = vand.u32 %v856, 4294901760
    %v1025 = vsub.f32 %v856, %v1024
    %v1026 = vand.u32 %v1025, 4294901760
    %1027 = vmatpush.msra.mxu0 %v1026
    %v1028 = vand.u32 %v855, 4294901760
    %v1029 = vsub.f32 %v855, %v1028
    %v1030 = vand.u32 %v1029, 4294901760
    %1031 = vmatpush.msra.mxu0 %v1030
    %v1032 = vand.u32 %v854, 4294901760
    %v1033 = vsub.f32 %v854, %v1032
    %v1034 = vand.u32 %v1033, 4294901760
    %1035 = vmatpush.msra.mxu0 %v1034
    %v1036 = vand.u32 %v190, 4294901760
    %1037 = vmatmul.f32.gmra.mxu0 %v1036
    %v1038 = vpop.f32.mrf.mxu0
    %v1039 = vadd.f32 %v1000, %v1038
    %v1040 = vand.u32 %v193, 4294901760
    %1041 = vmatmul.f32.gmra.mxu0 %v1040
    %v1042 = vpop.f32.mrf.mxu0
    %v1043 = vadd.f32 %v1006, %v1042
    %1044 = vdwg.mxu0
    %1045 = vmatpush.msra.mxu0 0.0
    %1046 = vmatpush.msra.mxu0 0.0
    %1047 = vmatpush.msra.mxu0 0.0
    %1048 = vmatpush.msra.mxu0 0.0
    %1049 = vmatpush.msra.mxu0 0.0
    %1050 = vmatpush.msra.mxu0 0.0
    %1051 = vmatpush.msra.mxu0 0.0
    %1052 = vmatpush.msra.mxu0 0.0
    %1053 = vmatpush.msra.mxu0 0.0
    %1054 = vmatpush.msra.mxu0 0.0
    %1055 = vmatpush.msra.mxu0 0.0
    %1056 = vmatpush.msra.mxu0 0.0
    %v1057 = vand.u32 %v857, 4294901760
    %1058 = vmatpush.msra.mxu0 %v1057
    %v1059 = vand.u32 %v856, 4294901760
    %1060 = vmatpush.msra.mxu0 %v1059
    %v1061 = vand.u32 %v855, 4294901760
    %1062 = vmatpush.msra.mxu0 %v1061
    %v1063 = vand.u32 %v854, 4294901760
    %1064 = vmatpush.msra.mxu0 %v1063
    %v1065 = vand.u32 %v190, 4294901760
    %1066 = vmatmul.f32.gmra.mxu0 %v1065
    %v1067 = vpop.f32.mrf.mxu0
    %v1068 = vadd.f32 %v1039, %v1067
    %v1069 = vand.u32 %v193, 4294901760
    %1070 = vmatmul.f32.gmra.mxu0 %v1069
    %v1071 = vpop.f32.mrf.mxu0
    %v1072 = vadd.f32 %v1043, %v1071
    %1073 = vdwg.mxu0
    %s1074 = scalar_lea.vmem [#allocation8], 32
    %v1075 = vld [vmem:[%s1074] sm:$0xff]
    %v1076 = vld [vmem:[%s1074 + $0x8] sm:$0xff]
    %v1077 = vld [vmem:[%s1074 + $0x10] sm:$0xff]
    %v1078 = vld [vmem:[%s1074 + $0x18] sm:$0xff]
    %1079 = vmatpush.msra.mxu0 0.0
    %1080 = vmatpush.msra.mxu0 0.0
    %1081 = vmatpush.msra.mxu0 0.0
    %1082 = vmatpush.msra.mxu0 0.0
    %1083 = vmatpush.msra.mxu0 0.0
    %1084 = vmatpush.msra.mxu0 0.0
    %1085 = vmatpush.msra.mxu0 0.0
    %1086 = vmatpush.msra.mxu0 0.0
    %1087 = vmatpush.msra.mxu0 0.0
    %1088 = vmatpush.msra.mxu0 0.0
    %1089 = vmatpush.msra.mxu0 0.0
    %1090 = vmatpush.msra.mxu0 0.0
    %v1091 = vand.u32 %v1078, 4294901760
    %1092 = vmatpush.msra.mxu0 %v1091
    %v1093 = vand.u32 %v1077, 4294901760
    %1094 = vmatpush.msra.mxu0 %v1093
    %v1095 = vand.u32 %v1076, 4294901760
    %1096 = vmatpush.msra.mxu0 %v1095
    %v1097 = vand.u32 %v1075, 4294901760
    %1098 = vmatpush.msra.mxu0 %v1097
    %v1099 = vand.u32 %v190, 4294901760
    %v1100 = vsub.f32 %v190, %v1099
    %v1101 = vand.u32 %v1100, 4294901760
    %v1102 = vsub.f32 %v1100, %v1101
    %v1103 = vand.u32 %v1102, 4294901760
    %1104 = vmatmul.f32.gmra.mxu0 %v1103
    %v1105 = vpop.f32.mrf.mxu0
    %v1106 = vadd.f32 0.0, %v1105
    %v1107 = vand.u32 %v193, 4294901760
    %v1108 = vsub.f32 %v193, %v1107
    %v1109 = vand.u32 %v1108, 4294901760
    %v1110 = vsub.f32 %v1108, %v1109
    %v1111 = vand.u32 %v1110, 4294901760
    %1112 = vmatmul.f32.gmra.mxu0 %v1111
    %v1113 = vpop.f32.mrf.mxu0
    %v1114 = vadd.f32 0.0, %v1113
    %1115 = vdwg.mxu0
    %1116 = vmatpush.msra.mxu0 0.0
    %1117 = vmatpush.msra.mxu0 0.0
    %1118 = vmatpush.msra.mxu0 0.0
    %1119 = vmatpush.msra.mxu0 0.0
    %1120 = vmatpush.msra.mxu0 0.0
    %1121 = vmatpush.msra.mxu0 0.0
    %1122 = vmatpush.msra.mxu0 0.0
    %1123 = vmatpush.msra.mxu0 0.0
    %1124 = vmatpush.msra.mxu0 0.0
    %1125 = vmatpush.msra.mxu0 0.0
    %1126 = vmatpush.msra.mxu0 0.0
    %1127 = vmatpush.msra.mxu0 0.0
    %v1128 = vand.u32 %v1078, 4294901760
    %v1129 = vsub.f32 %v1078, %v1128
    %v1130 = vand.u32 %v1129, 4294901760
    %v1131 = vsub.f32 %v1129, %v1130
    %v1132 = vand.u32 %v1131, 4294901760
    %1133 = vmatpush.msra.mxu0 %v1132
    %v1134 = vand.u32 %v1077, 4294901760
    %v1135 = vsub.f32 %v1077, %v1134
    %v1136 = vand.u32 %v1135, 4294901760
    %v1137 = vsub.f32 %v1135, %v1136
    %v1138 = vand.u32 %v1137, 4294901760
    %1139 = vmatpush.msra.mxu0 %v1138
    %v1140 = vand.u32 %v1076, 4294901760
    %v1141 = vsub.f32 %v1076, %v1140
    %v1142 = vand.u32 %v1141, 4294901760
    %v1143 = vsub.f32 %v1141, %v1142
    %v1144 = vand.u32 %v1143, 4294901760
    %1145 = vmatpush.msra.mxu0 %v1144
    %v1146 = vand.u32 %v1075, 4294901760
    %v1147 = vsub.f32 %v1075, %v1146
    %v1148 = vand.u32 %v1147, 4294901760
    %v1149 = vsub.f32 %v1147, %v1148
    %v1150 = vand.u32 %v1149, 4294901760
    %1151 = vmatpush.msra.mxu0 %v1150
    %v1152 = vand.u32 %v190, 4294901760
    %1153 = vmatmul.f32.gmra.mxu0 %v1152
    %v1154 = vpop.f32.mrf.mxu0
    %v1155 = vadd.f32 %v1106, %v1154
    %v1156 = vand.u32 %v193, 4294901760
    %1157 = vmatmul.f32.gmra.mxu0 %v1156
    %v1158 = vpop.f32.mrf.mxu0
    %v1159 = vadd.f32 %v1114, %v1158
    %1160 = vdwg.mxu0
    %1161 = vmatpush.msra.mxu0 0.0
    %1162 = vmatpush.msra.mxu0 0.0
    %1163 = vmatpush.msra.mxu0 0.0
    %1164 = vmatpush.msra.mxu0 0.0
    %1165 = vmatpush.msra.mxu0 0.0
    %1166 = vmatpush.msra.mxu0 0.0
    %1167 = vmatpush.msra.mxu0 0.0
    %1168 = vmatpush.msra.mxu0 0.0
    %1169 = vmatpush.msra.mxu0 0.0
    %1170 = vmatpush.msra.mxu0 0.0
    %1171 = vmatpush.msra.mxu0 0.0
    %1172 = vmatpush.msra.mxu0 0.0
    %v1173 = vand.u32 %v1078, 4294901760
    %v1174 = vsub.f32 %v1078, %v1173
    %1175 = vmatpush.msra.mxu0 %v1174
    %v1176 = vand.u32 %v1077, 4294901760
    %v1177 = vsub.f32 %v1077, %v1176
    %1178 = vmatpush.msra.mxu0 %v1177
    %v1179 = vand.u32 %v1076, 4294901760
    %v1180 = vsub.f32 %v1076, %v1179
    %1181 = vmatpush.msra.mxu0 %v1180
    %v1182 = vand.u32 %v1075, 4294901760
    %v1183 = vsub.f32 %v1075, %v1182
    %1184 = vmatpush.msra.mxu0 %v1183
    %v1185 = vand.u32 %v190, 4294901760
    %v1186 = vsub.f32 %v190, %v1185
    %1187 = vmatmul.f32.gmra.mxu0 %v1186
    %v1188 = vpop.f32.mrf.mxu0
    %v1189 = vadd.f32 %v1155, %v1188
    %v1190 = vand.u32 %v193, 4294901760
    %v1191 = vsub.f32 %v193, %v1190
    %1192 = vmatmul.f32.gmra.mxu0 %v1191
    %v1193 = vpop.f32.mrf.mxu0
    %v1194 = vadd.f32 %v1159, %v1193
    %1195 = vdwg.mxu0
    %1196 = vmatpush.msra.mxu0 0.0
    %1197 = vmatpush.msra.mxu0 0.0
    %1198 = vmatpush.msra.mxu0 0.0
    %1199 = vmatpush.msra.mxu0 0.0
    %1200 = vmatpush.msra.mxu0 0.0
    %1201 = vmatpush.msra.mxu0 0.0
    %1202 = vmatpush.msra.mxu0 0.0
    %1203 = vmatpush.msra.mxu0 0.0
    %1204 = vmatpush.msra.mxu0 0.0
    %1205 = vmatpush.msra.mxu0 0.0
    %1206 = vmatpush.msra.mxu0 0.0
    %1207 = vmatpush.msra.mxu0 0.0
    %v1208 = vand.u32 %v1078, 4294901760
    %1209 = vmatpush.msra.mxu0 %v1208
    %v1210 = vand.u32 %v1077, 4294901760
    %1211 = vmatpush.msra.mxu0 %v1210
    %v1212 = vand.u32 %v1076, 4294901760
    %1213 = vmatpush.msra.mxu0 %v1212
    %v1214 = vand.u32 %v1075, 4294901760
    %1215 = vmatpush.msra.mxu0 %v1214
    %v1216 = vand.u32 %v190, 4294901760
    %v1217 = vsub.f32 %v190, %v1216
    %v1218 = vand.u32 %v1217, 4294901760
    %1219 = vmatmul.f32.gmra.mxu0 %v1218
    %v1220 = vpop.f32.mrf.mxu0
    %v1221 = vadd.f32 %v1189, %v1220
    %v1222 = vand.u32 %v193, 4294901760
    %v1223 = vsub.f32 %v193, %v1222
    %v1224 = vand.u32 %v1223, 4294901760
    %1225 = vmatmul.f32.gmra.mxu0 %v1224
    %v1226 = vpop.f32.mrf.mxu0
    %v1227 = vadd.f32 %v1194, %v1226
    %1228 = vdwg.mxu0
    %1229 = vmatpush.msra.mxu0 0.0
    %1230 = vmatpush.msra.mxu0 0.0
    %1231 = vmatpush.msra.mxu0 0.0
    %1232 = vmatpush.msra.mxu0 0.0
    %1233 = vmatpush.msra.mxu0 0.0
    %1234 = vmatpush.msra.mxu0 0.0
    %1235 = vmatpush.msra.mxu0 0.0
    %1236 = vmatpush.msra.mxu0 0.0
    %1237 = vmatpush.msra.mxu0 0.0
    %1238 = vmatpush.msra.mxu0 0.0
    %1239 = vmatpush.msra.mxu0 0.0
    %1240 = vmatpush.msra.mxu0 0.0
    %v1241 = vand.u32 %v1078, 4294901760
    %v1242 = vsub.f32 %v1078, %v1241
    %v1243 = vand.u32 %v1242, 4294901760
    %1244 = vmatpush.msra.mxu0 %v1243
    %v1245 = vand.u32 %v1077, 4294901760
    %v1246 = vsub.f32 %v1077, %v1245
    %v1247 = vand.u32 %v1246, 4294901760
    %1248 = vmatpush.msra.mxu0 %v1247
    %v1249 = vand.u32 %v1076, 4294901760
    %v1250 = vsub.f32 %v1076, %v1249
    %v1251 = vand.u32 %v1250, 4294901760
    %1252 = vmatpush.msra.mxu0 %v1251
    %v1253 = vand.u32 %v1075, 4294901760
    %v1254 = vsub.f32 %v1075, %v1253
    %v1255 = vand.u32 %v1254, 4294901760
    %1256 = vmatpush.msra.mxu0 %v1255
    %v1257 = vand.u32 %v190, 4294901760
    %1258 = vmatmul.f32.gmra.mxu0 %v1257
    %v1259 = vpop.f32.mrf.mxu0
    %v1260 = vadd.f32 %v1221, %v1259
    %v1261 = vand.u32 %v193, 4294901760
    %1262 = vmatmul.f32.gmra.mxu0 %v1261
    %v1263 = vpop.f32.mrf.mxu0
    %v1264 = vadd.f32 %v1227, %v1263
    %1265 = vdwg.mxu0
    %1266 = vmatpush.msra.mxu0 0.0
    %1267 = vmatpush.msra.mxu0 0.0
    %1268 = vmatpush.msra.mxu0 0.0
    %1269 = vmatpush.msra.mxu0 0.0
    %1270 = vmatpush.msra.mxu0 0.0
    %1271 = vmatpush.msra.mxu0 0.0
    %1272 = vmatpush.msra.mxu0 0.0
    %1273 = vmatpush.msra.mxu0 0.0
    %1274 = vmatpush.msra.mxu0 0.0
    %1275 = vmatpush.msra.mxu0 0.0
    %1276 = vmatpush.msra.mxu0 0.0
    %1277 = vmatpush.msra.mxu0 0.0
    %v1278 = vand.u32 %v1078, 4294901760
    %1279 = vmatpush.msra.mxu0 %v1278
    %v1280 = vand.u32 %v1077, 4294901760
    %1281 = vmatpush.msra.mxu0 %v1280
    %v1282 = vand.u32 %v1076, 4294901760
    %1283 = vmatpush.msra.mxu0 %v1282
    %v1284 = vand.u32 %v1075, 4294901760
    %1285 = vmatpush.msra.mxu0 %v1284
    %v1286 = vand.u32 %v190, 4294901760
    %1287 = vmatmul.f32.gmra.mxu0 %v1286
    %v1288 = vpop.f32.mrf.mxu0
    %v1289 = vadd.f32 %v1260, %v1288
    %v1290 = vand.u32 %v193, 4294901760
    %1291 = vmatmul.f32.gmra.mxu0 %v1290
    %v1292 = vpop.f32.mrf.mxu0
    %v1293 = vadd.f32 %v1264, %v1292
    %1294 = vdwg.mxu0
    %s1295 = scalar_lea.vmem [#allocation10], 32
    %v1296 = vld [vmem:[%s1295] sm:$0xff]
    %v1297 = vld [vmem:[%s1295 + $0x8] sm:$0xff]
    %v1298 = vld [vmem:[%s1295 + $0x10] sm:$0xff]
    %v1299 = vld [vmem:[%s1295 + $0x18] sm:$0xff]
    %1300 = vmatpush.msra.mxu0 0.0
    %1301 = vmatpush.msra.mxu0 0.0
    %1302 = vmatpush.msra.mxu0 0.0
    %1303 = vmatpush.msra.mxu0 0.0
    %1304 = vmatpush.msra.mxu0 0.0
    %1305 = vmatpush.msra.mxu0 0.0
    %1306 = vmatpush.msra.mxu0 0.0
    %1307 = vmatpush.msra.mxu0 0.0
    %1308 = vmatpush.msra.mxu0 0.0
    %1309 = vmatpush.msra.mxu0 0.0
    %1310 = vmatpush.msra.mxu0 0.0
    %1311 = vmatpush.msra.mxu0 0.0
    %v1312 = vand.u32 %v1299, 4294901760
    %1313 = vmatpush.msra.mxu0 %v1312
    %v1314 = vand.u32 %v1298, 4294901760
    %1315 = vmatpush.msra.mxu0 %v1314
    %v1316 = vand.u32 %v1297, 4294901760
    %1317 = vmatpush.msra.mxu0 %v1316
    %v1318 = vand.u32 %v1296, 4294901760
    %1319 = vmatpush.msra.mxu0 %v1318
    %v1320 = vand.u32 %v190, 4294901760
    %v1321 = vsub.f32 %v190, %v1320
    %v1322 = vand.u32 %v1321, 4294901760
    %v1323 = vsub.f32 %v1321, %v1322
    %v1324 = vand.u32 %v1323, 4294901760
    %1325 = vmatmul.f32.gmra.mxu0 %v1324
    %v1326 = vpop.f32.mrf.mxu0
    %v1327 = vadd.f32 0.0, %v1326
    %v1328 = vand.u32 %v193, 4294901760
    %v1329 = vsub.f32 %v193, %v1328
    %v1330 = vand.u32 %v1329, 4294901760
    %v1331 = vsub.f32 %v1329, %v1330
    %v1332 = vand.u32 %v1331, 4294901760
    %1333 = vmatmul.f32.gmra.mxu0 %v1332
    %v1334 = vpop.f32.mrf.mxu0
    %v1335 = vadd.f32 0.0, %v1334
    %1336 = vdwg.mxu0
    %1337 = vmatpush.msra.mxu0 0.0
    %1338 = vmatpush.msra.mxu0 0.0
    %1339 = vmatpush.msra.mxu0 0.0
    %1340 = vmatpush.msra.mxu0 0.0
    %1341 = vmatpush.msra.mxu0 0.0
    %1342 = vmatpush.msra.mxu0 0.0
    %1343 = vmatpush.msra.mxu0 0.0
    %1344 = vmatpush.msra.mxu0 0.0
    %1345 = vmatpush.msra.mxu0 0.0
    %1346 = vmatpush.msra.mxu0 0.0
    %1347 = vmatpush.msra.mxu0 0.0
    %1348 = vmatpush.msra.mxu0 0.0
    %v1349 = vand.u32 %v1299, 4294901760
    %v1350 = vsub.f32 %v1299, %v1349
    %v1351 = vand.u32 %v1350, 4294901760
    %v1352 = vsub.f32 %v1350, %v1351
    %v1353 = vand.u32 %v1352, 4294901760
    %1354 = vmatpush.msra.mxu0 %v1353
    %v1355 = vand.u32 %v1298, 4294901760
    %v1356 = vsub.f32 %v1298, %v1355
    %v1357 = vand.u32 %v1356, 4294901760
    %v1358 = vsub.f32 %v1356, %v1357
    %v1359 = vand.u32 %v1358, 4294901760
    %1360 = vmatpush.msra.mxu0 %v1359
    %v1361 = vand.u32 %v1297, 4294901760
    %v1362 = vsub.f32 %v1297, %v1361
    %v1363 = vand.u32 %v1362, 4294901760
    %v1364 = vsub.f32 %v1362, %v1363
    %v1365 = vand.u32 %v1364, 4294901760
    %1366 = vmatpush.msra.mxu0 %v1365
    %v1367 = vand.u32 %v1296, 4294901760
    %v1368 = vsub.f32 %v1296, %v1367
    %v1369 = vand.u32 %v1368, 4294901760
    %v1370 = vsub.f32 %v1368, %v1369
    %v1371 = vand.u32 %v1370, 4294901760
    %1372 = vmatpush.msra.mxu0 %v1371
    %v1373 = vand.u32 %v190, 4294901760
    %1374 = vmatmul.f32.gmra.mxu0 %v1373
    %v1375 = vpop.f32.mrf.mxu0
    %v1376 = vadd.f32 %v1327, %v1375
    %v1377 = vand.u32 %v193, 4294901760
    %1378 = vmatmul.f32.gmra.mxu0 %v1377
    %v1379 = vpop.f32.mrf.mxu0
    %v1380 = vadd.f32 %v1335, %v1379
    %1381 = vdwg.mxu0
    %1382 = vmatpush.msra.mxu0 0.0
    %1383 = vmatpush.msra.mxu0 0.0
    %1384 = vmatpush.msra.mxu0 0.0
    %1385 = vmatpush.msra.mxu0 0.0
    %1386 = vmatpush.msra.mxu0 0.0
    %1387 = vmatpush.msra.mxu0 0.0
    %1388 = vmatpush.msra.mxu0 0.0
    %1389 = vmatpush.msra.mxu0 0.0
    %1390 = vmatpush.msra.mxu0 0.0
    %1391 = vmatpush.msra.mxu0 0.0
    %1392 = vmatpush.msra.mxu0 0.0
    %1393 = vmatpush.msra.mxu0 0.0
    %v1394 = vand.u32 %v1299, 4294901760
    %v1395 = vsub.f32 %v1299, %v1394
    %1396 = vmatpush.msra.mxu0 %v1395
    %v1397 = vand.u32 %v1298, 4294901760
    %v1398 = vsub.f32 %v1298, %v1397
    %1399 = vmatpush.msra.mxu0 %v1398
    %v1400 = vand.u32 %v1297, 4294901760
    %v1401 = vsub.f32 %v1297, %v1400
    %1402 = vmatpush.msra.mxu0 %v1401
    %v1403 = vand.u32 %v1296, 4294901760
    %v1404 = vsub.f32 %v1296, %v1403
    %1405 = vmatpush.msra.mxu0 %v1404
    %v1406 = vand.u32 %v190, 4294901760
    %v1407 = vsub.f32 %v190, %v1406
    %1408 = vmatmul.f32.gmra.mxu0 %v1407
    %v1409 = vpop.f32.mrf.mxu0
    %v1410 = vadd.f32 %v1376, %v1409
    %v1411 = vand.u32 %v193, 4294901760
    %v1412 = vsub.f32 %v193, %v1411
    %1413 = vmatmul.f32.gmra.mxu0 %v1412
    %v1414 = vpop.f32.mrf.mxu0
    %v1415 = vadd.f32 %v1380, %v1414
    %1416 = vdwg.mxu0
    %1417 = vmatpush.msra.mxu0 0.0
    %1418 = vmatpush.msra.mxu0 0.0
    %1419 = vmatpush.msra.mxu0 0.0
    %1420 = vmatpush.msra.mxu0 0.0
    %1421 = vmatpush.msra.mxu0 0.0
    %1422 = vmatpush.msra.mxu0 0.0
    %1423 = vmatpush.msra.mxu0 0.0
    %1424 = vmatpush.msra.mxu0 0.0
    %1425 = vmatpush.msra.mxu0 0.0
    %1426 = vmatpush.msra.mxu0 0.0
    %1427 = vmatpush.msra.mxu0 0.0
    %1428 = vmatpush.msra.mxu0 0.0
    %v1429 = vand.u32 %v1299, 4294901760
    %1430 = vmatpush.msra.mxu0 %v1429
    %v1431 = vand.u32 %v1298, 4294901760
    %1432 = vmatpush.msra.mxu0 %v1431
    %v1433 = vand.u32 %v1297, 4294901760
    %1434 = vmatpush.msra.mxu0 %v1433
    %v1435 = vand.u32 %v1296, 4294901760
    %1436 = vmatpush.msra.mxu0 %v1435
    %v1437 = vand.u32 %v190, 4294901760
    %v1438 = vsub.f32 %v190, %v1437
    %v1439 = vand.u32 %v1438, 4294901760
    %1440 = vmatmul.f32.gmra.mxu0 %v1439
    %v1441 = vpop.f32.mrf.mxu0
    %v1442 = vadd.f32 %v1410, %v1441
    %v1443 = vand.u32 %v193, 4294901760
    %v1444 = vsub.f32 %v193, %v1443
    %v1445 = vand.u32 %v1444, 4294901760
    %1446 = vmatmul.f32.gmra.mxu0 %v1445
    %v1447 = vpop.f32.mrf.mxu0
    %v1448 = vadd.f32 %v1415, %v1447
    %1449 = vdwg.mxu0
    %1450 = vmatpush.msra.mxu0 0.0
    %1451 = vmatpush.msra.mxu0 0.0
    %1452 = vmatpush.msra.mxu0 0.0
    %1453 = vmatpush.msra.mxu0 0.0
    %1454 = vmatpush.msra.mxu0 0.0
    %1455 = vmatpush.msra.mxu0 0.0
    %1456 = vmatpush.msra.mxu0 0.0
    %1457 = vmatpush.msra.mxu0 0.0
    %1458 = vmatpush.msra.mxu0 0.0
    %1459 = vmatpush.msra.mxu0 0.0
    %1460 = vmatpush.msra.mxu0 0.0
    %1461 = vmatpush.msra.mxu0 0.0
    %v1462 = vand.u32 %v1299, 4294901760
    %v1463 = vsub.f32 %v1299, %v1462
    %v1464 = vand.u32 %v1463, 4294901760
    %1465 = vmatpush.msra.mxu0 %v1464
    %v1466 = vand.u32 %v1298, 4294901760
    %v1467 = vsub.f32 %v1298, %v1466
    %v1468 = vand.u32 %v1467, 4294901760
    %1469 = vmatpush.msra.mxu0 %v1468
    %v1470 = vand.u32 %v1297, 4294901760
    %v1471 = vsub.f32 %v1297, %v1470
    %v1472 = vand.u32 %v1471, 4294901760
    %1473 = vmatpush.msra.mxu0 %v1472
    %v1474 = vand.u32 %v1296, 4294901760
    %v1475 = vsub.f32 %v1296, %v1474
    %v1476 = vand.u32 %v1475, 4294901760
    %1477 = vmatpush.msra.mxu0 %v1476
    %v1478 = vand.u32 %v190, 4294901760
    %1479 = vmatmul.f32.gmra.mxu0 %v1478
    %v1480 = vpop.f32.mrf.mxu0
    %v1481 = vadd.f32 %v1442, %v1480
    %v1482 = vand.u32 %v193, 4294901760
    %1483 = vmatmul.f32.gmra.mxu0 %v1482
    %v1484 = vpop.f32.mrf.mxu0
    %v1485 = vadd.f32 %v1448, %v1484
    %1486 = vdwg.mxu0
    %1487 = vmatpush.msra.mxu0 0.0
    %1488 = vmatpush.msra.mxu0 0.0
    %1489 = vmatpush.msra.mxu0 0.0
    %1490 = vmatpush.msra.mxu0 0.0
    %1491 = vmatpush.msra.mxu0 0.0
    %1492 = vmatpush.msra.mxu0 0.0
    %1493 = vmatpush.msra.mxu0 0.0
    %1494 = vmatpush.msra.mxu0 0.0
    %1495 = vmatpush.msra.mxu0 0.0
    %1496 = vmatpush.msra.mxu0 0.0
    %1497 = vmatpush.msra.mxu0 0.0
    %1498 = vmatpush.msra.mxu0 0.0
    %v1499 = vand.u32 %v1299, 4294901760
    %1500 = vmatpush.msra.mxu0 %v1499
    %v1501 = vand.u32 %v1298, 4294901760
    %1502 = vmatpush.msra.mxu0 %v1501
    %v1503 = vand.u32 %v1297, 4294901760
    %1504 = vmatpush.msra.mxu0 %v1503
    %v1505 = vand.u32 %v1296, 4294901760
    %1506 = vmatpush.msra.mxu0 %v1505
    %v1507 = vand.u32 %v190, 4294901760
    %1508 = vmatmul.f32.gmra.mxu0 %v1507
    %v1509 = vpop.f32.mrf.mxu0
    %v1510 = vadd.f32 %v1481, %v1509
    %v1511 = vand.u32 %v193, 4294901760
    %1512 = vmatmul.f32.gmra.mxu0 %v1511
    %v1513 = vpop.f32.mrf.mxu0
    %v1514 = vadd.f32 %v1485, %v1513
    %1515 = vdwg.mxu0
    %v1516 = vmul.f32 %v1068, 0.17677669
    %v1517 = vmul.f32 %v1072, 0.17677669
    %v1519 = vsel %vm123, %v851, 0
    %v1522 = vsel %vm123, %v625, 0
    %1524 = vmatpush.xpose.msra.mxu0 0.0
    %1525 = vmatpush.xpose.msra.mxu0 0.0
    %1526 = vmatpush.xpose.msra.mxu0 0.0
    %1527 = vmatpush.xpose.msra.mxu0 0.0
    %1528 = vmatpush.xpose.msra.mxu0 0.0
    %1529 = vmatpush.xpose.msra.mxu0 0.0
    %1530 = vmatpush.xpose.msra.mxu0 0.0
    %1531 = vmatpush.xpose.msra.mxu0 0.0
    %1532 = vmatpush.xpose.msra.mxu0 0.0
    %1533 = vmatpush.xpose.msra.mxu0 0.0
    %1534 = vmatpush.xpose.msra.mxu0 0.0
    %1535 = vmatpush.xpose.msra.mxu0 0.0
    %1536 = vmatpush.xpose.msra.mxu0 0.0
    %1537 = vmatpush.xpose.msra.mxu0 0.0
    %1538 = vmatpush.xpose.msra.mxu0 0.0
    %v1539 = vand.u32 %v1522, 4294901760
    %1540 = vmatpush.xpose.msra.mxu0 %v1539
    %v1541 = vand.u32 %v1519, 4294901760
    %v1542 = vsub.f32 %v1519, %v1541
    %v1543 = vand.u32 %v1542, 4294901760
    %v1544 = vsub.f32 %v1542, %v1543
    %v1545 = vand.u32 %v1544, 4294901760
    %1546 = vmatmul.f32.gmra.mxu0 %v1545
    %v1547 = vpop.f32.mrf.mxu0
    %v1548 = vadd.f32 0.0, %v1547
    %1549 = vdwg.mxu0
    %1550 = vmatpush.xpose.msra.mxu0 0.0
    %1551 = vmatpush.xpose.msra.mxu0 0.0
    %1552 = vmatpush.xpose.msra.mxu0 0.0
    %1553 = vmatpush.xpose.msra.mxu0 0.0
    %1554 = vmatpush.xpose.msra.mxu0 0.0
    %1555 = vmatpush.xpose.msra.mxu0 0.0
    %1556 = vmatpush.xpose.msra.mxu0 0.0
    %1557 = vmatpush.xpose.msra.mxu0 0.0
    %1558 = vmatpush.xpose.msra.mxu0 0.0
    %1559 = vmatpush.xpose.msra.mxu0 0.0
    %1560 = vmatpush.xpose.msra.mxu0 0.0
    %1561 = vmatpush.xpose.msra.mxu0 0.0
    %1562 = vmatpush.xpose.msra.mxu0 0.0
    %1563 = vmatpush.xpose.msra.mxu0 0.0
    %1564 = vmatpush.xpose.msra.mxu0 0.0
    %v1565 = vand.u32 %v1522, 4294901760
    %v1566 = vsub.f32 %v1522, %v1565
    %v1567 = vand.u32 %v1566, 4294901760
    %v1568 = vsub.f32 %v1566, %v1567
    %v1569 = vand.u32 %v1568, 4294901760
    %1570 = vmatpush.xpose.msra.mxu0 %v1569
    %v1571 = vand.u32 %v1519, 4294901760
    %1572 = vmatmul.f32.gmra.mxu0 %v1571
    %v1573 = vpop.f32.mrf.mxu0
    %v1574 = vadd.f32 %v1548, %v1573
    %1575 = vdwg.mxu0
    %1576 = vmatpush.xpose.msra.mxu0 0.0
    %1577 = vmatpush.xpose.msra.mxu0 0.0
    %1578 = vmatpush.xpose.msra.mxu0 0.0
    %1579 = vmatpush.xpose.msra.mxu0 0.0
    %1580 = vmatpush.xpose.msra.mxu0 0.0
    %1581 = vmatpush.xpose.msra.mxu0 0.0
    %1582 = vmatpush.xpose.msra.mxu0 0.0
    %1583 = vmatpush.xpose.msra.mxu0 0.0
    %1584 = vmatpush.xpose.msra.mxu0 0.0
    %1585 = vmatpush.xpose.msra.mxu0 0.0
    %1586 = vmatpush.xpose.msra.mxu0 0.0
    %1587 = vmatpush.xpose.msra.mxu0 0.0
    %1588 = vmatpush.xpose.msra.mxu0 0.0
    %1589 = vmatpush.xpose.msra.mxu0 0.0
    %1590 = vmatpush.xpose.msra.mxu0 0.0
    %v1591 = vand.u32 %v1522, 4294901760
    %v1592 = vsub.f32 %v1522, %v1591
    %1593 = vmatpush.xpose.msra.mxu0 %v1592
    %v1594 = vand.u32 %v1519, 4294901760
    %v1595 = vsub.f32 %v1519, %v1594
    %1596 = vmatmul.f32.gmra.mxu0 %v1595
    %v1597 = vpop.f32.mrf.mxu0
    %v1598 = vadd.f32 %v1574, %v1597
    %1599 = vdwg.mxu0
    %1600 = vmatpush.xpose.msra.mxu0 0.0
    %1601 = vmatpush.xpose.msra.mxu0 0.0
    %1602 = vmatpush.xpose.msra.mxu0 0.0
    %1603 = vmatpush.xpose.msra.mxu0 0.0
    %1604 = vmatpush.xpose.msra.mxu0 0.0
    %1605 = vmatpush.xpose.msra.mxu0 0.0
    %1606 = vmatpush.xpose.msra.mxu0 0.0
    %1607 = vmatpush.xpose.msra.mxu0 0.0
    %1608 = vmatpush.xpose.msra.mxu0 0.0
    %1609 = vmatpush.xpose.msra.mxu0 0.0
    %1610 = vmatpush.xpose.msra.mxu0 0.0
    %1611 = vmatpush.xpose.msra.mxu0 0.0
    %1612 = vmatpush.xpose.msra.mxu0 0.0
    %1613 = vmatpush.xpose.msra.mxu0 0.0
    %1614 = vmatpush.xpose.msra.mxu0 0.0
    %v1615 = vand.u32 %v1522, 4294901760
    %1616 = vmatpush.xpose.msra.mxu0 %v1615
    %v1617 = vand.u32 %v1519, 4294901760
    %v1618 = vsub.f32 %v1519, %v1617
    %v1619 = vand.u32 %v1618, 4294901760
    %1620 = vmatmul.f32.gmra.mxu0 %v1619
    %v1621 = vpop.f32.mrf.mxu0
    %v1622 = vadd.f32 %v1598, %v1621
    %1623 = vdwg.mxu0
    %1624 = vmatpush.xpose.msra.mxu0 0.0
    %1625 = vmatpush.xpose.msra.mxu0 0.0
    %1626 = vmatpush.xpose.msra.mxu0 0.0
    %1627 = vmatpush.xpose.msra.mxu0 0.0
    %1628 = vmatpush.xpose.msra.mxu0 0.0
    %1629 = vmatpush.xpose.msra.mxu0 0.0
    %1630 = vmatpush.xpose.msra.mxu0 0.0
    %1631 = vmatpush.xpose.msra.mxu0 0.0
    %1632 = vmatpush.xpose.msra.mxu0 0.0
    %1633 = vmatpush.xpose.msra.mxu0 0.0
    %1634 = vmatpush.xpose.msra.mxu0 0.0
    %1635 = vmatpush.xpose.msra.mxu0 0.0
    %1636 = vmatpush.xpose.msra.mxu0 0.0
    %1637 = vmatpush.xpose.msra.mxu0 0.0
    %1638 = vmatpush.xpose.msra.mxu0 0.0
    %v1639 = vand.u32 %v1522, 4294901760
    %v1640 = vsub.f32 %v1522, %v1639
    %v1641 = vand.u32 %v1640, 4294901760
    %1642 = vmatpush.xpose.msra.mxu0 %v1641
    %v1643 = vand.u32 %v1519, 4294901760
    %1644 = vmatmul.f32.gmra.mxu0 %v1643
    %v1645 = vpop.f32.mrf.mxu0
    %v1646 = vadd.f32 %v1622, %v1645
    %1647 = vdwg.mxu0
    %1648 = vmatpush.xpose.msra.mxu0 0.0
    %1649 = vmatpush.xpose.msra.mxu0 0.0
    %1650 = vmatpush.xpose.msra.mxu0 0.0
    %1651 = vmatpush.xpose.msra.mxu0 0.0
    %1652 = vmatpush.xpose.msra.mxu0 0.0
    %1653 = vmatpush.xpose.msra.mxu0 0.0
    %1654 = vmatpush.xpose.msra.mxu0 0.0
    %1655 = vmatpush.xpose.msra.mxu0 0.0
    %1656 = vmatpush.xpose.msra.mxu0 0.0
    %1657 = vmatpush.xpose.msra.mxu0 0.0
    %1658 = vmatpush.xpose.msra.mxu0 0.0
    %1659 = vmatpush.xpose.msra.mxu0 0.0
    %1660 = vmatpush.xpose.msra.mxu0 0.0
    %1661 = vmatpush.xpose.msra.mxu0 0.0
    %1662 = vmatpush.xpose.msra.mxu0 0.0
    %v1663 = vand.u32 %v1522, 4294901760
    %1664 = vmatpush.xpose.msra.mxu0 %v1663
    %v1665 = vand.u32 %v1519, 4294901760
    %1666 = vmatmul.f32.gmra.mxu0 %v1665
    %v1667 = vpop.f32.mrf.mxu0
    %v1668 = vadd.f32 %v1646, %v1667
    %1669 = vdwg.mxu0
    %vm1670 = vcmask 64512
    %v1671 = vsel %vm1670, %v1668, -inf
    %1672 = vmax.xlane.f32.xlu0 %v1671
    %v1673 = vpop.xlane.xlu0 %1672
    %v1674 = vsub.f32 %v1668, %v1673
    %v1675 = vmul.f32 %v1674, 1.442695
    %v1676 = vpow.pop %v1675
    %v1677 = vsel %vm1670, %v1676, 0.0
    %1678 = vadd.xlane.f32.xlu0 %v1677
    %v1679 = vpop.xlane.xlu0 %1678
    %v1681 = vsel %vm1670, %v1676, 0
    %1683 = vmatpush.msra.mxu0 0.0
    %1684 = vmatpush.msra.mxu0 0.0
    %1685 = vmatpush.msra.mxu0 0.0
    %1686 = vmatpush.msra.mxu0 0.0
    %1687 = vmatpush.msra.mxu0 0.0
    %1688 = vmatpush.msra.mxu0 0.0
    %1689 = vmatpush.msra.mxu0 0.0
    %1690 = vmatpush.msra.mxu0 0.0
    %1691 = vmatpush.msra.mxu0 0.0
    %1692 = vmatpush.msra.mxu0 0.0
    %1693 = vmatpush.msra.mxu0 0.0
    %1694 = vmatpush.msra.mxu0 0.0
    %1695 = vmatpush.msra.mxu0 0.0
    %1696 = vmatpush.msra.mxu0 0.0
    %1697 = vmatpush.msra.mxu0 0.0
    %v1698 = vand.u32 %v845, 4294901760
    %1699 = vmatpush.msra.mxu0 %v1698
    %v1700 = vand.u32 %v1681, 4294901760
    %v1701 = vsub.f32 %v1681, %v1700
    %v1702 = vand.u32 %v1701, 4294901760
    %v1703 = vsub.f32 %v1701, %v1702
    %v1704 = vand.u32 %v1703, 4294901760
    %1705 = vmatmul.f32.gmra.mxu0 %v1704
    %v1706 = vpop.f32.mrf.mxu0
    %v1707 = vadd.f32 0.0, %v1706
    %1708 = vdwg.mxu0
    %1709 = vmatpush.msra.mxu0 0.0
    %1710 = vmatpush.msra.mxu0 0.0
    %1711 = vmatpush.msra.mxu0 0.0
    %1712 = vmatpush.msra.mxu0 0.0
    %1713 = vmatpush.msra.mxu0 0.0
    %1714 = vmatpush.msra.mxu0 0.0
    %1715 = vmatpush.msra.mxu0 0.0
    %1716 = vmatpush.msra.mxu0 0.0
    %1717 = vmatpush.msra.mxu0 0.0
    %1718 = vmatpush.msra.mxu0 0.0
    %1719 = vmatpush.msra.mxu0 0.0
    %1720 = vmatpush.msra.mxu0 0.0
    %1721 = vmatpush.msra.mxu0 0.0
    %1722 = vmatpush.msra.mxu0 0.0
    %1723 = vmatpush.msra.mxu0 0.0
    %v1724 = vand.u32 %v845, 4294901760
    %v1725 = vsub.f32 %v845, %v1724
    %v1726 = vand.u32 %v1725, 4294901760
    %v1727 = vsub.f32 %v1725, %v1726
    %v1728 = vand.u32 %v1727, 4294901760
    %1729 = vmatpush.msra.mxu0 %v1728
    %v1730 = vand.u32 %v1681, 4294901760
    %1731 = vmatmul.f32.gmra.mxu0 %v1730
    %v1732 = vpop.f32.mrf.mxu0
    %v1733 = vadd.f32 %v1707, %v1732
    %1734 = vdwg.mxu0
    %1735 = vmatpush.msra.mxu0 0.0
    %1736 = vmatpush.msra.mxu0 0.0
    %1737 = vmatpush.msra.mxu0 0.0
    %1738 = vmatpush.msra.mxu0 0.0
    %1739 = vmatpush.msra.mxu0 0.0
    %1740 = vmatpush.msra.mxu0 0.0
    %1741 = vmatpush.msra.mxu0 0.0
    %1742 = vmatpush.msra.mxu0 0.0
    %1743 = vmatpush.msra.mxu0 0.0
    %1744 = vmatpush.msra.mxu0 0.0
    %1745 = vmatpush.msra.mxu0 0.0
    %1746 = vmatpush.msra.mxu0 0.0
    %1747 = vmatpush.msra.mxu0 0.0
    %1748 = vmatpush.msra.mxu0 0.0
    %1749 = vmatpush.msra.mxu0 0.0
    %v1750 = vand.u32 %v845, 4294901760
    %v1751 = vsub.f32 %v845, %v1750
    %1752 = vmatpush.msra.mxu0 %v1751
    %v1753 = vand.u32 %v1681, 4294901760
    %v1754 = vsub.f32 %v1681, %v1753
    %1755 = vmatmul.f32.gmra.mxu0 %v1754
    %v1756 = vpop.f32.mrf.mxu0
    %v1757 = vadd.f32 %v1733, %v1756
    %1758 = vdwg.mxu0
    %1759 = vmatpush.msra.mxu0 0.0
    %1760 = vmatpush.msra.mxu0 0.0
    %1761 = vmatpush.msra.mxu0 0.0
    %1762 = vmatpush.msra.mxu0 0.0
    %1763 = vmatpush.msra.mxu0 0.0
    %1764 = vmatpush.msra.mxu0 0.0
    %1765 = vmatpush.msra.mxu0 0.0
    %1766 = vmatpush.msra.mxu0 0.0
    %1767 = vmatpush.msra.mxu0 0.0
    %1768 = vmatpush.msra.mxu0 0.0
    %1769 = vmatpush.msra.mxu0 0.0
    %1770 = vmatpush.msra.mxu0 0.0
    %1771 = vmatpush.msra.mxu0 0.0
    %1772 = vmatpush.msra.mxu0 0.0
    %1773 = vmatpush.msra.mxu0 0.0
    %v1774 = vand.u32 %v845, 4294901760
    %1775 = vmatpush.msra.mxu0 %v1774
    %v1776 = vand.u32 %v1681, 4294901760
    %v1777 = vsub.f32 %v1681, %v1776
    %v1778 = vand.u32 %v1777, 4294901760
    %1779 = vmatmul.f32.gmra.mxu0 %v1778
    %v1780 = vpop.f32.mrf.mxu0
    %v1781 = vadd.f32 %v1757, %v1780
    %1782 = vdwg.mxu0
    %1783 = vmatpush.msra.mxu0 0.0
    %1784 = vmatpush.msra.mxu0 0.0
    %1785 = vmatpush.msra.mxu0 0.0
    %1786 = vmatpush.msra.mxu0 0.0
    %1787 = vmatpush.msra.mxu0 0.0
    %1788 = vmatpush.msra.mxu0 0.0
    %1789 = vmatpush.msra.mxu0 0.0
    %1790 = vmatpush.msra.mxu0 0.0
    %1791 = vmatpush.msra.mxu0 0.0
    %1792 = vmatpush.msra.mxu0 0.0
    %1793 = vmatpush.msra.mxu0 0.0
    %1794 = vmatpush.msra.mxu0 0.0
    %1795 = vmatpush.msra.mxu0 0.0
    %1796 = vmatpush.msra.mxu0 0.0
    %1797 = vmatpush.msra.mxu0 0.0
    %v1798 = vand.u32 %v845, 4294901760
    %v1799 = vsub.f32 %v845, %v1798
    %v1800 = vand.u32 %v1799, 4294901760
    %1801 = vmatpush.msra.mxu0 %v1800
    %v1802 = vand.u32 %v1681, 4294901760
    %1803 = vmatmul.f32.gmra.mxu0 %v1802
    %v1804 = vpop.f32.mrf.mxu0
    %v1805 = vadd.f32 %v1781, %v1804
    %1806 = vdwg.mxu0
    %1807 = vmatpush.msra.mxu0 0.0
    %1808 = vmatpush.msra.mxu0 0.0
    %1809 = vmatpush.msra.mxu0 0.0
    %1810 = vmatpush.msra.mxu0 0.0
    %1811 = vmatpush.msra.mxu0 0.0
    %1812 = vmatpush.msra.mxu0 0.0
    %1813 = vmatpush.msra.mxu0 0.0
    %1814 = vmatpush.msra.mxu0 0.0
    %1815 = vmatpush.msra.mxu0 0.0
    %1816 = vmatpush.msra.mxu0 0.0
    %1817 = vmatpush.msra.mxu0 0.0
    %1818 = vmatpush.msra.mxu0 0.0
    %1819 = vmatpush.msra.mxu0 0.0
    %1820 = vmatpush.msra.mxu0 0.0
    %1821 = vmatpush.msra.mxu0 0.0
    %v1822 = vand.u32 %v845, 4294901760
    %1823 = vmatpush.msra.mxu0 %v1822
    %v1824 = vand.u32 %v1681, 4294901760
    %1825 = vmatmul.f32.gmra.mxu0 %v1824
    %v1826 = vpop.f32.mrf.mxu0
    %v1827 = vadd.f32 %v1805, %v1826
    %1828 = vdwg.mxu0
    %v1829 = vrcp.pop %v1679
    %v1830 = vmul.f32 %v1679, %v1829
    %v1831 = vsub.f32 1.0, %v1830
    %v1832 = vmul.f32 %v1829, %v1831
    %v1833 = vadd.f32 %v1829, %v1832
    %vm1834 = vweird.f32 %v1679
    %vm1835 = vweird.f32 %v1829
    %vm1836 = vmor %vm1834, %vm1835
    %v1837 = vsel %vm1836, %v1829, %v1833
    %v1838 = vand.u32 2147483647, %v1679
    %vm1839 = vcmp.eq.f32.partialorder %v1838, 8.507059e+37
    %v1840 = vand.u32 %v1679, 2147483648
    %v1841 = vor.u32 1.1754944e-38, %v1840
    %v1842 = vsel %vm1839, %v1841, %v1837
    %v1843 = vmul.f32 %v1827, %v1842
    %v1844 = vld [vmem:[#allocation11] sm:$0xff]
    %v1845 = vld [vmem:[#allocation11 + $0x8] sm:$0xff]
    %v1846 = vld [vmem:[#allocation11 + $0x10] sm:$0xff]
    %v1847 = vld [vmem:[#allocation11 + $0x18] sm:$0xff]
    %v1849 = vsel %vm123, %v1516, 0
    %v1852 = vsel %vm123, %v1289, 0
    %1854 = vmatpush.xpose.msra.mxu0 0.0
    %1855 = vmatpush.xpose.msra.mxu0 0.0
    %1856 = vmatpush.xpose.msra.mxu0 0.0
    %1857 = vmatpush.xpose.msra.mxu0 0.0
    %1858 = vmatpush.xpose.msra.mxu0 0.0
    %1859 = vmatpush.xpose.msra.mxu0 0.0
    %1860 = vmatpush.xpose.msra.mxu0 0.0
    %1861 = vmatpush.xpose.msra.mxu0 0.0
    %1862 = vmatpush.xpose.msra.mxu0 0.0
    %1863 = vmatpush.xpose.msra.mxu0 0.0
    %1864 = vmatpush.xpose.msra.mxu0 0.0
    %1865 = vmatpush.xpose.msra.mxu0 0.0
    %1866 = vmatpush.xpose.msra.mxu0 0.0
    %1867 = vmatpush.xpose.msra.mxu0 0.0
    %1868 = vmatpush.xpose.msra.mxu0 0.0
    %v1869 = vand.u32 %v1852, 4294901760
    %1870 = vmatpush.xpose.msra.mxu0 %v1869
    %v1871 = vand.u32 %v1849, 4294901760
    %v1872 = vsub.f32 %v1849, %v1871
    %v1873 = vand.u32 %v1872, 4294901760
    %v1874 = vsub.f32 %v1872, %v1873
    %v1875 = vand.u32 %v1874, 4294901760
    %1876 = vmatmul.f32.gmra.mxu0 %v1875
    %v1877 = vpop.f32.mrf.mxu0
    %v1878 = vadd.f32 0.0, %v1877
    %1879 = vdwg.mxu0
    %1880 = vmatpush.xpose.msra.mxu0 0.0
    %1881 = vmatpush.xpose.msra.mxu0 0.0
    %1882 = vmatpush.xpose.msra.mxu0 0.0
    %1883 = vmatpush.xpose.msra.mxu0 0.0
    %1884 = vmatpush.xpose.msra.mxu0 0.0
    %1885 = vmatpush.xpose.msra.mxu0 0.0
    %1886 = vmatpush.xpose.msra.mxu0 0.0
    %1887 = vmatpush.xpose.msra.mxu0 0.0
    %1888 = vmatpush.xpose.msra.mxu0 0.0
    %1889 = vmatpush.xpose.msra.mxu0 0.0
    %1890 = vmatpush.xpose.msra.mxu0 0.0
    %1891 = vmatpush.xpose.msra.mxu0 0.0
    %1892 = vmatpush.xpose.msra.mxu0 0.0
    %1893 = vmatpush.xpose.msra.mxu0 0.0
    %1894 = vmatpush.xpose.msra.mxu0 0.0
    %v1895 = vand.u32 %v1852, 4294901760
    %v1896 = vsub.f32 %v1852, %v1895
    %v1897 = vand.u32 %v1896, 4294901760
    %v1898 = vsub.f32 %v1896, %v1897
    %v1899 = vand.u32 %v1898, 4294901760
    %1900 = vmatpush.xpose.msra.mxu0 %v1899
    %v1901 = vand.u32 %v1849, 4294901760
    %1902 = vmatmul.f32.gmra.mxu0 %v1901
    %v1903 = vpop.f32.mrf.mxu0
    %v1904 = vadd.f32 %v1878, %v1903
    %1905 = vdwg.mxu0
    %1906 = vmatpush.xpose.msra.mxu0 0.0
    %1907 = vmatpush.xpose.msra.mxu0 0.0
    %1908 = vmatpush.xpose.msra.mxu0 0.0
    %1909 = vmatpush.xpose.msra.mxu0 0.0
    %1910 = vmatpush.xpose.msra.mxu0 0.0
    %1911 = vmatpush.xpose.msra.mxu0 0.0
    %1912 = vmatpush.xpose.msra.mxu0 0.0
    %1913 = vmatpush.xpose.msra.mxu0 0.0
    %1914 = vmatpush.xpose.msra.mxu0 0.0
    %1915 = vmatpush.xpose.msra.mxu0 0.0
    %1916 = vmatpush.xpose.msra.mxu0 0.0
    %1917 = vmatpush.xpose.msra.mxu0 0.0
    %1918 = vmatpush.xpose.msra.mxu0 0.0
    %1919 = vmatpush.xpose.msra.mxu0 0.0
    %1920 = vmatpush.xpose.msra.mxu0 0.0
    %v1921 = vand.u32 %v1852, 4294901760
    %v1922 = vsub.f32 %v1852, %v1921
    %1923 = vmatpush.xpose.msra.mxu0 %v1922
    %v1924 = vand.u32 %v1849, 4294901760
    %v1925 = vsub.f32 %v1849, %v1924
    %1926 = vmatmul.f32.gmra.mxu0 %v1925
    %v1927 = vpop.f32.mrf.mxu0
    %v1928 = vadd.f32 %v1904, %v1927
    %1929 = vdwg.mxu0
    %1930 = vmatpush.xpose.msra.mxu0 0.0
    %1931 = vmatpush.xpose.msra.mxu0 0.0
    %1932 = vmatpush.xpose.msra.mxu0 0.0
    %1933 = vmatpush.xpose.msra.mxu0 0.0
    %1934 = vmatpush.xpose.msra.mxu0 0.0
    %1935 = vmatpush.xpose.msra.mxu0 0.0
    %1936 = vmatpush.xpose.msra.mxu0 0.0
    %1937 = vmatpush.xpose.msra.mxu0 0.0
    %1938 = vmatpush.xpose.msra.mxu0 0.0
    %1939 = vmatpush.xpose.msra.mxu0 0.0
    %1940 = vmatpush.xpose.msra.mxu0 0.0
    %1941 = vmatpush.xpose.msra.mxu0 0.0
    %1942 = vmatpush.xpose.msra.mxu0 0.0
    %1943 = vmatpush.xpose.msra.mxu0 0.0
    %1944 = vmatpush.xpose.msra.mxu0 0.0
    %v1945 = vand.u32 %v1852, 4294901760
    %1946 = vmatpush.xpose.msra.mxu0 %v1945
    %v1947 = vand.u32 %v1849, 4294901760
    %v1948 = vsub.f32 %v1849, %v1947
    %v1949 = vand.u32 %v1948, 4294901760
    %1950 = vmatmul.f32.gmra.mxu0 %v1949
    %v1951 = vpop.f32.mrf.mxu0
    %v1952 = vadd.f32 %v1928, %v1951
    %1953 = vdwg.mxu0
    %1954 = vmatpush.xpose.msra.mxu0 0.0
    %1955 = vmatpush.xpose.msra.mxu0 0.0
    %1956 = vmatpush.xpose.msra.mxu0 0.0
    %1957 = vmatpush.xpose.msra.mxu0 0.0
    %1958 = vmatpush.xpose.msra.mxu0 0.0
    %1959 = vmatpush.xpose.msra.mxu0 0.0
    %1960 = vmatpush.xpose.msra.mxu0 0.0
    %1961 = vmatpush.xpose.msra.mxu0 0.0
    %1962 = vmatpush.xpose.msra.mxu0 0.0
    %1963 = vmatpush.xpose.msra.mxu0 0.0
    %1964 = vmatpush.xpose.msra.mxu0 0.0
    %1965 = vmatpush.xpose.msra.mxu0 0.0
    %1966 = vmatpush.xpose.msra.mxu0 0.0
    %1967 = vmatpush.xpose.msra.mxu0 0.0
    %1968 = vmatpush.xpose.msra.mxu0 0.0
    %v1969 = vand.u32 %v1852, 4294901760
    %v1970 = vsub.f32 %v1852, %v1969
    %v1971 = vand.u32 %v1970, 4294901760
    %1972 = vmatpush.xpose.msra.mxu0 %v1971
    %v1973 = vand.u32 %v1849, 4294901760
    %1974 = vmatmul.f32.gmra.mxu0 %v1973
    %v1975 = vpop.f32.mrf.mxu0
    %v1976 = vadd.f32 %v1952, %v1975
    %1977 = vdwg.mxu0
    %1978 = vmatpush.xpose.msra.mxu0 0.0
    %1979 = vmatpush.xpose.msra.mxu0 0.0
    %1980 = vmatpush.xpose.msra.mxu0 0.0
    %1981 = vmatpush.xpose.msra.mxu0 0.0
    %1982 = vmatpush.xpose.msra.mxu0 0.0
    %1983 = vmatpush.xpose.msra.mxu0 0.0
    %1984 = vmatpush.xpose.msra.mxu0 0.0
    %1985 = vmatpush.xpose.msra.mxu0 0.0
    %1986 = vmatpush.xpose.msra.mxu0 0.0
    %1987 = vmatpush.xpose.msra.mxu0 0.0
    %1988 = vmatpush.xpose.msra.mxu0 0.0
    %1989 = vmatpush.xpose.msra.mxu0 0.0
    %1990 = vmatpush.xpose.msra.mxu0 0.0
    %1991 = vmatpush.xpose.msra.mxu0 0.0
    %1992 = vmatpush.xpose.msra.mxu0 0.0
    %v1993 = vand.u32 %v1852, 4294901760
    %1994 = vmatpush.xpose.msra.mxu0 %v1993
    %v1995 = vand.u32 %v1849, 4294901760
    %1996 = vmatmul.f32.gmra.mxu0 %v1995
    %v1997 = vpop.f32.mrf.mxu0
    %v1998 = vadd.f32 %v1976, %v1997
    %1999 = vdwg.mxu0
    %v2000 = vsel %vm1670, %v1998, -inf
    %2001 = vmax.xlane.f32.xlu0 %v2000
    %v2002 = vpop.xlane.xlu0 %2001
    %v2003 = vsub.f32 %v1998, %v2002
    %v2004 = vmul.f32 %v2003, 1.442695
    %v2005 = vpow.pop %v2004
    %v2006 = vsel %vm1670, %v2005, 0.0
    %2007 = vadd.xlane.f32.xlu0 %v2006
    %v2008 = vpop.xlane.xlu0 %2007
    %v2010 = vsel %vm1670, %v2005, 0
    %2012 = vmatpush.msra.mxu0 0.0
    %2013 = vmatpush.msra.mxu0 0.0
    %2014 = vmatpush.msra.mxu0 0.0
    %2015 = vmatpush.msra.mxu0 0.0
    %2016 = vmatpush.msra.mxu0 0.0
    %2017 = vmatpush.msra.mxu0 0.0
    %2018 = vmatpush.msra.mxu0 0.0
    %2019 = vmatpush.msra.mxu0 0.0
    %2020 = vmatpush.msra.mxu0 0.0
    %2021 = vmatpush.msra.mxu0 0.0
    %2022 = vmatpush.msra.mxu0 0.0
    %2023 = vmatpush.msra.mxu0 0.0
    %2024 = vmatpush.msra.mxu0 0.0
    %2025 = vmatpush.msra.mxu0 0.0
    %2026 = vmatpush.msra.mxu0 0.0
    %v2027 = vand.u32 %v1510, 4294901760
    %2028 = vmatpush.msra.mxu0 %v2027
    %v2029 = vand.u32 %v2010, 4294901760
    %v2030 = vsub.f32 %v2010, %v2029
    %v2031 = vand.u32 %v2030, 4294901760
    %v2032 = vsub.f32 %v2030, %v2031
    %v2033 = vand.u32 %v2032, 4294901760
    %2034 = vmatmul.f32.gmra.mxu0 %v2033
    %v2035 = vpop.f32.mrf.mxu0
    %v2036 = vadd.f32 0.0, %v2035
    %2037 = vdwg.mxu0
    %2038 = vmatpush.msra.mxu0 0.0
    %2039 = vmatpush.msra.mxu0 0.0
    %2040 = vmatpush.msra.mxu0 0.0
    %2041 = vmatpush.msra.mxu0 0.0
    %2042 = vmatpush.msra.mxu0 0.0
    %2043 = vmatpush.msra.mxu0 0.0
    %2044 = vmatpush.msra.mxu0 0.0
    %2045 = vmatpush.msra.mxu0 0.0
    %2046 = vmatpush.msra.mxu0 0.0
    %2047 = vmatpush.msra.mxu0 0.0
    %2048 = vmatpush.msra.mxu0 0.0
    %2049 = vmatpush.msra.mxu0 0.0
    %2050 = vmatpush.msra.mxu0 0.0
    %2051 = vmatpush.msra.mxu0 0.0
    %2052 = vmatpush.msra.mxu0 0.0
    %v2053 = vand.u32 %v1510, 4294901760
    %v2054 = vsub.f32 %v1510, %v2053
    %v2055 = vand.u32 %v2054, 4294901760
    %v2056 = vsub.f32 %v2054, %v2055
    %v2057 = vand.u32 %v2056, 4294901760
    %2058 = vmatpush.msra.mxu0 %v2057
    %v2059 = vand.u32 %v2010, 4294901760
    %2060 = vmatmul.f32.gmra.mxu0 %v2059
    %v2061 = vpop.f32.mrf.mxu0
    %v2062 = vadd.f32 %v2036, %v2061
    %2063 = vdwg.mxu0
    %2064 = vmatpush.msra.mxu0 0.0
    %2065 = vmatpush.msra.mxu0 0.0
    %2066 = vmatpush.msra.mxu0 0.0
    %2067 = vmatpush.msra.mxu0 0.0
    %2068 = vmatpush.msra.mxu0 0.0
    %2069 = vmatpush.msra.mxu0 0.0
    %2070 = vmatpush.msra.mxu0 0.0
    %2071 = vmatpush.msra.mxu0 0.0
    %2072 = vmatpush.msra.mxu0 0.0
    %2073 = vmatpush.msra.mxu0 0.0
    %2074 = vmatpush.msra.mxu0 0.0
    %2075 = vmatpush.msra.mxu0 0.0
    %2076 = vmatpush.msra.mxu0 0.0
    %2077 = vmatpush.msra.mxu0 0.0
    %2078 = vmatpush.msra.mxu0 0.0
    %v2079 = vand.u32 %v1510, 4294901760
    %v2080 = vsub.f32 %v1510, %v2079
    %2081 = vmatpush.msra.mxu0 %v2080
    %v2082 = vand.u32 %v2010, 4294901760
    %v2083 = vsub.f32 %v2010, %v2082
    %2084 = vmatmul.f32.gmra.mxu0 %v2083
    %v2085 = vpop.f32.mrf.mxu0
    %v2086 = vadd.f32 %v2062, %v2085
    %2087 = vdwg.mxu0
    %2088 = vmatpush.msra.mxu0 0.0
    %2089 = vmatpush.msra.mxu0 0.0
    %2090 = vmatpush.msra.mxu0 0.0
    %2091 = vmatpush.msra.mxu0 0.0
    %2092 = vmatpush.msra.mxu0 0.0
    %2093 = vmatpush.msra.mxu0 0.0
    %2094 = vmatpush.msra.mxu0 0.0
    %2095 = vmatpush.msra.mxu0 0.0
    %2096 = vmatpush.msra.mxu0 0.0
    %2097 = vmatpush.msra.mxu0 0.0
    %2098 = vmatpush.msra.mxu0 0.0
    %2099 = vmatpush.msra.mxu0 0.0
    %2100 = vmatpush.msra.mxu0 0.0
    %2101 = vmatpush.msra.mxu0 0.0
    %2102 = vmatpush.msra.mxu0 0.0
    %v2103 = vand.u32 %v1510, 4294901760
    %2104 = vmatpush.msra.mxu0 %v2103
    %v2105 = vand.u32 %v2010, 4294901760
    %v2106 = vsub.f32 %v2010, %v2105
    %v2107 = vand.u32 %v2106, 4294901760
    %2108 = vmatmul.f32.gmra.mxu0 %v2107
    %v2109 = vpop.f32.mrf.mxu0
    %v2110 = vadd.f32 %v2086, %v2109
    %2111 = vdwg.mxu0
    %2112 = vmatpush.msra.mxu0 0.0
    %2113 = vmatpush.msra.mxu0 0.0
    %2114 = vmatpush.msra.mxu0 0.0
    %2115 = vmatpush.msra.mxu0 0.0
    %2116 = vmatpush.msra.mxu0 0.0
    %2117 = vmatpush.msra.mxu0 0.0
    %2118 = vmatpush.msra.mxu0 0.0
    %2119 = vmatpush.msra.mxu0 0.0
    %2120 = vmatpush.msra.mxu0 0.0
    %2121 = vmatpush.msra.mxu0 0.0
    %2122 = vmatpush.msra.mxu0 0.0
    %2123 = vmatpush.msra.mxu0 0.0
    %2124 = vmatpush.msra.mxu0 0.0
    %2125 = vmatpush.msra.mxu0 0.0
    %2126 = vmatpush.msra.mxu0 0.0
    %v2127 = vand.u32 %v1510, 4294901760
    %v2128 = vsub.f32 %v1510, %v2127
    %v2129 = vand.u32 %v2128, 4294901760
    %2130 = vmatpush.msra.mxu0 %v2129
    %v2131 = vand.u32 %v2010, 4294901760
    %2132 = vmatmul.f32.gmra.mxu0 %v2131
    %v2133 = vpop.f32.mrf.mxu0
    %v2134 = vadd.f32 %v2110, %v2133
    %2135 = vdwg.mxu0
    %2136 = vmatpush.msra.mxu0 0.0
    %2137 = vmatpush.msra.mxu0 0.0
    %2138 = vmatpush.msra.mxu0 0.0
    %2139 = vmatpush.msra.mxu0 0.0
    %2140 = vmatpush.msra.mxu0 0.0
    %2141 = vmatpush.msra.mxu0 0.0
    %2142 = vmatpush.msra.mxu0 0.0
    %2143 = vmatpush.msra.mxu0 0.0
    %2144 = vmatpush.msra.mxu0 0.0
    %2145 = vmatpush.msra.mxu0 0.0
    %2146 = vmatpush.msra.mxu0 0.0
    %2147 = vmatpush.msra.mxu0 0.0
    %2148 = vmatpush.msra.mxu0 0.0
    %2149 = vmatpush.msra.mxu0 0.0
    %2150 = vmatpush.msra.mxu0 0.0
    %v2151 = vand.u32 %v1510, 4294901760
    %2152 = vmatpush.msra.mxu0 %v2151
    %v2153 = vand.u32 %v2010, 4294901760
    %2154 = vmatmul.f32.gmra.mxu0 %v2153
    %v2155 = vpop.f32.mrf.mxu0
    %v2156 = vadd.f32 %v2134, %v2155
    %2157 = vdwg.mxu0
    %v2158 = vrcp.pop %v2008
    %v2159 = vmul.f32 %v2008, %v2158
    %v2160 = vsub.f32 1.0, %v2159
    %v2161 = vmul.f32 %v2158, %v2160
    %v2162 = vadd.f32 %v2158, %v2161
    %vm2163 = vweird.f32 %v2008
    %vm2164 = vweird.f32 %v2158
    %vm2165 = vmor %vm2163, %vm2164
    %v2166 = vsel %vm2165, %v2158, %v2162
    %v2167 = vand.u32 2147483647, %v2008
    %vm2168 = vcmp.eq.f32.partialorder %v2167, 8.507059e+37
    %v2169 = vand.u32 %v2008, 2147483648
    %v2170 = vor.u32 1.1754944e-38, %v2169
    %v2171 = vsel %vm2168, %v2170, %v2166
    %v2172 = vmul.f32 %v2156, %v2171
    %s2173 = scalar_lea.vmem [#allocation11], 32
    %v2174 = vld [vmem:[%s2173] sm:$0xff]
    %v2175 = vld [vmem:[%s2173 + $0x8] sm:$0xff]
    %v2176 = vld [vmem:[%s2173 + $0x10] sm:$0xff]
    %v2177 = vld [vmem:[%s2173 + $0x18] sm:$0xff]
    %v2179 = vsel %vm123, %v2172, 0
    %2181 = vmatpush.msra.mxu0 0.0
    %2182 = vmatpush.msra.mxu0 0.0
    %2183 = vmatpush.msra.mxu0 0.0
    %2184 = vmatpush.msra.mxu0 0.0
    %2185 = vmatpush.msra.mxu0 0.0
    %2186 = vmatpush.msra.mxu0 0.0
    %2187 = vmatpush.msra.mxu0 0.0
    %2188 = vmatpush.msra.mxu0 0.0
    %2189 = vmatpush.msra.mxu0 0.0
    %2190 = vmatpush.msra.mxu0 0.0
    %2191 = vmatpush.msra.mxu0 0.0
    %2192 = vmatpush.msra.mxu0 0.0
    %v2193 = vand.u32 %v2177, 4294901760
    %2194 = vmatpush.msra.mxu0 %v2193
    %v2195 = vand.u32 %v2176, 4294901760
    %2196 = vmatpush.msra.mxu0 %v2195
    %v2197 = vand.u32 %v2175, 4294901760
    %2198 = vmatpush.msra.mxu0 %v2197
    %v2199 = vand.u32 %v2174, 4294901760
    %2200 = vmatpush.msra.mxu0 %v2199
    %v2201 = vand.u32 %v2179, 4294901760
    %v2202 = vsub.f32 %v2179, %v2201
    %v2203 = vand.u32 %v2202, 4294901760
    %v2204 = vsub.f32 %v2202, %v2203
    %v2205 = vand.u32 %v2204, 4294901760
    %2206 = vmatmul.f32.gmra.mxu0 %v2205
    %v2207 = vpop.f32.mrf.mxu0
    %v2208 = vadd.f32 0.0, %v2207
    %2209 = vdwg.mxu0
    %2210 = vmatpush.msra.mxu0 0.0
    %2211 = vmatpush.msra.mxu0 0.0
    %2212 = vmatpush.msra.mxu0 0.0
    %2213 = vmatpush.msra.mxu0 0.0
    %2214 = vmatpush.msra.mxu0 0.0
    %2215 = vmatpush.msra.mxu0 0.0
    %2216 = vmatpush.msra.mxu0 0.0
    %2217 = vmatpush.msra.mxu0 0.0
    %2218 = vmatpush.msra.mxu0 0.0
    %2219 = vmatpush.msra.mxu0 0.0
    %2220 = vmatpush.msra.mxu0 0.0
    %2221 = vmatpush.msra.mxu0 0.0
    %v2222 = vand.u32 %v2177, 4294901760
    %v2223 = vsub.f32 %v2177, %v2222
    %v2224 = vand.u32 %v2223, 4294901760
    %v2225 = vsub.f32 %v2223, %v2224
    %v2226 = vand.u32 %v2225, 4294901760
    %2227 = vmatpush.msra.mxu0 %v2226
    %v2228 = vand.u32 %v2176, 4294901760
    %v2229 = vsub.f32 %v2176, %v2228
    %v2230 = vand.u32 %v2229, 4294901760
    %v2231 = vsub.f32 %v2229, %v2230
    %v2232 = vand.u32 %v2231, 4294901760
    %2233 = vmatpush.msra.mxu0 %v2232
    %v2234 = vand.u32 %v2175, 4294901760
    %v2235 = vsub.f32 %v2175, %v2234
    %v2236 = vand.u32 %v2235, 4294901760
    %v2237 = vsub.f32 %v2235, %v2236
    %v2238 = vand.u32 %v2237, 4294901760
    %2239 = vmatpush.msra.mxu0 %v2238
    %v2240 = vand.u32 %v2174, 4294901760
    %v2241 = vsub.f32 %v2174, %v2240
    %v2242 = vand.u32 %v2241, 4294901760
    %v2243 = vsub.f32 %v2241, %v2242
    %v2244 = vand.u32 %v2243, 4294901760
    %2245 = vmatpush.msra.mxu0 %v2244
    %v2246 = vand.u32 %v2179, 4294901760
    %2247 = vmatmul.f32.gmra.mxu0 %v2246
    %v2248 = vpop.f32.mrf.mxu0
    %v2249 = vadd.f32 %v2208, %v2248
    %2250 = vdwg.mxu0
    %2251 = vmatpush.msra.mxu0 0.0
    %2252 = vmatpush.msra.mxu0 0.0
    %2253 = vmatpush.msra.mxu0 0.0
    %2254 = vmatpush.msra.mxu0 0.0
    %2255 = vmatpush.msra.mxu0 0.0
    %2256 = vmatpush.msra.mxu0 0.0
    %2257 = vmatpush.msra.mxu0 0.0
    %2258 = vmatpush.msra.mxu0 0.0
    %2259 = vmatpush.msra.mxu0 0.0
    %2260 = vmatpush.msra.mxu0 0.0
    %2261 = vmatpush.msra.mxu0 0.0
    %2262 = vmatpush.msra.mxu0 0.0
    %v2263 = vand.u32 %v2177, 4294901760
    %v2264 = vsub.f32 %v2177, %v2263
    %2265 = vmatpush.msra.mxu0 %v2264
    %v2266 = vand.u32 %v2176, 4294901760
    %v2267 = vsub.f32 %v2176, %v2266
    %2268 = vmatpush.msra.mxu0 %v2267
    %v2269 = vand.u32 %v2175, 4294901760
    %v2270 = vsub.f32 %v2175, %v2269
    %2271 = vmatpush.msra.mxu0 %v2270
    %v2272 = vand.u32 %v2174, 4294901760
    %v2273 = vsub.f32 %v2174, %v2272
    %2274 = vmatpush.msra.mxu0 %v2273
    %v2275 = vand.u32 %v2179, 4294901760
    %v2276 = vsub.f32 %v2179, %v2275
    %2277 = vmatmul.f32.gmra.mxu0 %v2276
    %v2278 = vpop.f32.mrf.mxu0
    %v2279 = vadd.f32 %v2249, %v2278
    %2280 = vdwg.mxu0
    %2281 = vmatpush.msra.mxu0 0.0
    %2282 = vmatpush.msra.mxu0 0.0
    %2283 = vmatpush.msra.mxu0 0.0
    %2284 = vmatpush.msra.mxu0 0.0
    %2285 = vmatpush.msra.mxu0 0.0
    %2286 = vmatpush.msra.mxu0 0.0
    %2287 = vmatpush.msra.mxu0 0.0
    %2288 = vmatpush.msra.mxu0 0.0
    %2289 = vmatpush.msra.mxu0 0.0
    %2290 = vmatpush.msra.mxu0 0.0
    %2291 = vmatpush.msra.mxu0 0.0
    %2292 = vmatpush.msra.mxu0 0.0
    %v2293 = vand.u32 %v2177, 4294901760
    %2294 = vmatpush.msra.mxu0 %v2293
    %v2295 = vand.u32 %v2176, 4294901760
    %2296 = vmatpush.msra.mxu0 %v2295
    %v2297 = vand.u32 %v2175, 4294901760
    %2298 = vmatpush.msra.mxu0 %v2297
    %v2299 = vand.u32 %v2174, 4294901760
    %2300 = vmatpush.msra.mxu0 %v2299
    %v2301 = vand.u32 %v2179, 4294901760
    %v2302 = vsub.f32 %v2179, %v2301
    %v2303 = vand.u32 %v2302, 4294901760
    %2304 = vmatmul.f32.gmra.mxu0 %v2303
    %v2305 = vpop.f32.mrf.mxu0
    %v2306 = vadd.f32 %v2279, %v2305
    %2307 = vdwg.mxu0
    %2308 = vmatpush.msra.mxu0 0.0
    %2309 = vmatpush.msra.mxu0 0.0
    %2310 = vmatpush.msra.mxu0 0.0
    %2311 = vmatpush.msra.mxu0 0.0
    %2312 = vmatpush.msra.mxu0 0.0
    %2313 = vmatpush.msra.mxu0 0.0
    %2314 = vmatpush.msra.mxu0 0.0
    %2315 = vmatpush.msra.mxu0 0.0
    %2316 = vmatpush.msra.mxu0 0.0
    %2317 = vmatpush.msra.mxu0 0.0
    %2318 = vmatpush.msra.mxu0 0.0
    %2319 = vmatpush.msra.mxu0 0.0
    %v2320 = vand.u32 %v2177, 4294901760
    %v2321 = vsub.f32 %v2177, %v2320
    %v2322 = vand.u32 %v2321, 4294901760
    %2323 = vmatpush.msra.mxu0 %v2322
    %v2324 = vand.u32 %v2176, 4294901760
    %v2325 = vsub.f32 %v2176, %v2324
    %v2326 = vand.u32 %v2325, 4294901760
    %2327 = vmatpush.msra.mxu0 %v2326
    %v2328 = vand.u32 %v2175, 4294901760
    %v2329 = vsub.f32 %v2175, %v2328
    %v2330 = vand.u32 %v2329, 4294901760
    %2331 = vmatpush.msra.mxu0 %v2330
    %v2332 = vand.u32 %v2174, 4294901760
    %v2333 = vsub.f32 %v2174, %v2332
    %v2334 = vand.u32 %v2333, 4294901760
    %2335 = vmatpush.msra.mxu0 %v2334
    %v2336 = vand.u32 %v2179, 4294901760
    %2337 = vmatmul.f32.gmra.mxu0 %v2336
    %v2338 = vpop.f32.mrf.mxu0
    %v2339 = vadd.f32 %v2306, %v2338
    %2340 = vdwg.mxu0
    %2341 = vmatpush.msra.mxu0 0.0
    %2342 = vmatpush.msra.mxu0 0.0
    %2343 = vmatpush.msra.mxu0 0.0
    %2344 = vmatpush.msra.mxu0 0.0
    %2345 = vmatpush.msra.mxu0 0.0
    %2346 = vmatpush.msra.mxu0 0.0
    %2347 = vmatpush.msra.mxu0 0.0
    %2348 = vmatpush.msra.mxu0 0.0
    %2349 = vmatpush.msra.mxu0 0.0
    %2350 = vmatpush.msra.mxu0 0.0
    %2351 = vmatpush.msra.mxu0 0.0
    %2352 = vmatpush.msra.mxu0 0.0
    %v2353 = vand.u32 %v2177, 4294901760
    %2354 = vmatpush.msra.mxu0 %v2353
    %v2355 = vand.u32 %v2176, 4294901760
    %2356 = vmatpush.msra.mxu0 %v2355
    %v2357 = vand.u32 %v2175, 4294901760
    %2358 = vmatpush.msra.mxu0 %v2357
    %v2359 = vand.u32 %v2174, 4294901760
    %2360 = vmatpush.msra.mxu0 %v2359
    %v2361 = vand.u32 %v2179, 4294901760
    %2362 = vmatmul.f32.gmra.mxu0 %v2361
    %v2363 = vpop.f32.mrf.mxu0
    %v2364 = vadd.f32 %v2339, %v2363
    %2365 = vdwg.mxu0
    %v2367 = vsel %vm123, %v1843, 0
    %2369 = vmatpush.msra.mxu0 0.0
    %2370 = vmatpush.msra.mxu0 0.0
    %2371 = vmatpush.msra.mxu0 0.0
    %2372 = vmatpush.msra.mxu0 0.0
    %2373 = vmatpush.msra.mxu0 0.0
    %2374 = vmatpush.msra.mxu0 0.0
    %2375 = vmatpush.msra.mxu0 0.0
    %2376 = vmatpush.msra.mxu0 0.0
    %2377 = vmatpush.msra.mxu0 0.0
    %2378 = vmatpush.msra.mxu0 0.0
    %2379 = vmatpush.msra.mxu0 0.0
    %2380 = vmatpush.msra.mxu0 0.0
    %v2381 = vand.u32 %v1847, 4294901760
    %2382 = vmatpush.msra.mxu0 %v2381
    %v2383 = vand.u32 %v1846, 4294901760
    %2384 = vmatpush.msra.mxu0 %v2383
    %v2385 = vand.u32 %v1845, 4294901760
    %2386 = vmatpush.msra.mxu0 %v2385
    %v2387 = vand.u32 %v1844, 4294901760
    %2388 = vmatpush.msra.mxu0 %v2387
    %v2389 = vand.u32 %v2367, 4294901760
    %v2390 = vsub.f32 %v2367, %v2389
    %v2391 = vand.u32 %v2390, 4294901760
    %v2392 = vsub.f32 %v2390, %v2391
    %v2393 = vand.u32 %v2392, 4294901760
    %2394 = vmatmul.f32.gmra.mxu0 %v2393
    %v2395 = vpop.f32.mrf.mxu0
    %v2396 = vadd.f32 %v2364, %v2395
    %2397 = vdwg.mxu0
    %2398 = vmatpush.msra.mxu0 0.0
    %2399 = vmatpush.msra.mxu0 0.0
    %2400 = vmatpush.msra.mxu0 0.0
    %2401 = vmatpush.msra.mxu0 0.0
    %2402 = vmatpush.msra.mxu0 0.0
    %2403 = vmatpush.msra.mxu0 0.0
    %2404 = vmatpush.msra.mxu0 0.0
    %2405 = vmatpush.msra.mxu0 0.0
    %2406 = vmatpush.msra.mxu0 0.0
    %2407 = vmatpush.msra.mxu0 0.0
    %2408 = vmatpush.msra.mxu0 0.0
    %2409 = vmatpush.msra.mxu0 0.0
    %v2410 = vand.u32 %v1847, 4294901760
    %v2411 = vsub.f32 %v1847, %v2410
    %v2412 = vand.u32 %v2411, 4294901760
    %v2413 = vsub.f32 %v2411, %v2412
    %v2414 = vand.u32 %v2413, 4294901760
    %2415 = vmatpush.msra.mxu0 %v2414
    %v2416 = vand.u32 %v1846, 4294901760
    %v2417 = vsub.f32 %v1846, %v2416
    %v2418 = vand.u32 %v2417, 4294901760
    %v2419 = vsub.f32 %v2417, %v2418
    %v2420 = vand.u32 %v2419, 4294901760
    %2421 = vmatpush.msra.mxu0 %v2420
    %v2422 = vand.u32 %v1845, 4294901760
    %v2423 = vsub.f32 %v1845, %v2422
    %v2424 = vand.u32 %v2423, 4294901760
    %v2425 = vsub.f32 %v2423, %v2424
    %v2426 = vand.u32 %v2425, 4294901760
    %2427 = vmatpush.msra.mxu0 %v2426
    %v2428 = vand.u32 %v1844, 4294901760
    %v2429 = vsub.f32 %v1844, %v2428
    %v2430 = vand.u32 %v2429, 4294901760
    %v2431 = vsub.f32 %v2429, %v2430
    %v2432 = vand.u32 %v2431, 4294901760
    %2433 = vmatpush.msra.mxu0 %v2432
    %v2434 = vand.u32 %v2367, 4294901760
    %2435 = vmatmul.f32.gmra.mxu0 %v2434
    %v2436 = vpop.f32.mrf.mxu0
    %v2437 = vadd.f32 %v2396, %v2436
    %2438 = vdwg.mxu0
    %2439 = vmatpush.msra.mxu0 0.0
    %2440 = vmatpush.msra.mxu0 0.0
    %2441 = vmatpush.msra.mxu0 0.0
    %2442 = vmatpush.msra.mxu0 0.0
    %2443 = vmatpush.msra.mxu0 0.0
    %2444 = vmatpush.msra.mxu0 0.0
    %2445 = vmatpush.msra.mxu0 0.0
    %2446 = vmatpush.msra.mxu0 0.0
    %2447 = vmatpush.msra.mxu0 0.0
    %2448 = vmatpush.msra.mxu0 0.0
    %2449 = vmatpush.msra.mxu0 0.0
    %2450 = vmatpush.msra.mxu0 0.0
    %v2451 = vand.u32 %v1847, 4294901760
    %v2452 = vsub.f32 %v1847, %v2451
    %2453 = vmatpush.msra.mxu0 %v2452
    %v2454 = vand.u32 %v1846, 4294901760
    %v2455 = vsub.f32 %v1846, %v2454
    %2456 = vmatpush.msra.mxu0 %v2455
    %v2457 = vand.u32 %v1845, 4294901760
    %v2458 = vsub.f32 %v1845, %v2457
    %2459 = vmatpush.msra.mxu0 %v2458
    %v2460 = vand.u32 %v1844, 4294901760
    %v2461 = vsub.f32 %v1844, %v2460
    %2462 = vmatpush.msra.mxu0 %v2461
    %v2463 = vand.u32 %v2367, 4294901760
    %v2464 = vsub.f32 %v2367, %v2463
    %2465 = vmatmul.f32.gmra.mxu0 %v2464
    %v2466 = vpop.f32.mrf.mxu0
    %v2467 = vadd.f32 %v2437, %v2466
    %2468 = vdwg.mxu0
    %2469 = vmatpush.msra.mxu0 0.0
    %2470 = vmatpush.msra.mxu0 0.0
    %2471 = vmatpush.msra.mxu0 0.0
    %2472 = vmatpush.msra.mxu0 0.0
    %2473 = vmatpush.msra.mxu0 0.0
    %2474 = vmatpush.msra.mxu0 0.0
    %2475 = vmatpush.msra.mxu0 0.0
    %2476 = vmatpush.msra.mxu0 0.0
    %2477 = vmatpush.msra.mxu0 0.0
    %2478 = vmatpush.msra.mxu0 0.0
    %2479 = vmatpush.msra.mxu0 0.0
    %2480 = vmatpush.msra.mxu0 0.0
    %v2481 = vand.u32 %v1847, 4294901760
    %2482 = vmatpush.msra.mxu0 %v2481
    %v2483 = vand.u32 %v1846, 4294901760
    %2484 = vmatpush.msra.mxu0 %v2483
    %v2485 = vand.u32 %v1845, 4294901760
    %2486 = vmatpush.msra.mxu0 %v2485
    %v2487 = vand.u32 %v1844, 4294901760
    %2488 = vmatpush.msra.mxu0 %v2487
    %v2489 = vand.u32 %v2367, 4294901760
    %v2490 = vsub.f32 %v2367, %v2489
    %v2491 = vand.u32 %v2490, 4294901760
    %2492 = vmatmul.f32.gmra.mxu0 %v2491
    %v2493 = vpop.f32.mrf.mxu0
    %v2494 = vadd.f32 %v2467, %v2493
    %2495 = vdwg.mxu0
    %2496 = vmatpush.msra.mxu0 0.0
    %2497 = vmatpush.msra.mxu0 0.0
    %2498 = vmatpush.msra.mxu0 0.0
    %2499 = vmatpush.msra.mxu0 0.0
    %2500 = vmatpush.msra.mxu0 0.0
    %2501 = vmatpush.msra.mxu0 0.0
    %2502 = vmatpush.msra.mxu0 0.0
    %2503 = vmatpush.msra.mxu0 0.0
    %2504 = vmatpush.msra.mxu0 0.0
    %2505 = vmatpush.msra.mxu0 0.0
    %2506 = vmatpush.msra.mxu0 0.0
    %2507 = vmatpush.msra.mxu0 0.0
    %v2508 = vand.u32 %v1847, 4294901760
    %v2509 = vsub.f32 %v1847, %v2508
    %v2510 = vand.u32 %v2509, 4294901760
    %2511 = vmatpush.msra.mxu0 %v2510
    %v2512 = vand.u32 %v1846, 4294901760
    %v2513 = vsub.f32 %v1846, %v2512
    %v2514 = vand.u32 %v2513, 4294901760
    %2515 = vmatpush.msra.mxu0 %v2514
    %v2516 = vand.u32 %v1845, 4294901760
    %v2517 = vsub.f32 %v1845, %v2516
    %v2518 = vand.u32 %v2517, 4294901760
    %2519 = vmatpush.msra.mxu0 %v2518
    %v2520 = vand.u32 %v1844, 4294901760
    %v2521 = vsub.f32 %v1844, %v2520
    %v2522 = vand.u32 %v2521, 4294901760
    %2523 = vmatpush.msra.mxu0 %v2522
    %v2524 = vand.u32 %v2367, 4294901760
    %2525 = vmatmul.f32.gmra.mxu0 %v2524
    %v2526 = vpop.f32.mrf.mxu0
    %v2527 = vadd.f32 %v2494, %v2526
    %2528 = vdwg.mxu0
    %2529 = vmatpush.msra.mxu0 0.0
    %2530 = vmatpush.msra.mxu0 0.0
    %2531 = vmatpush.msra.mxu0 0.0
    %2532 = vmatpush.msra.mxu0 0.0
    %2533 = vmatpush.msra.mxu0 0.0
    %2534 = vmatpush.msra.mxu0 0.0
    %2535 = vmatpush.msra.mxu0 0.0
    %2536 = vmatpush.msra.mxu0 0.0
    %2537 = vmatpush.msra.mxu0 0.0
    %2538 = vmatpush.msra.mxu0 0.0
    %2539 = vmatpush.msra.mxu0 0.0
    %2540 = vmatpush.msra.mxu0 0.0
    %v2541 = vand.u32 %v1847, 4294901760
    %2542 = vmatpush.msra.mxu0 %v2541
    %v2543 = vand.u32 %v1846, 4294901760
    %2544 = vmatpush.msra.mxu0 %v2543
    %v2545 = vand.u32 %v1845, 4294901760
    %2546 = vmatpush.msra.mxu0 %v2545
    %v2547 = vand.u32 %v1844, 4294901760
    %2548 = vmatpush.msra.mxu0 %v2547
    %v2549 = vand.u32 %v2367, 4294901760
    %2550 = vmatmul.f32.gmra.mxu0 %v2549
    %v2551 = vpop.f32.mrf.mxu0
    %v2552 = vadd.f32 %v2527, %v2551
    %2553 = vdwg.mxu0
    %2554 = vst [vmem:[#allocation13] sm:$0xff] %v2552
    %v2556 = vsel %vm123, %v852, 0
    %v2559 = vsel %vm123, %v629, 0
    %2561 = vmatpush.xpose.msra.mxu0 0.0
    %2562 = vmatpush.xpose.msra.mxu0 0.0
    %2563 = vmatpush.xpose.msra.mxu0 0.0
    %2564 = vmatpush.xpose.msra.mxu0 0.0
    %2565 = vmatpush.xpose.msra.mxu0 0.0
    %2566 = vmatpush.xpose.msra.mxu0 0.0
    %2567 = vmatpush.xpose.msra.mxu0 0.0
    %2568 = vmatpush.xpose.msra.mxu0 0.0
    %2569 = vmatpush.xpose.msra.mxu0 0.0
    %2570 = vmatpush.xpose.msra.mxu0 0.0
    %2571 = vmatpush.xpose.msra.mxu0 0.0
    %2572 = vmatpush.xpose.msra.mxu0 0.0
    %2573 = vmatpush.xpose.msra.mxu0 0.0
    %2574 = vmatpush.xpose.msra.mxu0 0.0
    %2575 = vmatpush.xpose.msra.mxu0 0.0
    %v2576 = vand.u32 %v2559, 4294901760
    %2577 = vmatpush.xpose.msra.mxu0 %v2576
    %v2578 = vand.u32 %v2556, 4294901760
    %v2579 = vsub.f32 %v2556, %v2578
    %v2580 = vand.u32 %v2579, 4294901760
    %v2581 = vsub.f32 %v2579, %v2580
    %v2582 = vand.u32 %v2581, 4294901760
    %2583 = vmatmul.f32.gmra.mxu0 %v2582
    %v2584 = vpop.f32.mrf.mxu0
    %v2585 = vadd.f32 0.0, %v2584
    %2586 = vdwg.mxu0
    %2587 = vmatpush.xpose.msra.mxu0 0.0
    %2588 = vmatpush.xpose.msra.mxu0 0.0
    %2589 = vmatpush.xpose.msra.mxu0 0.0
    %2590 = vmatpush.xpose.msra.mxu0 0.0
    %2591 = vmatpush.xpose.msra.mxu0 0.0
    %2592 = vmatpush.xpose.msra.mxu0 0.0
    %2593 = vmatpush.xpose.msra.mxu0 0.0
    %2594 = vmatpush.xpose.msra.mxu0 0.0
    %2595 = vmatpush.xpose.msra.mxu0 0.0
    %2596 = vmatpush.xpose.msra.mxu0 0.0
    %2597 = vmatpush.xpose.msra.mxu0 0.0
    %2598 = vmatpush.xpose.msra.mxu0 0.0
    %2599 = vmatpush.xpose.msra.mxu0 0.0
    %2600 = vmatpush.xpose.msra.mxu0 0.0
    %2601 = vmatpush.xpose.msra.mxu0 0.0
    %v2602 = vand.u32 %v2559, 4294901760
    %v2603 = vsub.f32 %v2559, %v2602
    %v2604 = vand.u32 %v2603, 4294901760
    %v2605 = vsub.f32 %v2603, %v2604
    %v2606 = vand.u32 %v2605, 4294901760
    %2607 = vmatpush.xpose.msra.mxu0 %v2606
    %v2608 = vand.u32 %v2556, 4294901760
    %2609 = vmatmul.f32.gmra.mxu0 %v2608
    %v2610 = vpop.f32.mrf.mxu0
    %v2611 = vadd.f32 %v2585, %v2610
    %2612 = vdwg.mxu0
    %2613 = vmatpush.xpose.msra.mxu0 0.0
    %2614 = vmatpush.xpose.msra.mxu0 0.0
    %2615 = vmatpush.xpose.msra.mxu0 0.0
    %2616 = vmatpush.xpose.msra.mxu0 0.0
    %2617 = vmatpush.xpose.msra.mxu0 0.0
    %2618 = vmatpush.xpose.msra.mxu0 0.0
    %2619 = vmatpush.xpose.msra.mxu0 0.0
    %2620 = vmatpush.xpose.msra.mxu0 0.0
    %2621 = vmatpush.xpose.msra.mxu0 0.0
    %2622 = vmatpush.xpose.msra.mxu0 0.0
    %2623 = vmatpush.xpose.msra.mxu0 0.0
    %2624 = vmatpush.xpose.msra.mxu0 0.0
    %2625 = vmatpush.xpose.msra.mxu0 0.0
    %2626 = vmatpush.xpose.msra.mxu0 0.0
    %2627 = vmatpush.xpose.msra.mxu0 0.0
    %v2628 = vand.u32 %v2559, 4294901760
    %v2629 = vsub.f32 %v2559, %v2628
    %2630 = vmatpush.xpose.msra.mxu0 %v2629
    %v2631 = vand.u32 %v2556, 4294901760
    %v2632 = vsub.f32 %v2556, %v2631
    %2633 = vmatmul.f32.gmra.mxu0 %v2632
    %v2634 = vpop.f32.mrf.mxu0
    %v2635 = vadd.f32 %v2611, %v2634
    %2636 = vdwg.mxu0
    %2637 = vmatpush.xpose.msra.mxu0 0.0
    %2638 = vmatpush.xpose.msra.mxu0 0.0
    %2639 = vmatpush.xpose.msra.mxu0 0.0
    %2640 = vmatpush.xpose.msra.mxu0 0.0
    %2641 = vmatpush.xpose.msra.mxu0 0.0
    %2642 = vmatpush.xpose.msra.mxu0 0.0
    %2643 = vmatpush.xpose.msra.mxu0 0.0
    %2644 = vmatpush.xpose.msra.mxu0 0.0
    %2645 = vmatpush.xpose.msra.mxu0 0.0
    %2646 = vmatpush.xpose.msra.mxu0 0.0
    %2647 = vmatpush.xpose.msra.mxu0 0.0
    %2648 = vmatpush.xpose.msra.mxu0 0.0
    %2649 = vmatpush.xpose.msra.mxu0 0.0
    %2650 = vmatpush.xpose.msra.mxu0 0.0
    %2651 = vmatpush.xpose.msra.mxu0 0.0
    %v2652 = vand.u32 %v2559, 4294901760
    %2653 = vmatpush.xpose.msra.mxu0 %v2652
    %v2654 = vand.u32 %v2556, 4294901760
    %v2655 = vsub.f32 %v2556, %v2654
    %v2656 = vand.u32 %v2655, 4294901760
    %2657 = vmatmul.f32.gmra.mxu0 %v2656
    %v2658 = vpop.f32.mrf.mxu0
    %v2659 = vadd.f32 %v2635, %v2658
    %2660 = vdwg.mxu0
    %2661 = vmatpush.xpose.msra.mxu0 0.0
    %2662 = vmatpush.xpose.msra.mxu0 0.0
    %2663 = vmatpush.xpose.msra.mxu0 0.0
    %2664 = vmatpush.xpose.msra.mxu0 0.0
    %2665 = vmatpush.xpose.msra.mxu0 0.0
    %2666 = vmatpush.xpose.msra.mxu0 0.0
    %2667 = vmatpush.xpose.msra.mxu0 0.0
    %2668 = vmatpush.xpose.msra.mxu0 0.0
    %2669 = vmatpush.xpose.msra.mxu0 0.0
    %2670 = vmatpush.xpose.msra.mxu0 0.0
    %2671 = vmatpush.xpose.msra.mxu0 0.0
    %2672 = vmatpush.xpose.msra.mxu0 0.0
    %2673 = vmatpush.xpose.msra.mxu0 0.0
    %2674 = vmatpush.xpose.msra.mxu0 0.0
    %2675 = vmatpush.xpose.msra.mxu0 0.0
    %v2676 = vand.u32 %v2559, 4294901760
    %v2677 = vsub.f32 %v2559, %v2676
    %v2678 = vand.u32 %v2677, 4294901760
    %2679 = vmatpush.xpose.msra.mxu0 %v2678
    %v2680 = vand.u32 %v2556, 4294901760
    %2681 = vmatmul.f32.gmra.mxu0 %v2680
    %v2682 = vpop.f32.mrf.mxu0
    %v2683 = vadd.f32 %v2659, %v2682
    %2684 = vdwg.mxu0
    %2685 = vmatpush.xpose.msra.mxu0 0.0
    %2686 = vmatpush.xpose.msra.mxu0 0.0
    %2687 = vmatpush.xpose.msra.mxu0 0.0
    %2688 = vmatpush.xpose.msra.mxu0 0.0
    %2689 = vmatpush.xpose.msra.mxu0 0.0
    %2690 = vmatpush.xpose.msra.mxu0 0.0
    %2691 = vmatpush.xpose.msra.mxu0 0.0
    %2692 = vmatpush.xpose.msra.mxu0 0.0
    %2693 = vmatpush.xpose.msra.mxu0 0.0
    %2694 = vmatpush.xpose.msra.mxu0 0.0
    %2695 = vmatpush.xpose.msra.mxu0 0.0
    %2696 = vmatpush.xpose.msra.mxu0 0.0
    %2697 = vmatpush.xpose.msra.mxu0 0.0
    %2698 = vmatpush.xpose.msra.mxu0 0.0
    %2699 = vmatpush.xpose.msra.mxu0 0.0
    %v2700 = vand.u32 %v2559, 4294901760
    %2701 = vmatpush.xpose.msra.mxu0 %v2700
    %v2702 = vand.u32 %v2556, 4294901760
    %2703 = vmatmul.f32.gmra.mxu0 %v2702
    %v2704 = vpop.f32.mrf.mxu0
    %v2705 = vadd.f32 %v2683, %v2704
    %2706 = vdwg.mxu0
    %v2707 = vsel %vm1670, %v2705, -inf
    %2708 = vmax.xlane.f32.xlu0 %v2707
    %v2709 = vpop.xlane.xlu0 %2708
    %v2710 = vsub.f32 %v2705, %v2709
    %v2711 = vmul.f32 %v2710, 1.442695
    %v2712 = vpow.pop %v2711
    %v2713 = vsel %vm1670, %v2712, 0.0
    %2714 = vadd.xlane.f32.xlu0 %v2713
    %v2715 = vpop.xlane.xlu0 %2714
    %v2717 = vsel %vm1670, %v2712, 0
    %2719 = vmatpush.msra.mxu0 0.0
    %2720 = vmatpush.msra.mxu0 0.0
    %2721 = vmatpush.msra.mxu0 0.0
    %2722 = vmatpush.msra.mxu0 0.0
    %2723 = vmatpush.msra.mxu0 0.0
    %2724 = vmatpush.msra.mxu0 0.0
    %2725 = vmatpush.msra.mxu0 0.0
    %2726 = vmatpush.msra.mxu0 0.0
    %2727 = vmatpush.msra.mxu0 0.0
    %2728 = vmatpush.msra.mxu0 0.0
    %2729 = vmatpush.msra.mxu0 0.0
    %2730 = vmatpush.msra.mxu0 0.0
    %2731 = vmatpush.msra.mxu0 0.0
    %2732 = vmatpush.msra.mxu0 0.0
    %2733 = vmatpush.msra.mxu0 0.0
    %v2734 = vand.u32 %v849, 4294901760
    %2735 = vmatpush.msra.mxu0 %v2734
    %v2736 = vand.u32 %v2717, 4294901760
    %v2737 = vsub.f32 %v2717, %v2736
    %v2738 = vand.u32 %v2737, 4294901760
    %v2739 = vsub.f32 %v2737, %v2738
    %v2740 = vand.u32 %v2739, 4294901760
    %2741 = vmatmul.f32.gmra.mxu0 %v2740
    %v2742 = vpop.f32.mrf.mxu0
    %v2743 = vadd.f32 0.0, %v2742
    %2744 = vdwg.mxu0
    %2745 = vmatpush.msra.mxu0 0.0
    %2746 = vmatpush.msra.mxu0 0.0
    %2747 = vmatpush.msra.mxu0 0.0
    %2748 = vmatpush.msra.mxu0 0.0
    %2749 = vmatpush.msra.mxu0 0.0
    %2750 = vmatpush.msra.mxu0 0.0
    %2751 = vmatpush.msra.mxu0 0.0
    %2752 = vmatpush.msra.mxu0 0.0
    %2753 = vmatpush.msra.mxu0 0.0
    %2754 = vmatpush.msra.mxu0 0.0
    %2755 = vmatpush.msra.mxu0 0.0
    %2756 = vmatpush.msra.mxu0 0.0
    %2757 = vmatpush.msra.mxu0 0.0
    %2758 = vmatpush.msra.mxu0 0.0
    %2759 = vmatpush.msra.mxu0 0.0
    %v2760 = vand.u32 %v849, 4294901760
    %v2761 = vsub.f32 %v849, %v2760
    %v2762 = vand.u32 %v2761, 4294901760
    %v2763 = vsub.f32 %v2761, %v2762
    %v2764 = vand.u32 %v2763, 4294901760
    %2765 = vmatpush.msra.mxu0 %v2764
    %v2766 = vand.u32 %v2717, 4294901760
    %2767 = vmatmul.f32.gmra.mxu0 %v2766
    %v2768 = vpop.f32.mrf.mxu0
    %v2769 = vadd.f32 %v2743, %v2768
    %2770 = vdwg.mxu0
    %2771 = vmatpush.msra.mxu0 0.0
    %2772 = vmatpush.msra.mxu0 0.0
    %2773 = vmatpush.msra.mxu0 0.0
    %2774 = vmatpush.msra.mxu0 0.0
    %2775 = vmatpush.msra.mxu0 0.0
    %2776 = vmatpush.msra.mxu0 0.0
    %2777 = vmatpush.msra.mxu0 0.0
    %2778 = vmatpush.msra.mxu0 0.0
    %2779 = vmatpush.msra.mxu0 0.0
    %2780 = vmatpush.msra.mxu0 0.0
    %2781 = vmatpush.msra.mxu0 0.0
    %2782 = vmatpush.msra.mxu0 0.0
    %2783 = vmatpush.msra.mxu0 0.0
    %2784 = vmatpush.msra.mxu0 0.0
    %2785 = vmatpush.msra.mxu0 0.0
    %v2786 = vand.u32 %v849, 4294901760
    %v2787 = vsub.f32 %v849, %v2786
    %2788 = vmatpush.msra.mxu0 %v2787
    %v2789 = vand.u32 %v2717, 4294901760
    %v2790 = vsub.f32 %v2717, %v2789
    %2791 = vmatmul.f32.gmra.mxu0 %v2790
    %v2792 = vpop.f32.mrf.mxu0
    %v2793 = vadd.f32 %v2769, %v2792
    %2794 = vdwg.mxu0
    %2795 = vmatpush.msra.mxu0 0.0
    %2796 = vmatpush.msra.mxu0 0.0
    %2797 = vmatpush.msra.mxu0 0.0
    %2798 = vmatpush.msra.mxu0 0.0
    %2799 = vmatpush.msra.mxu0 0.0
    %2800 = vmatpush.msra.mxu0 0.0
    %2801 = vmatpush.msra.mxu0 0.0
    %2802 = vmatpush.msra.mxu0 0.0
    %2803 = vmatpush.msra.mxu0 0.0
    %2804 = vmatpush.msra.mxu0 0.0
    %2805 = vmatpush.msra.mxu0 0.0
    %2806 = vmatpush.msra.mxu0 0.0
    %2807 = vmatpush.msra.mxu0 0.0
    %2808 = vmatpush.msra.mxu0 0.0
    %2809 = vmatpush.msra.mxu0 0.0
    %v2810 = vand.u32 %v849, 4294901760
    %2811 = vmatpush.msra.mxu0 %v2810
    %v2812 = vand.u32 %v2717, 4294901760
    %v2813 = vsub.f32 %v2717, %v2812
    %v2814 = vand.u32 %v2813, 4294901760
    %2815 = vmatmul.f32.gmra.mxu0 %v2814
    %v2816 = vpop.f32.mrf.mxu0
    %v2817 = vadd.f32 %v2793, %v2816
    %2818 = vdwg.mxu0
    %2819 = vmatpush.msra.mxu0 0.0
    %2820 = vmatpush.msra.mxu0 0.0
    %2821 = vmatpush.msra.mxu0 0.0
    %2822 = vmatpush.msra.mxu0 0.0
    %2823 = vmatpush.msra.mxu0 0.0
    %2824 = vmatpush.msra.mxu0 0.0
    %2825 = vmatpush.msra.mxu0 0.0
    %2826 = vmatpush.msra.mxu0 0.0
    %2827 = vmatpush.msra.mxu0 0.0
    %2828 = vmatpush.msra.mxu0 0.0
    %2829 = vmatpush.msra.mxu0 0.0
    %2830 = vmatpush.msra.mxu0 0.0
    %2831 = vmatpush.msra.mxu0 0.0
    %2832 = vmatpush.msra.mxu0 0.0
    %2833 = vmatpush.msra.mxu0 0.0
    %v2834 = vand.u32 %v849, 4294901760
    %v2835 = vsub.f32 %v849, %v2834
    %v2836 = vand.u32 %v2835, 4294901760
    %2837 = vmatpush.msra.mxu0 %v2836
    %v2838 = vand.u32 %v2717, 4294901760
    %2839 = vmatmul.f32.gmra.mxu0 %v2838
    %v2840 = vpop.f32.mrf.mxu0
    %v2841 = vadd.f32 %v2817, %v2840
    %2842 = vdwg.mxu0
    %2843 = vmatpush.msra.mxu0 0.0
    %2844 = vmatpush.msra.mxu0 0.0
    %2845 = vmatpush.msra.mxu0 0.0
    %2846 = vmatpush.msra.mxu0 0.0
    %2847 = vmatpush.msra.mxu0 0.0
    %2848 = vmatpush.msra.mxu0 0.0
    %2849 = vmatpush.msra.mxu0 0.0
    %2850 = vmatpush.msra.mxu0 0.0
    %2851 = vmatpush.msra.mxu0 0.0
    %2852 = vmatpush.msra.mxu0 0.0
    %2853 = vmatpush.msra.mxu0 0.0
    %2854 = vmatpush.msra.mxu0 0.0
    %2855 = vmatpush.msra.mxu0 0.0
    %2856 = vmatpush.msra.mxu0 0.0
    %2857 = vmatpush.msra.mxu0 0.0
    %v2858 = vand.u32 %v849, 4294901760
    %2859 = vmatpush.msra.mxu0 %v2858
    %v2860 = vand.u32 %v2717, 4294901760
    %2861 = vmatmul.f32.gmra.mxu0 %v2860
    %v2862 = vpop.f32.mrf.mxu0
    %v2863 = vadd.f32 %v2841, %v2862
    %2864 = vdwg.mxu0
    %v2865 = vrcp.pop %v2715
    %v2866 = vmul.f32 %v2715, %v2865
    %v2867 = vsub.f32 1.0, %v2866
    %v2868 = vmul.f32 %v2865, %v2867
    %v2869 = vadd.f32 %v2865, %v2868
    %vm2870 = vweird.f32 %v2715
    %vm2871 = vweird.f32 %v2865
    %vm2872 = vmor %vm2870, %vm2871
    %v2873 = vsel %vm2872, %v2865, %v2869
    %v2874 = vand.u32 2147483647, %v2715
    %vm2875 = vcmp.eq.f32.partialorder %v2874, 8.507059e+37
    %v2876 = vand.u32 %v2715, 2147483648
    %v2877 = vor.u32 1.1754944e-38, %v2876
    %v2878 = vsel %vm2875, %v2877, %v2873
    %v2879 = vmul.f32 %v2863, %v2878
    %v2880 = vld [vmem:[#allocation11] sm:$0xff]
    %v2881 = vld [vmem:[#allocation11 + $0x8] sm:$0xff]
    %v2882 = vld [vmem:[#allocation11 + $0x10] sm:$0xff]
    %v2883 = vld [vmem:[#allocation11 + $0x18] sm:$0xff]
    %v2885 = vsel %vm123, %v1517, 0
    %v2888 = vsel %vm123, %v1293, 0
    %2890 = vmatpush.xpose.msra.mxu0 0.0
    %2891 = vmatpush.xpose.msra.mxu0 0.0
    %2892 = vmatpush.xpose.msra.mxu0 0.0
    %2893 = vmatpush.xpose.msra.mxu0 0.0
    %2894 = vmatpush.xpose.msra.mxu0 0.0
    %2895 = vmatpush.xpose.msra.mxu0 0.0
    %2896 = vmatpush.xpose.msra.mxu0 0.0
    %2897 = vmatpush.xpose.msra.mxu0 0.0
    %2898 = vmatpush.xpose.msra.mxu0 0.0
    %2899 = vmatpush.xpose.msra.mxu0 0.0
    %2900 = vmatpush.xpose.msra.mxu0 0.0
    %2901 = vmatpush.xpose.msra.mxu0 0.0
    %2902 = vmatpush.xpose.msra.mxu0 0.0
    %2903 = vmatpush.xpose.msra.mxu0 0.0
    %2904 = vmatpush.xpose.msra.mxu0 0.0
    %v2905 = vand.u32 %v2888, 4294901760
    %2906 = vmatpush.xpose.msra.mxu0 %v2905
    %v2907 = vand.u32 %v2885, 4294901760
    %v2908 = vsub.f32 %v2885, %v2907
    %v2909 = vand.u32 %v2908, 4294901760
    %v2910 = vsub.f32 %v2908, %v2909
    %v2911 = vand.u32 %v2910, 4294901760
    %2912 = vmatmul.f32.gmra.mxu0 %v2911
    %v2913 = vpop.f32.mrf.mxu0
    %v2914 = vadd.f32 0.0, %v2913
    %2915 = vdwg.mxu0
    %2916 = vmatpush.xpose.msra.mxu0 0.0
    %2917 = vmatpush.xpose.msra.mxu0 0.0
    %2918 = vmatpush.xpose.msra.mxu0 0.0
    %2919 = vmatpush.xpose.msra.mxu0 0.0
    %2920 = vmatpush.xpose.msra.mxu0 0.0
    %2921 = vmatpush.xpose.msra.mxu0 0.0
    %2922 = vmatpush.xpose.msra.mxu0 0.0
    %2923 = vmatpush.xpose.msra.mxu0 0.0
    %2924 = vmatpush.xpose.msra.mxu0 0.0
    %2925 = vmatpush.xpose.msra.mxu0 0.0
    %2926 = vmatpush.xpose.msra.mxu0 0.0
    %2927 = vmatpush.xpose.msra.mxu0 0.0
    %2928 = vmatpush.xpose.msra.mxu0 0.0
    %2929 = vmatpush.xpose.msra.mxu0 0.0
    %2930 = vmatpush.xpose.msra.mxu0 0.0
    %v2931 = vand.u32 %v2888, 4294901760
    %v2932 = vsub.f32 %v2888, %v2931
    %v2933 = vand.u32 %v2932, 4294901760
    %v2934 = vsub.f32 %v2932, %v2933
    %v2935 = vand.u32 %v2934, 4294901760
    %2936 = vmatpush.xpose.msra.mxu0 %v2935
    %v2937 = vand.u32 %v2885, 4294901760
    %2938 = vmatmul.f32.gmra.mxu0 %v2937
    %v2939 = vpop.f32.mrf.mxu0
    %v2940 = vadd.f32 %v2914, %v2939
    %2941 = vdwg.mxu0
    %2942 = vmatpush.xpose.msra.mxu0 0.0
    %2943 = vmatpush.xpose.msra.mxu0 0.0
    %2944 = vmatpush.xpose.msra.mxu0 0.0
    %2945 = vmatpush.xpose.msra.mxu0 0.0
    %2946 = vmatpush.xpose.msra.mxu0 0.0
    %2947 = vmatpush.xpose.msra.mxu0 0.0
    %2948 = vmatpush.xpose.msra.mxu0 0.0
    %2949 = vmatpush.xpose.msra.mxu0 0.0
    %2950 = vmatpush.xpose.msra.mxu0 0.0
    %2951 = vmatpush.xpose.msra.mxu0 0.0
    %2952 = vmatpush.xpose.msra.mxu0 0.0
    %2953 = vmatpush.xpose.msra.mxu0 0.0
    %2954 = vmatpush.xpose.msra.mxu0 0.0
    %2955 = vmatpush.xpose.msra.mxu0 0.0
    %2956 = vmatpush.xpose.msra.mxu0 0.0
    %v2957 = vand.u32 %v2888, 4294901760
    %v2958 = vsub.f32 %v2888, %v2957
    %2959 = vmatpush.xpose.msra.mxu0 %v2958
    %v2960 = vand.u32 %v2885, 4294901760
    %v2961 = vsub.f32 %v2885, %v2960
    %2962 = vmatmul.f32.gmra.mxu0 %v2961
    %v2963 = vpop.f32.mrf.mxu0
    %v2964 = vadd.f32 %v2940, %v2963
    %2965 = vdwg.mxu0
    %2966 = vmatpush.xpose.msra.mxu0 0.0
    %2967 = vmatpush.xpose.msra.mxu0 0.0
    %2968 = vmatpush.xpose.msra.mxu0 0.0
    %2969 = vmatpush.xpose.msra.mxu0 0.0
    %2970 = vmatpush.xpose.msra.mxu0 0.0
    %2971 = vmatpush.xpose.msra.mxu0 0.0
    %2972 = vmatpush.xpose.msra.mxu0 0.0
    %2973 = vmatpush.xpose.msra.mxu0 0.0
    %2974 = vmatpush.xpose.msra.mxu0 0.0
    %2975 = vmatpush.xpose.msra.mxu0 0.0
    %2976 = vmatpush.xpose.msra.mxu0 0.0
    %2977 = vmatpush.xpose.msra.mxu0 0.0
    %2978 = vmatpush.xpose.msra.mxu0 0.0
    %2979 = vmatpush.xpose.msra.mxu0 0.0
    %2980 = vmatpush.xpose.msra.mxu0 0.0
    %v2981 = vand.u32 %v2888, 4294901760
    %2982 = vmatpush.xpose.msra.mxu0 %v2981
    %v2983 = vand.u32 %v2885, 4294901760
    %v2984 = vsub.f32 %v2885, %v2983
    %v2985 = vand.u32 %v2984, 4294901760
    %2986 = vmatmul.f32.gmra.mxu0 %v2985
    %v2987 = vpop.f32.mrf.mxu0
    %v2988 = vadd.f32 %v2964, %v2987
    %2989 = vdwg.mxu0
    %2990 = vmatpush.xpose.msra.mxu0 0.0
    %2991 = vmatpush.xpose.msra.mxu0 0.0
    %2992 = vmatpush.xpose.msra.mxu0 0.0
    %2993 = vmatpush.xpose.msra.mxu0 0.0
    %2994 = vmatpush.xpose.msra.mxu0 0.0
    %2995 = vmatpush.xpose.msra.mxu0 0.0
    %2996 = vmatpush.xpose.msra.mxu0 0.0
    %2997 = vmatpush.xpose.msra.mxu0 0.0
    %2998 = vmatpush.xpose.msra.mxu0 0.0
    %2999 = vmatpush.xpose.msra.mxu0 0.0
    %3000 = vmatpush.xpose.msra.mxu0 0.0
    %3001 = vmatpush.xpose.msra.mxu0 0.0
    %3002 = vmatpush.xpose.msra.mxu0 0.0
    %3003 = vmatpush.xpose.msra.mxu0 0.0
    %3004 = vmatpush.xpose.msra.mxu0 0.0
    %v3005 = vand.u32 %v2888, 4294901760
    %v3006 = vsub.f32 %v2888, %v3005
    %v3007 = vand.u32 %v3006, 4294901760
    %3008 = vmatpush.xpose.msra.mxu0 %v3007
    %v3009 = vand.u32 %v2885, 4294901760
    %3010 = vmatmul.f32.gmra.mxu0 %v3009
    %v3011 = vpop.f32.mrf.mxu0
    %v3012 = vadd.f32 %v2988, %v3011
    %3013 = vdwg.mxu0
    %3014 = vmatpush.xpose.msra.mxu0 0.0
    %3015 = vmatpush.xpose.msra.mxu0 0.0
    %3016 = vmatpush.xpose.msra.mxu0 0.0
    %3017 = vmatpush.xpose.msra.mxu0 0.0
    %3018 = vmatpush.xpose.msra.mxu0 0.0
    %3019 = vmatpush.xpose.msra.mxu0 0.0
    %3020 = vmatpush.xpose.msra.mxu0 0.0
    %3021 = vmatpush.xpose.msra.mxu0 0.0
    %3022 = vmatpush.xpose.msra.mxu0 0.0
    %3023 = vmatpush.xpose.msra.mxu0 0.0
    %3024 = vmatpush.xpose.msra.mxu0 0.0
    %3025 = vmatpush.xpose.msra.mxu0 0.0
    %3026 = vmatpush.xpose.msra.mxu0 0.0
    %3027 = vmatpush.xpose.msra.mxu0 0.0
    %3028 = vmatpush.xpose.msra.mxu0 0.0
    %v3029 = vand.u32 %v2888, 4294901760
    %3030 = vmatpush.xpose.msra.mxu0 %v3029
    %v3031 = vand.u32 %v2885, 4294901760
    %3032 = vmatmul.f32.gmra.mxu0 %v3031
    %v3033 = vpop.f32.mrf.mxu0
    %v3034 = vadd.f32 %v3012, %v3033
    %3035 = vdwg.mxu0
    %v3036 = vsel %vm1670, %v3034, -inf
    %3037 = vmax.xlane.f32.xlu0 %v3036
    %v3038 = vpop.xlane.xlu0 %3037
    %v3039 = vsub.f32 %v3034, %v3038
    %v3040 = vmul.f32 %v3039, 1.442695
    %v3041 = vpow.pop %v3040
    %v3042 = vsel %vm1670, %v3041, 0.0
    %3043 = vadd.xlane.f32.xlu0 %v3042
    %v3044 = vpop.xlane.xlu0 %3043
    %v3046 = vsel %vm1670, %v3041, 0
    %3048 = vmatpush.msra.mxu0 0.0
    %3049 = vmatpush.msra.mxu0 0.0
    %3050 = vmatpush.msra.mxu0 0.0
    %3051 = vmatpush.msra.mxu0 0.0
    %3052 = vmatpush.msra.mxu0 0.0
    %3053 = vmatpush.msra.mxu0 0.0
    %3054 = vmatpush.msra.mxu0 0.0
    %3055 = vmatpush.msra.mxu0 0.0
    %3056 = vmatpush.msra.mxu0 0.0
    %3057 = vmatpush.msra.mxu0 0.0
    %3058 = vmatpush.msra.mxu0 0.0
    %3059 = vmatpush.msra.mxu0 0.0
    %3060 = vmatpush.msra.mxu0 0.0
    %3061 = vmatpush.msra.mxu0 0.0
    %3062 = vmatpush.msra.mxu0 0.0
    %v3063 = vand.u32 %v1514, 4294901760
    %3064 = vmatpush.msra.mxu0 %v3063
    %v3065 = vand.u32 %v3046, 4294901760
    %v3066 = vsub.f32 %v3046, %v3065
    %v3067 = vand.u32 %v3066, 4294901760
    %v3068 = vsub.f32 %v3066, %v3067
    %v3069 = vand.u32 %v3068, 4294901760
    %3070 = vmatmul.f32.gmra.mxu0 %v3069
    %v3071 = vpop.f32.mrf.mxu0
    %v3072 = vadd.f32 0.0, %v3071
    %3073 = vdwg.mxu0
    %3074 = vmatpush.msra.mxu0 0.0
    %3075 = vmatpush.msra.mxu0 0.0
    %3076 = vmatpush.msra.mxu0 0.0
    %3077 = vmatpush.msra.mxu0 0.0
    %3078 = vmatpush.msra.mxu0 0.0
    %3079 = vmatpush.msra.mxu0 0.0
    %3080 = vmatpush.msra.mxu0 0.0
    %3081 = vmatpush.msra.mxu0 0.0
    %3082 = vmatpush.msra.mxu0 0.0
    %3083 = vmatpush.msra.mxu0 0.0
    %3084 = vmatpush.msra.mxu0 0.0
    %3085 = vmatpush.msra.mxu0 0.0
    %3086 = vmatpush.msra.mxu0 0.0
    %3087 = vmatpush.msra.mxu0 0.0
    %3088 = vmatpush.msra.mxu0 0.0
    %v3089 = vand.u32 %v1514, 4294901760
    %v3090 = vsub.f32 %v1514, %v3089
    %v3091 = vand.u32 %v3090, 4294901760
    %v3092 = vsub.f32 %v3090, %v3091
    %v3093 = vand.u32 %v3092, 4294901760
    %3094 = vmatpush.msra.mxu0 %v3093
    %v3095 = vand.u32 %v3046, 4294901760
    %3096 = vmatmul.f32.gmra.mxu0 %v3095
    %v3097 = vpop.f32.mrf.mxu0
    %v3098 = vadd.f32 %v3072, %v3097
    %3099 = vdwg.mxu0
    %3100 = vmatpush.msra.mxu0 0.0
    %3101 = vmatpush.msra.mxu0 0.0
    %3102 = vmatpush.msra.mxu0 0.0
    %3103 = vmatpush.msra.mxu0 0.0
    %3104 = vmatpush.msra.mxu0 0.0
    %3105 = vmatpush.msra.mxu0 0.0
    %3106 = vmatpush.msra.mxu0 0.0
    %3107 = vmatpush.msra.mxu0 0.0
    %3108 = vmatpush.msra.mxu0 0.0
    %3109 = vmatpush.msra.mxu0 0.0
    %3110 = vmatpush.msra.mxu0 0.0
    %3111 = vmatpush.msra.mxu0 0.0
    %3112 = vmatpush.msra.mxu0 0.0
    %3113 = vmatpush.msra.mxu0 0.0
    %3114 = vmatpush.msra.mxu0 0.0
    %v3115 = vand.u32 %v1514, 4294901760
    %v3116 = vsub.f32 %v1514, %v3115
    %3117 = vmatpush.msra.mxu0 %v3116
    %v3118 = vand.u32 %v3046, 4294901760
    %v3119 = vsub.f32 %v3046, %v3118
    %3120 = vmatmul.f32.gmra.mxu0 %v3119
    %v3121 = vpop.f32.mrf.mxu0
    %v3122 = vadd.f32 %v3098, %v3121
    %3123 = vdwg.mxu0
    %3124 = vmatpush.msra.mxu0 0.0
    %3125 = vmatpush.msra.mxu0 0.0
    %3126 = vmatpush.msra.mxu0 0.0
    %3127 = vmatpush.msra.mxu0 0.0
    %3128 = vmatpush.msra.mxu0 0.0
    %3129 = vmatpush.msra.mxu0 0.0
    %3130 = vmatpush.msra.mxu0 0.0
    %3131 = vmatpush.msra.mxu0 0.0
    %3132 = vmatpush.msra.mxu0 0.0
    %3133 = vmatpush.msra.mxu0 0.0
    %3134 = vmatpush.msra.mxu0 0.0
    %3135 = vmatpush.msra.mxu0 0.0
    %3136 = vmatpush.msra.mxu0 0.0
    %3137 = vmatpush.msra.mxu0 0.0
    %3138 = vmatpush.msra.mxu0 0.0
    %v3139 = vand.u32 %v1514, 4294901760
    %3140 = vmatpush.msra.mxu0 %v3139
    %v3141 = vand.u32 %v3046, 4294901760
    %v3142 = vsub.f32 %v3046, %v3141
    %v3143 = vand.u32 %v3142, 4294901760
    %3144 = vmatmul.f32.gmra.mxu0 %v3143
    %v3145 = vpop.f32.mrf.mxu0
    %v3146 = vadd.f32 %v3122, %v3145
    %3147 = vdwg.mxu0
    %3148 = vmatpush.msra.mxu0 0.0
    %3149 = vmatpush.msra.mxu0 0.0
    %3150 = vmatpush.msra.mxu0 0.0
    %3151 = vmatpush.msra.mxu0 0.0
    %3152 = vmatpush.msra.mxu0 0.0
    %3153 = vmatpush.msra.mxu0 0.0
    %3154 = vmatpush.msra.mxu0 0.0
    %3155 = vmatpush.msra.mxu0 0.0
    %3156 = vmatpush.msra.mxu0 0.0
    %3157 = vmatpush.msra.mxu0 0.0
    %3158 = vmatpush.msra.mxu0 0.0
    %3159 = vmatpush.msra.mxu0 0.0
    %3160 = vmatpush.msra.mxu0 0.0
    %3161 = vmatpush.msra.mxu0 0.0
    %3162 = vmatpush.msra.mxu0 0.0
    %v3163 = vand.u32 %v1514, 4294901760
    %v3164 = vsub.f32 %v1514, %v3163
    %v3165 = vand.u32 %v3164, 4294901760
    %3166 = vmatpush.msra.mxu0 %v3165
    %v3167 = vand.u32 %v3046, 4294901760
    %3168 = vmatmul.f32.gmra.mxu0 %v3167
    %v3169 = vpop.f32.mrf.mxu0
    %v3170 = vadd.f32 %v3146, %v3169
    %3171 = vdwg.mxu0
    %3172 = vmatpush.msra.mxu0 0.0
    %3173 = vmatpush.msra.mxu0 0.0
    %3174 = vmatpush.msra.mxu0 0.0
    %3175 = vmatpush.msra.mxu0 0.0
    %3176 = vmatpush.msra.mxu0 0.0
    %3177 = vmatpush.msra.mxu0 0.0
    %3178 = vmatpush.msra.mxu0 0.0
    %3179 = vmatpush.msra.mxu0 0.0
    %3180 = vmatpush.msra.mxu0 0.0
    %3181 = vmatpush.msra.mxu0 0.0
    %3182 = vmatpush.msra.mxu0 0.0
    %3183 = vmatpush.msra.mxu0 0.0
    %3184 = vmatpush.msra.mxu0 0.0
    %3185 = vmatpush.msra.mxu0 0.0
    %3186 = vmatpush.msra.mxu0 0.0
    %v3187 = vand.u32 %v1514, 4294901760
    %3188 = vmatpush.msra.mxu0 %v3187
    %v3189 = vand.u32 %v3046, 4294901760
    %3190 = vmatmul.f32.gmra.mxu0 %v3189
    %v3191 = vpop.f32.mrf.mxu0
    %v3192 = vadd.f32 %v3170, %v3191
    %3193 = vdwg.mxu0
    %v3194 = vrcp.pop %v3044
    %v3195 = vmul.f32 %v3044, %v3194
    %v3196 = vsub.f32 1.0, %v3195
    %v3197 = vmul.f32 %v3194, %v3196
    %v3198 = vadd.f32 %v3194, %v3197
    %vm3199 = vweird.f32 %v3044
    %vm3200 = vweird.f32 %v3194
    %vm3201 = vmor %vm3199, %vm3200
    %v3202 = vsel %vm3201, %v3194, %v3198
    %v3203 = vand.u32 2147483647, %v3044
    %vm3204 = vcmp.eq.f32.partialorder %v3203, 8.507059e+37
    %v3205 = vand.u32 %v3044, 2147483648
    %v3206 = vor.u32 1.1754944e-38, %v3205
    %v3207 = vsel %vm3204, %v3206, %v3202
    %v3208 = vmul.f32 %v3192, %v3207
    %v3209 = vld [vmem:[%s2173] sm:$0xff]
    %v3210 = vld [vmem:[%s2173 + $0x8] sm:$0xff]
    %v3211 = vld [vmem:[%s2173 + $0x10] sm:$0xff]
    %v3212 = vld [vmem:[%s2173 + $0x18] sm:$0xff]
    %v3214 = vsel %vm123, %v3208, 0
    %3216 = vmatpush.msra.mxu0 0.0
    %3217 = vmatpush.msra.mxu0 0.0
    %3218 = vmatpush.msra.mxu0 0.0
    %3219 = vmatpush.msra.mxu0 0.0
    %3220 = vmatpush.msra.mxu0 0.0
    %3221 = vmatpush.msra.mxu0 0.0
    %3222 = vmatpush.msra.mxu0 0.0
    %3223 = vmatpush.msra.mxu0 0.0
    %3224 = vmatpush.msra.mxu0 0.0
    %3225 = vmatpush.msra.mxu0 0.0
    %3226 = vmatpush.msra.mxu0 0.0
    %3227 = vmatpush.msra.mxu0 0.0
    %v3228 = vand.u32 %v3212, 4294901760
    %3229 = vmatpush.msra.mxu0 %v3228
    %v3230 = vand.u32 %v3211, 4294901760
    %3231 = vmatpush.msra.mxu0 %v3230
    %v3232 = vand.u32 %v3210, 4294901760
    %3233 = vmatpush.msra.mxu0 %v3232
    %v3234 = vand.u32 %v3209, 4294901760
    %3235 = vmatpush.msra.mxu0 %v3234
    %v3236 = vand.u32 %v3214, 4294901760
    %v3237 = vsub.f32 %v3214, %v3236
    %v3238 = vand.u32 %v3237, 4294901760
    %v3239 = vsub.f32 %v3237, %v3238
    %v3240 = vand.u32 %v3239, 4294901760
    %3241 = vmatmul.f32.gmra.mxu0 %v3240
    %v3242 = vpop.f32.mrf.mxu0
    %v3243 = vadd.f32 0.0, %v3242
    %3244 = vdwg.mxu0
    %3245 = vmatpush.msra.mxu0 0.0
    %3246 = vmatpush.msra.mxu0 0.0
    %3247 = vmatpush.msra.mxu0 0.0
    %3248 = vmatpush.msra.mxu0 0.0
    %3249 = vmatpush.msra.mxu0 0.0
    %3250 = vmatpush.msra.mxu0 0.0
    %3251 = vmatpush.msra.mxu0 0.0
    %3252 = vmatpush.msra.mxu0 0.0
    %3253 = vmatpush.msra.mxu0 0.0
    %3254 = vmatpush.msra.mxu0 0.0
    %3255 = vmatpush.msra.mxu0 0.0
    %3256 = vmatpush.msra.mxu0 0.0
    %v3257 = vand.u32 %v3212, 4294901760
    %v3258 = vsub.f32 %v3212, %v3257
    %v3259 = vand.u32 %v3258, 4294901760
    %v3260 = vsub.f32 %v3258, %v3259
    %v3261 = vand.u32 %v3260, 4294901760
    %3262 = vmatpush.msra.mxu0 %v3261
    %v3263 = vand.u32 %v3211, 4294901760
    %v3264 = vsub.f32 %v3211, %v3263
    %v3265 = vand.u32 %v3264, 4294901760
    %v3266 = vsub.f32 %v3264, %v3265
    %v3267 = vand.u32 %v3266, 4294901760
    %3268 = vmatpush.msra.mxu0 %v3267
    %v3269 = vand.u32 %v3210, 4294901760
    %v3270 = vsub.f32 %v3210, %v3269
    %v3271 = vand.u32 %v3270, 4294901760
    %v3272 = vsub.f32 %v3270, %v3271
    %v3273 = vand.u32 %v3272, 4294901760
    %3274 = vmatpush.msra.mxu0 %v3273
    %v3275 = vand.u32 %v3209, 4294901760
    %v3276 = vsub.f32 %v3209, %v3275
    %v3277 = vand.u32 %v3276, 4294901760
    %v3278 = vsub.f32 %v3276, %v3277
    %v3279 = vand.u32 %v3278, 4294901760
    %3280 = vmatpush.msra.mxu0 %v3279
    %v3281 = vand.u32 %v3214, 4294901760
    %3282 = vmatmul.f32.gmra.mxu0 %v3281
    %v3283 = vpop.f32.mrf.mxu0
    %v3284 = vadd.f32 %v3243, %v3283
    %3285 = vdwg.mxu0
    %3286 = vmatpush.msra.mxu0 0.0
    %3287 = vmatpush.msra.mxu0 0.0
    %3288 = vmatpush.msra.mxu0 0.0
    %3289 = vmatpush.msra.mxu0 0.0
    %3290 = vmatpush.msra.mxu0 0.0
    %3291 = vmatpush.msra.mxu0 0.0
    %3292 = vmatpush.msra.mxu0 0.0
    %3293 = vmatpush.msra.mxu0 0.0
    %3294 = vmatpush.msra.mxu0 0.0
    %3295 = vmatpush.msra.mxu0 0.0
    %3296 = vmatpush.msra.mxu0 0.0
    %3297 = vmatpush.msra.mxu0 0.0
    %v3298 = vand.u32 %v3212, 4294901760
    %v3299 = vsub.f32 %v3212, %v3298
    %3300 = vmatpush.msra.mxu0 %v3299
    %v3301 = vand.u32 %v3211, 4294901760
    %v3302 = vsub.f32 %v3211, %v3301
    %3303 = vmatpush.msra.mxu0 %v3302
    %v3304 = vand.u32 %v3210, 4294901760
    %v3305 = vsub.f32 %v3210, %v3304
    %3306 = vmatpush.msra.mxu0 %v3305
    %v3307 = vand.u32 %v3209, 4294901760
    %v3308 = vsub.f32 %v3209, %v3307
    %3309 = vmatpush.msra.mxu0 %v3308
    %v3310 = vand.u32 %v3214, 4294901760
    %v3311 = vsub.f32 %v3214, %v3310
    %3312 = vmatmul.f32.gmra.mxu0 %v3311
    %v3313 = vpop.f32.mrf.mxu0
    %v3314 = vadd.f32 %v3284, %v3313
    %3315 = vdwg.mxu0
    %3316 = vmatpush.msra.mxu0 0.0
    %3317 = vmatpush.msra.mxu0 0.0
    %3318 = vmatpush.msra.mxu0 0.0
    %3319 = vmatpush.msra.mxu0 0.0
    %3320 = vmatpush.msra.mxu0 0.0
    %3321 = vmatpush.msra.mxu0 0.0
    %3322 = vmatpush.msra.mxu0 0.0
    %3323 = vmatpush.msra.mxu0 0.0
    %3324 = vmatpush.msra.mxu0 0.0
    %3325 = vmatpush.msra.mxu0 0.0
    %3326 = vmatpush.msra.mxu0 0.0
    %3327 = vmatpush.msra.mxu0 0.0
    %v3328 = vand.u32 %v3212, 4294901760
    %3329 = vmatpush.msra.mxu0 %v3328
    %v3330 = vand.u32 %v3211, 4294901760
    %3331 = vmatpush.msra.mxu0 %v3330
    %v3332 = vand.u32 %v3210, 4294901760
    %3333 = vmatpush.msra.mxu0 %v3332
    %v3334 = vand.u32 %v3209, 4294901760
    %3335 = vmatpush.msra.mxu0 %v3334
    %v3336 = vand.u32 %v3214, 4294901760
    %v3337 = vsub.f32 %v3214, %v3336
    %v3338 = vand.u32 %v3337, 4294901760
    %3339 = vmatmul.f32.gmra.mxu0 %v3338
    %v3340 = vpop.f32.mrf.mxu0
    %v3341 = vadd.f32 %v3314, %v3340
    %3342 = vdwg.mxu0
    %3343 = vmatpush.msra.mxu0 0.0
    %3344 = vmatpush.msra.mxu0 0.0
    %3345 = vmatpush.msra.mxu0 0.0
    %3346 = vmatpush.msra.mxu0 0.0
    %3347 = vmatpush.msra.mxu0 0.0
    %3348 = vmatpush.msra.mxu0 0.0
    %3349 = vmatpush.msra.mxu0 0.0
    %3350 = vmatpush.msra.mxu0 0.0
    %3351 = vmatpush.msra.mxu0 0.0
    %3352 = vmatpush.msra.mxu0 0.0
    %3353 = vmatpush.msra.mxu0 0.0
    %3354 = vmatpush.msra.mxu0 0.0
    %v3355 = vand.u32 %v3212, 4294901760
    %v3356 = vsub.f32 %v3212, %v3355
    %v3357 = vand.u32 %v3356, 4294901760
    %3358 = vmatpush.msra.mxu0 %v3357
    %v3359 = vand.u32 %v3211, 4294901760
    %v3360 = vsub.f32 %v3211, %v3359
    %v3361 = vand.u32 %v3360, 4294901760
    %3362 = vmatpush.msra.mxu0 %v3361
    %v3363 = vand.u32 %v3210, 4294901760
    %v3364 = vsub.f32 %v3210, %v3363
    %v3365 = vand.u32 %v3364, 4294901760
    %3366 = vmatpush.msra.mxu0 %v3365
    %v3367 = vand.u32 %v3209, 4294901760
    %v3368 = vsub.f32 %v3209, %v3367
    %v3369 = vand.u32 %v3368, 4294901760
    %3370 = vmatpush.msra.mxu0 %v3369
    %v3371 = vand.u32 %v3214, 4294901760
    %3372 = vmatmul.f32.gmra.mxu0 %v3371
    %v3373 = vpop.f32.mrf.mxu0
    %v3374 = vadd.f32 %v3341, %v3373
    %3375 = vdwg.mxu0
    %3376 = vmatpush.msra.mxu0 0.0
    %3377 = vmatpush.msra.mxu0 0.0
    %3378 = vmatpush.msra.mxu0 0.0
    %3379 = vmatpush.msra.mxu0 0.0
    %3380 = vmatpush.msra.mxu0 0.0
    %3381 = vmatpush.msra.mxu0 0.0
    %3382 = vmatpush.msra.mxu0 0.0
    %3383 = vmatpush.msra.mxu0 0.0
    %3384 = vmatpush.msra.mxu0 0.0
    %3385 = vmatpush.msra.mxu0 0.0
    %3386 = vmatpush.msra.mxu0 0.0
    %3387 = vmatpush.msra.mxu0 0.0
    %v3388 = vand.u32 %v3212, 4294901760
    %3389 = vmatpush.msra.mxu0 %v3388
    %v3390 = vand.u32 %v3211, 4294901760
    %3391 = vmatpush.msra.mxu0 %v3390
    %v3392 = vand.u32 %v3210, 4294901760
    %3393 = vmatpush.msra.mxu0 %v3392
    %v3394 = vand.u32 %v3209, 4294901760
    %3395 = vmatpush.msra.mxu0 %v3394
    %v3396 = vand.u32 %v3214, 4294901760
    %3397 = vmatmul.f32.gmra.mxu0 %v3396
    %v3398 = vpop.f32.mrf.mxu0
    %v3399 = vadd.f32 %v3374, %v3398
    %3400 = vdwg.mxu0
    %v3402 = vsel %vm123, %v2879, 0
    %3404 = vmatpush.msra.mxu0 0.0
    %3405 = vmatpush.msra.mxu0 0.0
    %3406 = vmatpush.msra.mxu0 0.0
    %3407 = vmatpush.msra.mxu0 0.0
    %3408 = vmatpush.msra.mxu0 0.0
    %3409 = vmatpush.msra.mxu0 0.0
    %3410 = vmatpush.msra.mxu0 0.0
    %3411 = vmatpush.msra.mxu0 0.0
    %3412 = vmatpush.msra.mxu0 0.0
    %3413 = vmatpush.msra.mxu0 0.0
    %3414 = vmatpush.msra.mxu0 0.0
    %3415 = vmatpush.msra.mxu0 0.0
    %v3416 = vand.u32 %v2883, 4294901760
    %3417 = vmatpush.msra.mxu0 %v3416
    %v3418 = vand.u32 %v2882, 4294901760
    %3419 = vmatpush.msra.mxu0 %v3418
    %v3420 = vand.u32 %v2881, 4294901760
    %3421 = vmatpush.msra.mxu0 %v3420
    %v3422 = vand.u32 %v2880, 4294901760
    %3423 = vmatpush.msra.mxu0 %v3422
    %v3424 = vand.u32 %v3402, 4294901760
    %v3425 = vsub.f32 %v3402, %v3424
    %v3426 = vand.u32 %v3425, 4294901760
    %v3427 = vsub.f32 %v3425, %v3426
    %v3428 = vand.u32 %v3427, 4294901760
    %3429 = vmatmul.f32.gmra.mxu0 %v3428
    %v3430 = vpop.f32.mrf.mxu0
    %v3431 = vadd.f32 %v3399, %v3430
    %3432 = vdwg.mxu0
    %3433 = vmatpush.msra.mxu0 0.0
    %3434 = vmatpush.msra.mxu0 0.0
    %3435 = vmatpush.msra.mxu0 0.0
    %3436 = vmatpush.msra.mxu0 0.0
    %3437 = vmatpush.msra.mxu0 0.0
    %3438 = vmatpush.msra.mxu0 0.0
    %3439 = vmatpush.msra.mxu0 0.0
    %3440 = vmatpush.msra.mxu0 0.0
    %3441 = vmatpush.msra.mxu0 0.0
    %3442 = vmatpush.msra.mxu0 0.0
    %3443 = vmatpush.msra.mxu0 0.0
    %3444 = vmatpush.msra.mxu0 0.0
    %v3445 = vand.u32 %v2883, 4294901760
    %v3446 = vsub.f32 %v2883, %v3445
    %v3447 = vand.u32 %v3446, 4294901760
    %v3448 = vsub.f32 %v3446, %v3447
    %v3449 = vand.u32 %v3448, 4294901760
    %3450 = vmatpush.msra.mxu0 %v3449
    %v3451 = vand.u32 %v2882, 4294901760
    %v3452 = vsub.f32 %v2882, %v3451
    %v3453 = vand.u32 %v3452, 4294901760
    %v3454 = vsub.f32 %v3452, %v3453
    %v3455 = vand.u32 %v3454, 4294901760
    %3456 = vmatpush.msra.mxu0 %v3455
    %v3457 = vand.u32 %v2881, 4294901760
    %v3458 = vsub.f32 %v2881, %v3457
    %v3459 = vand.u32 %v3458, 4294901760
    %v3460 = vsub.f32 %v3458, %v3459
    %v3461 = vand.u32 %v3460, 4294901760
    %3462 = vmatpush.msra.mxu0 %v3461
    %v3463 = vand.u32 %v2880, 4294901760
    %v3464 = vsub.f32 %v2880, %v3463
    %v3465 = vand.u32 %v3464, 4294901760
    %v3466 = vsub.f32 %v3464, %v3465
    %v3467 = vand.u32 %v3466, 4294901760
    %3468 = vmatpush.msra.mxu0 %v3467
    %v3469 = vand.u32 %v3402, 4294901760
    %3470 = vmatmul.f32.gmra.mxu0 %v3469
    %v3471 = vpop.f32.mrf.mxu0
    %v3472 = vadd.f32 %v3431, %v3471
    %3473 = vdwg.mxu0
    %3474 = vmatpush.msra.mxu0 0.0
    %3475 = vmatpush.msra.mxu0 0.0
    %3476 = vmatpush.msra.mxu0 0.0
    %3477 = vmatpush.msra.mxu0 0.0
    %3478 = vmatpush.msra.mxu0 0.0
    %3479 = vmatpush.msra.mxu0 0.0
    %3480 = vmatpush.msra.mxu0 0.0
    %3481 = vmatpush.msra.mxu0 0.0
    %3482 = vmatpush.msra.mxu0 0.0
    %3483 = vmatpush.msra.mxu0 0.0
    %3484 = vmatpush.msra.mxu0 0.0
    %3485 = vmatpush.msra.mxu0 0.0
    %v3486 = vand.u32 %v2883, 4294901760
    %v3487 = vsub.f32 %v2883, %v3486
    %3488 = vmatpush.msra.mxu0 %v3487
    %v3489 = vand.u32 %v2882, 4294901760
    %v3490 = vsub.f32 %v2882, %v3489
    %3491 = vmatpush.msra.mxu0 %v3490
    %v3492 = vand.u32 %v2881, 4294901760
    %v3493 = vsub.f32 %v2881, %v3492
    %3494 = vmatpush.msra.mxu0 %v3493
    %v3495 = vand.u32 %v2880, 4294901760
    %v3496 = vsub.f32 %v2880, %v3495
    %3497 = vmatpush.msra.mxu0 %v3496
    %v3498 = vand.u32 %v3402, 4294901760
    %v3499 = vsub.f32 %v3402, %v3498
    %3500 = vmatmul.f32.gmra.mxu0 %v3499
    %v3501 = vpop.f32.mrf.mxu0
    %v3502 = vadd.f32 %v3472, %v3501
    %3503 = vdwg.mxu0
    %3504 = vmatpush.msra.mxu0 0.0
    %3505 = vmatpush.msra.mxu0 0.0
    %3506 = vmatpush.msra.mxu0 0.0
    %3507 = vmatpush.msra.mxu0 0.0
    %3508 = vmatpush.msra.mxu0 0.0
    %3509 = vmatpush.msra.mxu0 0.0
    %3510 = vmatpush.msra.mxu0 0.0
    %3511 = vmatpush.msra.mxu0 0.0
    %3512 = vmatpush.msra.mxu0 0.0
    %3513 = vmatpush.msra.mxu0 0.0
    %3514 = vmatpush.msra.mxu0 0.0
    %3515 = vmatpush.msra.mxu0 0.0
    %v3516 = vand.u32 %v2883, 4294901760
    %3517 = vmatpush.msra.mxu0 %v3516
    %v3518 = vand.u32 %v2882, 4294901760
    %3519 = vmatpush.msra.mxu0 %v3518
    %v3520 = vand.u32 %v2881, 4294901760
    %3521 = vmatpush.msra.mxu0 %v3520
    %v3522 = vand.u32 %v2880, 4294901760
    %3523 = vmatpush.msra.mxu0 %v3522
    %v3524 = vand.u32 %v3402, 4294901760
    %v3525 = vsub.f32 %v3402, %v3524
    %v3526 = vand.u32 %v3525, 4294901760
    %3527 = vmatmul.f32.gmra.mxu0 %v3526
    %v3528 = vpop.f32.mrf.mxu0
    %v3529 = vadd.f32 %v3502, %v3528
    %3530 = vdwg.mxu0
    %3531 = vmatpush.msra.mxu0 0.0
    %3532 = vmatpush.msra.mxu0 0.0
    %3533 = vmatpush.msra.mxu0 0.0
    %3534 = vmatpush.msra.mxu0 0.0
    %3535 = vmatpush.msra.mxu0 0.0
    %3536 = vmatpush.msra.mxu0 0.0
    %3537 = vmatpush.msra.mxu0 0.0
    %3538 = vmatpush.msra.mxu0 0.0
    %3539 = vmatpush.msra.mxu0 0.0
    %3540 = vmatpush.msra.mxu0 0.0
    %3541 = vmatpush.msra.mxu0 0.0
    %3542 = vmatpush.msra.mxu0 0.0
    %v3543 = vand.u32 %v2883, 4294901760
    %v3544 = vsub.f32 %v2883, %v3543
    %v3545 = vand.u32 %v3544, 4294901760
    %3546 = vmatpush.msra.mxu0 %v3545
    %v3547 = vand.u32 %v2882, 4294901760
    %v3548 = vsub.f32 %v2882, %v3547
    %v3549 = vand.u32 %v3548, 4294901760
    %3550 = vmatpush.msra.mxu0 %v3549
    %v3551 = vand.u32 %v2881, 4294901760
    %v3552 = vsub.f32 %v2881, %v3551
    %v3553 = vand.u32 %v3552, 4294901760
    %3554 = vmatpush.msra.mxu0 %v3553
    %v3555 = vand.u32 %v2880, 4294901760
    %v3556 = vsub.f32 %v2880, %v3555
    %v3557 = vand.u32 %v3556, 4294901760
    %3558 = vmatpush.msra.mxu0 %v3557
    %v3559 = vand.u32 %v3402, 4294901760
    %3560 = vmatmul.f32.gmra.mxu0 %v3559
    %v3561 = vpop.f32.mrf.mxu0
    %v3562 = vadd.f32 %v3529, %v3561
    %3563 = vdwg.mxu0
    %3564 = vmatpush.msra.mxu0 0.0
    %3565 = vmatpush.msra.mxu0 0.0
    %3566 = vmatpush.msra.mxu0 0.0
    %3567 = vmatpush.msra.mxu0 0.0
    %3568 = vmatpush.msra.mxu0 0.0
    %3569 = vmatpush.msra.mxu0 0.0
    %3570 = vmatpush.msra.mxu0 0.0
    %3571 = vmatpush.msra.mxu0 0.0
    %3572 = vmatpush.msra.mxu0 0.0
    %3573 = vmatpush.msra.mxu0 0.0
    %3574 = vmatpush.msra.mxu0 0.0
    %3575 = vmatpush.msra.mxu0 0.0
    %v3576 = vand.u32 %v2883, 4294901760
    %3577 = vmatpush.msra.mxu0 %v3576
    %v3578 = vand.u32 %v2882, 4294901760
    %3579 = vmatpush.msra.mxu0 %v3578
    %v3580 = vand.u32 %v2881, 4294901760
    %3581 = vmatpush.msra.mxu0 %v3580
    %v3582 = vand.u32 %v2880, 4294901760
    %3583 = vmatpush.msra.mxu0 %v3582
    %v3584 = vand.u32 %v3402, 4294901760
    %3585 = vmatmul.f32.gmra.mxu0 %v3584
    %v3586 = vpop.f32.mrf.mxu0
    %v3587 = vadd.f32 %v3562, %v3586
    %3588 = vdwg.mxu0
    %s3589 = scalar_lea.vmem [#allocation13], 8
    %3590 = vst [vmem:[%s3589] sm:$0xff] %v3587
    // Predicated region
    $region54: #{tpu_custom_call.1} parent=1 // pred_check
      _
    $region55: #{tpu_custom_call.1} parent=1 // pred_check_branch
      %3592 = sbr.rel (0) target = $region57
    $region56: #{tpu_custom_call.1} parent=1 // pred_region
      %3594 = vsyncadd [#allocation4], 0
      %s3595 = sshll.u32 [#allocation13], 4
      %s3596 = int_to_ptr.vmem [resolvable:$true] %s3595
      %s3597 = sshll.u32 %s7, 4
      %s3598 = int_to_ptr.hbm [resolvable:$true] %s3597
      %3603 = dma.vmem_to_hbm [thread:$0]  %s3596, 256, %s3598, [#allocation4], 128, 128, 8
    $region57: #{tpu_custom_call.1} parent=1 // pred_fallthru
      _
    // Predicated region
    $region58: #{tpu_custom_call.1} parent=1 // pred_check
      _
    $region59: #{tpu_custom_call.1} parent=1 // pred_check_branch
      %3605 = sbr.rel (0) target = $region61
    $region60: #{tpu_custom_call.1} parent=1 // pred_region
      %3607 = dma.done [#allocation4], 256
    $region61: #{tpu_custom_call.1} parent=1 // pred_fallthru
      _
    %3608 = vsyncpa [#allocation3], 1
    %3609 = vsyncpa [#allocation6], 1
    %3610 = vsyncpa [#allocation9], 1
    %3611 = vsyncpa [#allocation12], 1
    %3612 = vsyncpa [#allocation4], 1

</llo_original>
